<compile_context>
chip_gen: v5e
topology: v5e:2x2
jax: 0.10.0
libtpu: 0.0.40
codegen_flags: <defaults>
</compile_context>

<pallas_src>
import jax
import jax.numpy as jnp
from jax import lax
from jax.experimental import pallas as pl
from jax.experimental.pallas import tpu as pltpu


def _fold_upsample_weights(weight_oihw):
    """Fold the 3x3 conv weights over the 2x nearest upsample into 2x2 kernels.

    Returns a flat f32 array of length 16*C*C indexed by
        (((r*2 + s)*2 + dy)*2 + dx)*C*C + ci*C + co
    where (r, s) is the output-pixel parity and (dy, dx) the 2x2 tap offset.
    """
    w = weight_oihw.astype(jnp.float32)                               # (Co, Ci, 3, 3)
    # Fold ky -> (r, dy):  r=0: dy0<-{ky0,ky1}, dy1<-{ky2};  r=1: dy0<-{ky0}, dy1<-{ky1,ky2}
    wr = jnp.stack([
        jnp.stack([w[:, :, 0] + w[:, :, 1], w[:, :, 2]], axis=0),     # r=0: (dy, Co, Ci, kx)
        jnp.stack([w[:, :, 0], w[:, :, 1] + w[:, :, 2]], axis=0),     # r=1
    ], axis=0)                                                        # (r, dy, Co, Ci, kx)
    # Fold kx -> (s, dx) the same way.
    wf = jnp.stack([
        jnp.stack([wr[..., 0] + wr[..., 1], wr[..., 2]], axis=0),     # s=0: (dx, r, dy, Co, Ci)
        jnp.stack([wr[..., 0], wr[..., 1] + wr[..., 2]], axis=0),     # s=1
    ], axis=0)                                                        # (s, dx, r, dy, Co, Ci)
    wf = jnp.transpose(wf, (2, 0, 3, 1, 5, 4))                        # (r, s, dy, dx, Ci, Co)
    return wf.reshape(-1)


def _upsample_conv_kernel(wf_ref, b_ref, x_ref, o_ref):
    """One (batch, c_out-tile) grid step.

    wf_ref: SMEM (16*C*C,) folded weights (see _fold_upsample_weights)
    b_ref : SMEM (C,)      bias
    x_ref : VMEM (1, C, H, W)       original (not upsampled) input, NCHW
    o_ref : VMEM (1, CO_T, OH, OW)  final NCHW output tile, OH = 2H-2, OW = 2W-2
    """
    _, C, H, W = x_ref.shape
    _, CO_T, OH, OW = o_ref.shape
    CC = C * C
    co_base = pl.program_id(1) * CO_T

    x = x_ref[0]                                   # (C, H, W) f32, W on lanes
    x_planes = [x[ci] for ci in range(C)]          # C x (H, W)

    # 0/1 parity-scatter matrices from 2-D iotas.  They implement both the 2x2 tap
    # shifts (dy, dx) and the even/odd output interleave (r, s), and their out-of-range
    # rows/cols are all-zero, so no shifted slices / rolls / masks are needed.
    #   Q[(s,dx)] : (W, OW),  Q[j, q] = 1  iff  q == 2*j + s - 2*dx
    #   P[(r,dy)] : (OH, H),  P[p, i] = 1  iff  p == 2*i + r - 2*dy
    jq_j = lax.broadcasted_iota(jnp.int32, (W, OW), 0)
    jq_q = lax.broadcasted_iota(jnp.int32, (W, OW), 1)
    q_mats = {(s, dx): (jq_q == 2 * jq_j + (s - 2 * dx)).astype(jnp.float32)
              for s in (0, 1) for dx in (0, 1)}
    pi_p = lax.broadcasted_iota(jnp.int32, (OH, H), 0)
    pi_i = lax.broadcasted_iota(jnp.int32, (OH, H), 1)
    p_mats = {(r, dy): (pi_p == 2 * pi_i + (r - 2 * dy)).astype(jnp.float32)
              for r in (0, 1) for dy in (0, 1)}

    for lco in range(CO_T):
        co = co_base + lco                         # dynamic global output channel
        y = jnp.zeros((OH, OW), jnp.float32)
        for r in (0, 1):
            for dy in (0, 1):
                m = jnp.zeros((H, OW), jnp.float32)
                for s in (0, 1):
                    for dx in (0, 1):
                        base = (((r * 2 + s) * 2 + dy) * 2 + dx) * CC
                        # Channel contraction on the VPU: scalar weights from SMEM,
                        # broadcast-FMA over (H, W) planes (W on lanes).
                        bp = jnp.zeros((H, W), jnp.float32)
                        for ci in range(C):
                            wv = wf_ref[base + ci * C + co]
                            bp = bp + wv * x_planes[ci]
                        # Column tap-shift + even/odd column scatter (idle MXU).
                        m = m + jnp.dot(bp, q_mats[(s, dx)],
                                        preferred_element_type=jnp.float32)
                # Row tap-shift + even/odd row scatter (idle MXU).
                y = y + jnp.dot(p_mats[(r, dy)], m,
                                preferred_element_type=jnp.float32)
        o_ref[0, lco] = (y + b_ref[co]).astype(o_ref.dtype)


def upsample_forward(x_nchw, weight_oihw, bias):
    """UpSample.forward: 2x nearest upsample then Conv2d(C, C, 3) with padding=0.

    x_nchw:      (N, C, H, W)        float32 (NCHW, PyTorch layout)
    weight_oihw: (C_out, C_in, 3, 3) float32 (PyTorch layout)
    bias:        (C_out,)            float32
    returns:     (N, C, 2H-2, 2W-2)  float32 (NCHW)
    """
    N, C, H, W = x_nchw.shape
    OH, OW = 2 * H - 2, 2 * W - 2
    n_co_tiles = 2 if (C % 2 == 0 and C >= 2) else 1
    CO_T = C // n_co_tiles

    x = x_nchw.astype(jnp.float32)
    wf_flat = _fold_upsample_weights(weight_oihw)          # (16*C*C,) -> SMEM
    b_flat = bias.astype(jnp.float32).reshape(C)           # (C,)      -> SMEM

    # Advisory cost estimate (conv-after-fold + parity-scatter matmuls).
    flops_conv = 2 * N * 16 * C * C * (H - 1) * (W - 1)
    flops_scatter = 2 * N * C * (16 * H * W * OW + 4 * OH * H * OW)
    bytes_accessed = (x.size + wf_flat.size + b_flat.size + N * C * OH * OW) * 4

    out = pl.pallas_call(
        _upsample_conv_kernel,
        out_shape=jax.ShapeDtypeStruct((N, C, OH, OW), jnp.float32),
        grid=(N, n_co_tiles),
        in_specs=[
            pl.BlockSpec(memory_space=pltpu.MemorySpace.SMEM),   # folded weights
            pl.BlockSpec(memory_space=pltpu.MemorySpace.SMEM),   # bias
            pl.BlockSpec((1, C, H, W), lambda n, c: (n, 0, 0, 0)),
        ],
        out_specs=pl.BlockSpec((1, CO_T, OH, OW), lambda n, c: (n, c, 0, 0)),
        compiler_params=pltpu.CompilerParams(
            dimension_semantics=("parallel", "parallel"),
            vmem_limit_bytes=32 * 1024 * 1024),
        cost_estimate=pl.CostEstimate(flops=flops_conv + flops_scatter,
                                      transcendentals=0,
                                      bytes_accessed=bytes_accessed),
    )(wf_flat, b_flat, x)
    return out


def _reference_forward(x_nchw, weight_oihw, bias):
    """Pure-JAX reference mirroring F.interpolate(scale=2, nearest) + Conv2d(3, pad=0)."""
    x_up = jnp.repeat(jnp.repeat(x_nchw, 2, axis=2), 2, axis=3)
    out = lax.conv_general_dilated(
        x_up, weight_oihw,
        window_strides=(1, 1), padding="VALID",
        dimension_numbers=("NCHW", "OIHW", "NCHW"))
    return out + bias.reshape(1, -1, 1, 1)


if __name__ == "__main__":
    key = jax.random.PRNGKey(0)
    k_x, k_w, k_b = jax.random.split(key, 3)

    N, C, H, W = 2, 4, 16, 16
    x = jax.random.normal(k_x, (N, C, H, W), dtype=jnp.float32)

    # Deterministic synthetic parameters (PyTorch-shaped: (C_out, C_in, 3, 3), (C_out,))
    fan_in = C * 3 * 3
    bound = 1.0 / (fan_in ** 0.5)
    weight = jax.random.uniform(k_w, (C, C, 3, 3), jnp.float32, -bound, bound)
    bias = jax.random.uniform(k_b, (C,), jnp.float32, -bound, bound)

    out = upsample_forward(x, weight, bias)
    out = jax.block_until_ready(out)

    ref = _reference_forward(x, weight, bias)
    assert out.shape == (N, C, 2 * H - 2, 2 * W - 2), out.shape
    assert jnp.allclose(out, ref, atol=1e-4, rtol=1e-4), "mismatch vs reference"

    print("KERNEL_OK")
</pallas_src>

<mosaic_0001>
module attributes {stable_mosaic.version = 11 : i64} {
  func.func @_upsample_conv_kernel(%arg0: i32, %arg1: i32, %arg2: memref<256xf32, #tpu.memory_space<smem>>, %arg3: memref<4xf32, #tpu.memory_space<smem>>, %arg4: memref<1x4x16x16xf32, #tpu.memory_space<vmem>>, %arg5: memref<1x2x30x30xf32, #tpu.memory_space<vmem>>) attributes {dimension_semantics = [#tpu.dimension_semantics<parallel>, #tpu.dimension_semantics<parallel>], iteration_bounds = array<i64: 2, 2>, scalar_prefetch = 0 : i64, scratch_operands = 0 : i64, tpu.core_type = #tpu.core_type<tc>, window_params = [{transform_indices = @transform_0, window_bounds = array<i64: 256>}, {transform_indices = @transform_1, window_bounds = array<i64: 4>}, {transform_indices = @transform_2, window_bounds = array<i64: 1, 4, 16, 16>}, {transform_indices = @transform_3, window_bounds = array<i64: 1, 2, 30, 30>}]} {
    %c2_i32 = arith.constant 2 : i32
    %0 = arith.muli %arg1, %c2_i32 : i32
    %c0 = arith.constant 0 : index
    %c0_0 = arith.constant 0 : index
    %c0_1 = arith.constant 0 : index
    %c0_2 = arith.constant 0 : index
    %1 = vector.load %arg4[%c0, %c0_0, %c0_1, %c0_2] : memref<1x4x16x16xf32, #tpu.memory_space<vmem>>, vector<1x4x16x16xf32>
    %2 = vector.shape_cast %1 : vector<1x4x16x16xf32> to vector<4x16x16xf32>
    %3 = vector.extract_strided_slice %2 {offsets = [0, 0, 0], sizes = [1, 16, 16], strides = [1, 1, 1]} : vector<4x16x16xf32> to vector<1x16x16xf32>
    %4 = vector.shape_cast %3 : vector<1x16x16xf32> to vector<16x16xf32>
    %5 = vector.extract_strided_slice %2 {offsets = [1, 0, 0], sizes = [1, 16, 16], strides = [1, 1, 1]} : vector<4x16x16xf32> to vector<1x16x16xf32>
    %6 = vector.shape_cast %5 : vector<1x16x16xf32> to vector<16x16xf32>
    %7 = vector.extract_strided_slice %2 {offsets = [2, 0, 0], sizes = [1, 16, 16], strides = [1, 1, 1]} : vector<4x16x16xf32> to vector<1x16x16xf32>
    %8 = vector.shape_cast %7 : vector<1x16x16xf32> to vector<16x16xf32>
    %9 = vector.extract_strided_slice %2 {offsets = [3, 0, 0], sizes = [1, 16, 16], strides = [1, 1, 1]} : vector<4x16x16xf32> to vector<1x16x16xf32>
    %10 = vector.shape_cast %9 : vector<1x16x16xf32> to vector<16x16xf32>
    %11 = tpu.iota {dimensions = array<i32: 0>} : vector<16x30xi32>
    %12 = tpu.iota {dimensions = array<i32: 1>} : vector<16x30xi32>
    %c2_i32_3 = arith.constant 2 : i32
    %13 = vector.broadcast %c2_i32_3 : i32 to vector<16x30xi32>
    %14 = arith.muli %13, %11 : vector<16x30xi32>
    %c0_i32 = arith.constant 0 : i32
    %15 = vector.broadcast %c0_i32 : i32 to vector<16x30xi32>
    %16 = arith.addi %14, %15 : vector<16x30xi32>
    %17 = arith.cmpi eq, %12, %16 : vector<16x30xi32>
    %18 = arith.extui %17 : vector<16x30xi1> to vector<16x30xi32>
    %19 = arith.sitofp %18 : vector<16x30xi32> to vector<16x30xf32>
    %c2_i32_4 = arith.constant 2 : i32
    %20 = vector.broadcast %c2_i32_4 : i32 to vector<16x30xi32>
    %21 = arith.muli %20, %11 : vector<16x30xi32>
    %c-2_i32 = arith.constant -2 : i32
    %22 = vector.broadcast %c-2_i32 : i32 to vector<16x30xi32>
    %23 = arith.addi %21, %22 : vector<16x30xi32>
    %24 = arith.cmpi eq, %12, %23 : vector<16x30xi32>
    %25 = arith.extui %24 : vector<16x30xi1> to vector<16x30xi32>
    %26 = arith.sitofp %25 : vector<16x30xi32> to vector<16x30xf32>
    %c2_i32_5 = arith.constant 2 : i32
    %27 = vector.broadcast %c2_i32_5 : i32 to vector<16x30xi32>
    %28 = arith.muli %27, %11 : vector<16x30xi32>
    %c1_i32 = arith.constant 1 : i32
    %29 = vector.broadcast %c1_i32 : i32 to vector<16x30xi32>
    %30 = arith.addi %28, %29 : vector<16x30xi32>
    %31 = arith.cmpi eq, %12, %30 : vector<16x30xi32>
    %32 = arith.extui %31 : vector<16x30xi1> to vector<16x30xi32>
    %33 = arith.sitofp %32 : vector<16x30xi32> to vector<16x30xf32>
    %c2_i32_6 = arith.constant 2 : i32
    %34 = vector.broadcast %c2_i32_6 : i32 to vector<16x30xi32>
    %35 = arith.muli %34, %11 : vector<16x30xi32>
    %c-1_i32 = arith.constant -1 : i32
    %36 = vector.broadcast %c-1_i32 : i32 to vector<16x30xi32>
    %37 = arith.addi %35, %36 : vector<16x30xi32>
    %38 = arith.cmpi eq, %12, %37 : vector<16x30xi32>
    %39 = arith.extui %38 : vector<16x30xi1> to vector<16x30xi32>
    %40 = arith.sitofp %39 : vector<16x30xi32> to vector<16x30xf32>
    %41 = tpu.iota {dimensions = array<i32: 0>} : vector<30x16xi32>
    %42 = tpu.iota {dimensions = array<i32: 1>} : vector<30x16xi32>
    %c2_i32_7 = arith.constant 2 : i32
    %43 = vector.broadcast %c2_i32_7 : i32 to vector<30x16xi32>
    %44 = arith.muli %43, %42 : vector<30x16xi32>
    %c0_i32_8 = arith.constant 0 : i32
    %45 = vector.broadcast %c0_i32_8 : i32 to vector<30x16xi32>
    %46 = arith.addi %44, %45 : vector<30x16xi32>
    %47 = arith.cmpi eq, %41, %46 : vector<30x16xi32>
    %48 = arith.extui %47 : vector<30x16xi1> to vector<30x16xi32>
    %49 = arith.sitofp %48 : vector<30x16xi32> to vector<30x16xf32>
    %c2_i32_9 = arith.constant 2 : i32
    %50 = vector.broadcast %c2_i32_9 : i32 to vector<30x16xi32>
    %51 = arith.muli %50, %42 : vector<30x16xi32>
    %c-2_i32_10 = arith.constant -2 : i32
    %52 = vector.broadcast %c-2_i32_10 : i32 to vector<30x16xi32>
    %53 = arith.addi %51, %52 : vector<30x16xi32>
    %54 = arith.cmpi eq, %41, %53 : vector<30x16xi32>
    %55 = arith.extui %54 : vector<30x16xi1> to vector<30x16xi32>
    %56 = arith.sitofp %55 : vector<30x16xi32> to vector<30x16xf32>
    %c2_i32_11 = arith.constant 2 : i32
    %57 = vector.broadcast %c2_i32_11 : i32 to vector<30x16xi32>
    %58 = arith.muli %57, %42 : vector<30x16xi32>
    %c1_i32_12 = arith.constant 1 : i32
    %59 = vector.broadcast %c1_i32_12 : i32 to vector<30x16xi32>
    %60 = arith.addi %58, %59 : vector<30x16xi32>
    %61 = arith.cmpi eq, %41, %60 : vector<30x16xi32>
    %62 = arith.extui %61 : vector<30x16xi1> to vector<30x16xi32>
    %63 = arith.sitofp %62 : vector<30x16xi32> to vector<30x16xf32>
    %c2_i32_13 = arith.constant 2 : i32
    %64 = vector.broadcast %c2_i32_13 : i32 to vector<30x16xi32>
    %65 = arith.muli %64, %42 : vector<30x16xi32>
    %c-1_i32_14 = arith.constant -1 : i32
    %66 = vector.broadcast %c-1_i32_14 : i32 to vector<30x16xi32>
    %67 = arith.addi %65, %66 : vector<30x16xi32>
    %68 = arith.cmpi eq, %41, %67 : vector<30x16xi32>
    %69 = arith.extui %68 : vector<30x16xi1> to vector<30x16xi32>
    %70 = arith.sitofp %69 : vector<30x16xi32> to vector<30x16xf32>
    %c0_i32_15 = arith.constant 0 : i32
    %71 = arith.addi %0, %c0_i32_15 : i32
    %cst = arith.constant 0.000000e+00 : f32
    %72 = vector.broadcast %cst : f32 to vector<30x30xf32>
    %cst_16 = arith.constant 0.000000e+00 : f32
    %73 = vector.broadcast %cst_16 : f32 to vector<16x30xf32>
    %cst_17 = arith.constant 0.000000e+00 : f32
    %74 = vector.broadcast %cst_17 : f32 to vector<16x16xf32>
    %c0_i32_18 = arith.constant 0 : i32
    %75 = arith.addi %c0_i32_18, %71 : i32
    %76 = arith.index_cast %75 : i32 to index
    %77 = memref.load %arg2[%76] : memref<256xf32, #tpu.memory_space<smem>>
    %78 = vector.broadcast %77 : f32 to vector<16x16xf32>
    %79 = arith.mulf %78, %4 : vector<16x16xf32>
    %80 = arith.addf %74, %79 : vector<16x16xf32>
    %c4_i32 = arith.constant 4 : i32
    %81 = arith.addi %c4_i32, %71 : i32
    %82 = arith.index_cast %81 : i32 to index
    %83 = memref.load %arg2[%82] : memref<256xf32, #tpu.memory_space<smem>>
    %84 = vector.broadcast %83 : f32 to vector<16x16xf32>
    %85 = arith.mulf %84, %6 : vector<16x16xf32>
    %86 = arith.addf %80, %85 : vector<16x16xf32>
    %c8_i32 = arith.constant 8 : i32
    %87 = arith.addi %c8_i32, %71 : i32
    %88 = arith.index_cast %87 : i32 to index
    %89 = memref.load %arg2[%88] : memref<256xf32, #tpu.memory_space<smem>>
    %90 = vector.broadcast %89 : f32 to vector<16x16xf32>
    %91 = arith.mulf %90, %8 : vector<16x16xf32>
    %92 = arith.addf %86, %91 : vector<16x16xf32>
    %c12_i32 = arith.constant 12 : i32
    %93 = arith.addi %c12_i32, %71 : i32
    %94 = arith.index_cast %93 : i32 to index
    %95 = memref.load %arg2[%94] : memref<256xf32, #tpu.memory_space<smem>>
    %96 = vector.broadcast %95 : f32 to vector<16x16xf32>
    %97 = arith.mulf %96, %10 : vector<16x16xf32>
    %98 = arith.addf %92, %97 : vector<16x16xf32>
    %cst_19 = arith.constant dense<0.000000e+00> : vector<16x30xf32>
    %99 = tpu.matmul %98, %19, %cst_19 {dimension_numbers = #tpu.dot_dimension_numbers<[1], [0], [0], [1], [0, 0, 1, 1], [], []>} : vector<16x16xf32>, vector<16x30xf32>, vector<16x30xf32> -> vector<16x30xf32>
    %100 = arith.addf %73, %99 : vector<16x30xf32>
    %cst_20 = arith.constant 0.000000e+00 : f32
    %101 = vector.broadcast %cst_20 : f32 to vector<16x16xf32>
    %c16_i32 = arith.constant 16 : i32
    %102 = arith.addi %c16_i32, %71 : i32
    %103 = arith.index_cast %102 : i32 to index
    %104 = memref.load %arg2[%103] : memref<256xf32, #tpu.memory_space<smem>>
    %105 = vector.broadcast %104 : f32 to vector<16x16xf32>
    %106 = arith.mulf %105, %4 : vector<16x16xf32>
    %107 = arith.addf %101, %106 : vector<16x16xf32>
    %c20_i32 = arith.constant 20 : i32
    %108 = arith.addi %c20_i32, %71 : i32
    %109 = arith.index_cast %108 : i32 to index
    %110 = memref.load %arg2[%109] : memref<256xf32, #tpu.memory_space<smem>>
    %111 = vector.broadcast %110 : f32 to vector<16x16xf32>
    %112 = arith.mulf %111, %6 : vector<16x16xf32>
    %113 = arith.addf %107, %112 : vector<16x16xf32>
    %c24_i32 = arith.constant 24 : i32
    %114 = arith.addi %c24_i32, %71 : i32
    %115 = arith.index_cast %114 : i32 to index
    %116 = memref.load %arg2[%115] : memref<256xf32, #tpu.memory_space<smem>>
    %117 = vector.broadcast %116 : f32 to vector<16x16xf32>
    %118 = arith.mulf %117, %8 : vector<16x16xf32>
    %119 = arith.addf %113, %118 : vector<16x16xf32>
    %c28_i32 = arith.constant 28 : i32
    %120 = arith.addi %c28_i32, %71 : i32
    %121 = arith.index_cast %120 : i32 to index
    %122 = memref.load %arg2[%121] : memref<256xf32, #tpu.memory_space<smem>>
    %123 = vector.broadcast %122 : f32 to vector<16x16xf32>
    %124 = arith.mulf %123, %10 : vector<16x16xf32>
    %125 = arith.addf %119, %124 : vector<16x16xf32>
    %cst_21 = arith.constant dense<0.000000e+00> : vector<16x30xf32>
    %126 = tpu.matmul %125, %26, %cst_21 {dimension_numbers = #tpu.dot_dimension_numbers<[1], [0], [0], [1], [0, 0, 1, 1], [], []>} : vector<16x16xf32>, vector<16x30xf32>, vector<16x30xf32> -> vector<16x30xf32>
    %127 = arith.addf %100, %126 : vector<16x30xf32>
    %cst_22 = arith.constant 0.000000e+00 : f32
    %128 = vector.broadcast %cst_22 : f32 to vector<16x16xf32>
    %c64_i32 = arith.constant 64 : i32
    %129 = arith.addi %c64_i32, %71 : i32
    %130 = arith.index_cast %129 : i32 to index
    %131 = memref.load %arg2[%130] : memref<256xf32, #tpu.memory_space<smem>>
    %132 = vector.broadcast %131 : f32 to vector<16x16xf32>
    %133 = arith.mulf %132, %4 : vector<16x16xf32>
    %134 = arith.addf %128, %133 : vector<16x16xf32>
    %c68_i32 = arith.constant 68 : i32
    %135 = arith.addi %c68_i32, %71 : i32
    %136 = arith.index_cast %135 : i32 to index
    %137 = memref.load %arg2[%136] : memref<256xf32, #tpu.memory_space<smem>>
    %138 = vector.broadcast %137 : f32 to vector<16x16xf32>
    %139 = arith.mulf %138, %6 : vector<16x16xf32>
    %140 = arith.addf %134, %139 : vector<16x16xf32>
    %c72_i32 = arith.constant 72 : i32
    %141 = arith.addi %c72_i32, %71 : i32
    %142 = arith.index_cast %141 : i32 to index
    %143 = memref.load %arg2[%142] : memref<256xf32, #tpu.memory_space<smem>>
    %144 = vector.broadcast %143 : f32 to vector<16x16xf32>
    %145 = arith.mulf %144, %8 : vector<16x16xf32>
    %146 = arith.addf %140, %145 : vector<16x16xf32>
    %c76_i32 = arith.constant 76 : i32
    %147 = arith.addi %c76_i32, %71 : i32
    %148 = arith.index_cast %147 : i32 to index
    %149 = memref.load %arg2[%148] : memref<256xf32, #tpu.memory_space<smem>>
    %150 = vector.broadcast %149 : f32 to vector<16x16xf32>
    %151 = arith.mulf %150, %10 : vector<16x16xf32>
    %152 = arith.addf %146, %151 : vector<16x16xf32>
    %cst_23 = arith.constant dense<0.000000e+00> : vector<16x30xf32>
    %153 = tpu.matmul %152, %33, %cst_23 {dimension_numbers = #tpu.dot_dimension_numbers<[1], [0], [0], [1], [0, 0, 1, 1], [], []>} : vector<16x16xf32>, vector<16x30xf32>, vector<16x30xf32> -> vector<16x30xf32>
    %154 = arith.addf %127, %153 : vector<16x30xf32>
    %cst_24 = arith.constant 0.000000e+00 : f32
    %155 = vector.broadcast %cst_24 : f32 to vector<16x16xf32>
    %c80_i32 = arith.constant 80 : i32
    %156 = arith.addi %c80_i32, %71 : i32
    %157 = arith.index_cast %156 : i32 to index
    %158 = memref.load %arg2[%157] : memref<256xf32, #tpu.memory_space<smem>>
    %159 = vector.broadcast %158 : f32 to vector<16x16xf32>
    %160 = arith.mulf %159, %4 : vector<16x16xf32>
    %161 = arith.addf %155, %160 : vector<16x16xf32>
    %c84_i32 = arith.constant 84 : i32
    %162 = arith.addi %c84_i32, %71 : i32
    %163 = arith.index_cast %162 : i32 to index
    %164 = memref.load %arg2[%163] : memref<256xf32, #tpu.memory_space<smem>>
    %165 = vector.broadcast %164 : f32 to vector<16x16xf32>
    %166 = arith.mulf %165, %6 : vector<16x16xf32>
    %167 = arith.addf %161, %166 : vector<16x16xf32>
    %c88_i32 = arith.constant 88 : i32
    %168 = arith.addi %c88_i32, %71 : i32
    %169 = arith.index_cast %168 : i32 to index
    %170 = memref.load %arg2[%169] : memref<256xf32, #tpu.memory_space<smem>>
    %171 = vector.broadcast %170 : f32 to vector<16x16xf32>
    %172 = arith.mulf %171, %8 : vector<16x16xf32>
    %173 = arith.addf %167, %172 : vector<16x16xf32>
    %c92_i32 = arith.constant 92 : i32
    %174 = arith.addi %c92_i32, %71 : i32
    %175 = arith.index_cast %174 : i32 to index
    %176 = memref.load %arg2[%175] : memref<256xf32, #tpu.memory_space<smem>>
    %177 = vector.broadcast %176 : f32 to vector<16x16xf32>
    %178 = arith.mulf %177, %10 : vector<16x16xf32>
    %179 = arith.addf %173, %178 : vector<16x16xf32>
    %cst_25 = arith.constant dense<0.000000e+00> : vector<16x30xf32>
    %180 = tpu.matmul %179, %40, %cst_25 {dimension_numbers = #tpu.dot_dimension_numbers<[1], [0], [0], [1], [0, 0, 1, 1], [], []>} : vector<16x16xf32>, vector<16x30xf32>, vector<16x30xf32> -> vector<16x30xf32>
    %181 = arith.addf %154, %180 : vector<16x30xf32>
    %cst_26 = arith.constant dense<0.000000e+00> : vector<30x30xf32>
    %182 = tpu.matmul %49, %181, %cst_26 {dimension_numbers = #tpu.dot_dimension_numbers<[1], [0], [0], [1], [0, 0, 1, 1], [], []>} : vector<30x16xf32>, vector<16x30xf32>, vector<30x30xf32> -> vector<30x30xf32>
    %183 = arith.addf %72, %182 : vector<30x30xf32>
    %cst_27 = arith.constant 0.000000e+00 : f32
    %184 = vector.broadcast %cst_27 : f32 to vector<16x30xf32>
    %cst_28 = arith.constant 0.000000e+00 : f32
    %185 = vector.broadcast %cst_28 : f32 to vector<16x16xf32>
    %c32_i32 = arith.constant 32 : i32
    %186 = arith.addi %c32_i32, %71 : i32
    %187 = arith.index_cast %186 : i32 to index
    %188 = memref.load %arg2[%187] : memref<256xf32, #tpu.memory_space<smem>>
    %189 = vector.broadcast %188 : f32 to vector<16x16xf32>
    %190 = arith.mulf %189, %4 : vector<16x16xf32>
    %191 = arith.addf %185, %190 : vector<16x16xf32>
    %c36_i32 = arith.constant 36 : i32
    %192 = arith.addi %c36_i32, %71 : i32
    %193 = arith.index_cast %192 : i32 to index
    %194 = memref.load %arg2[%193] : memref<256xf32, #tpu.memory_space<smem>>
    %195 = vector.broadcast %194 : f32 to vector<16x16xf32>
    %196 = arith.mulf %195, %6 : vector<16x16xf32>
    %197 = arith.addf %191, %196 : vector<16x16xf32>
    %c40_i32 = arith.constant 40 : i32
    %198 = arith.addi %c40_i32, %71 : i32
    %199 = arith.index_cast %198 : i32 to index
    %200 = memref.load %arg2[%199] : memref<256xf32, #tpu.memory_space<smem>>
    %201 = vector.broadcast %200 : f32 to vector<16x16xf32>
    %202 = arith.mulf %201, %8 : vector<16x16xf32>
    %203 = arith.addf %197, %202 : vector<16x16xf32>
    %c44_i32 = arith.constant 44 : i32
    %204 = arith.addi %c44_i32, %71 : i32
    %205 = arith.index_cast %204 : i32 to index
    %206 = memref.load %arg2[%205] : memref<256xf32, #tpu.memory_space<smem>>
    %207 = vector.broadcast %206 : f32 to vector<16x16xf32>
    %208 = arith.mulf %207, %10 : vector<16x16xf32>
    %209 = arith.addf %203, %208 : vector<16x16xf32>
    %cst_29 = arith.constant dense<0.000000e+00> : vector<16x30xf32>
    %210 = tpu.matmul %209, %19, %cst_29 {dimension_numbers = #tpu.dot_dimension_numbers<[1], [0], [0], [1], [0, 0, 1, 1], [], []>} : vector<16x16xf32>, vector<16x30xf32>, vector<16x30xf32> -> vector<16x30xf32>
    %211 = arith.addf %184, %210 : vector<16x30xf32>
    %cst_30 = arith.constant 0.000000e+00 : f32
    %212 = vector.broadcast %cst_30 : f32 to vector<16x16xf32>
    %c48_i32 = arith.constant 48 : i32
    %213 = arith.addi %c48_i32, %71 : i32
    %214 = arith.index_cast %213 : i32 to index
    %215 = memref.load %arg2[%214] : memref<256xf32, #tpu.memory_space<smem>>
    %216 = vector.broadcast %215 : f32 to vector<16x16xf32>
    %217 = arith.mulf %216, %4 : vector<16x16xf32>
    %218 = arith.addf %212, %217 : vector<16x16xf32>
    %c52_i32 = arith.constant 52 : i32
    %219 = arith.addi %c52_i32, %71 : i32
    %220 = arith.index_cast %219 : i32 to index
    %221 = memref.load %arg2[%220] : memref<256xf32, #tpu.memory_space<smem>>
    %222 = vector.broadcast %221 : f32 to vector<16x16xf32>
    %223 = arith.mulf %222, %6 : vector<16x16xf32>
    %224 = arith.addf %218, %223 : vector<16x16xf32>
    %c56_i32 = arith.constant 56 : i32
    %225 = arith.addi %c56_i32, %71 : i32
    %226 = arith.index_cast %225 : i32 to index
    %227 = memref.load %arg2[%226] : memref<256xf32, #tpu.memory_space<smem>>
    %228 = vector.broadcast %227 : f32 to vector<16x16xf32>
    %229 = arith.mulf %228, %8 : vector<16x16xf32>
    %230 = arith.addf %224, %229 : vector<16x16xf32>
    %c60_i32 = arith.constant 60 : i32
    %231 = arith.addi %c60_i32, %71 : i32
    %232 = arith.index_cast %231 : i32 to index
    %233 = memref.load %arg2[%232] : memref<256xf32, #tpu.memory_space<smem>>
    %234 = vector.broadcast %233 : f32 to vector<16x16xf32>
    %235 = arith.mulf %234, %10 : vector<16x16xf32>
    %236 = arith.addf %230, %235 : vector<16x16xf32>
    %cst_31 = arith.constant dense<0.000000e+00> : vector<16x30xf32>
    %237 = tpu.matmul %236, %26, %cst_31 {dimension_numbers = #tpu.dot_dimension_numbers<[1], [0], [0], [1], [0, 0, 1, 1], [], []>} : vector<16x16xf32>, vector<16x30xf32>, vector<16x30xf32> -> vector<16x30xf32>
    %238 = arith.addf %211, %237 : vector<16x30xf32>
    %cst_32 = arith.constant 0.000000e+00 : f32
    %239 = vector.broadcast %cst_32 : f32 to vector<16x16xf32>
    %c96_i32 = arith.constant 96 : i32
    %240 = arith.addi %c96_i32, %71 : i32
    %241 = arith.index_cast %240 : i32 to index
    %242 = memref.load %arg2[%241] : memref<256xf32, #tpu.memory_space<smem>>
    %243 = vector.broadcast %242 : f32 to vector<16x16xf32>
    %244 = arith.mulf %243, %4 : vector<16x16xf32>
    %245 = arith.addf %239, %244 : vector<16x16xf32>
    %c100_i32 = arith.constant 100 : i32
    %246 = arith.addi %c100_i32, %71 : i32
    %247 = arith.index_cast %246 : i32 to index
    %248 = memref.load %arg2[%247] : memref<256xf32, #tpu.memory_space<smem>>
    %249 = vector.broadcast %248 : f32 to vector<16x16xf32>
    %250 = arith.mulf %249, %6 : vector<16x16xf32>
    %251 = arith.addf %245, %250 : vector<16x16xf32>
    %c104_i32 = arith.constant 104 : i32
    %252 = arith.addi %c104_i32, %71 : i32
    %253 = arith.index_cast %252 : i32 to index
    %254 = memref.load %arg2[%253] : memref<256xf32, #tpu.memory_space<smem>>
    %255 = vector.broadcast %254 : f32 to vector<16x16xf32>
    %256 = arith.mulf %255, %8 : vector<16x16xf32>
    %257 = arith.addf %251, %256 : vector<16x16xf32>
    %c108_i32 = arith.constant 108 : i32
    %258 = arith.addi %c108_i32, %71 : i32
    %259 = arith.index_cast %258 : i32 to index
    %260 = memref.load %arg2[%259] : memref<256xf32, #tpu.memory_space<smem>>
    %261 = vector.broadcast %260 : f32 to vector<16x16xf32>
    %262 = arith.mulf %261, %10 : vector<16x16xf32>
    %263 = arith.addf %257, %262 : vector<16x16xf32>
    %cst_33 = arith.constant dense<0.000000e+00> : vector<16x30xf32>
    %264 = tpu.matmul %263, %33, %cst_33 {dimension_numbers = #tpu.dot_dimension_numbers<[1], [0], [0], [1], [0, 0, 1, 1], [], []>} : vector<16x16xf32>, vector<16x30xf32>, vector<16x30xf32> -> vector<16x30xf32>
    %265 = arith.addf %238, %264 : vector<16x30xf32>
    %cst_34 = arith.constant 0.000000e+00 : f32
    %266 = vector.broadcast %cst_34 : f32 to vector<16x16xf32>
    %c112_i32 = arith.constant 112 : i32
    %267 = arith.addi %c112_i32, %71 : i32
    %268 = arith.index_cast %267 : i32 to index
    %269 = memref.load %arg2[%268] : memref<256xf32, #tpu.memory_space<smem>>
    %270 = vector.broadcast %269 : f32 to vector<16x16xf32>
    %271 = arith.mulf %270, %4 : vector<16x16xf32>
    %272 = arith.addf %266, %271 : vector<16x16xf32>
    %c116_i32 = arith.constant 116 : i32
    %273 = arith.addi %c116_i32, %71 : i32
    %274 = arith.index_cast %273 : i32 to index
    %275 = memref.load %arg2[%274] : memref<256xf32, #tpu.memory_space<smem>>
    %276 = vector.broadcast %275 : f32 to vector<16x16xf32>
    %277 = arith.mulf %276, %6 : vector<16x16xf32>
    %278 = arith.addf %272, %277 : vector<16x16xf32>
    %c120_i32 = arith.constant 120 : i32
    %279 = arith.addi %c120_i32, %71 : i32
    %280 = arith.index_cast %279 : i32 to index
    %281 = memref.load %arg2[%280] : memref<256xf32, #tpu.memory_space<smem>>
    %282 = vector.broadcast %281 : f32 to vector<16x16xf32>
    %283 = arith.mulf %282, %8 : vector<16x16xf32>
    %284 = arith.addf %278, %283 : vector<16x16xf32>
    %c124_i32 = arith.constant 124 : i32
    %285 = arith.addi %c124_i32, %71 : i32
    %286 = arith.index_cast %285 : i32 to index
    %287 = memref.load %arg2[%286] : memref<256xf32, #tpu.memory_space<smem>>
    %288 = vector.broadcast %287 : f32 to vector<16x16xf32>
    %289 = arith.mulf %288, %10 : vector<16x16xf32>
    %290 = arith.addf %284, %289 : vector<16x16xf32>
    %cst_35 = arith.constant dense<0.000000e+00> : vector<16x30xf32>
    %291 = tpu.matmul %290, %40, %cst_35 {dimension_numbers = #tpu.dot_dimension_numbers<[1], [0], [0], [1], [0, 0, 1, 1], [], []>} : vector<16x16xf32>, vector<16x30xf32>, vector<16x30xf32> -> vector<16x30xf32>
    %292 = arith.addf %265, %291 : vector<16x30xf32>
    %cst_36 = arith.constant dense<0.000000e+00> : vector<30x30xf32>
    %293 = tpu.matmul %56, %292, %cst_36 {dimension_numbers = #tpu.dot_dimension_numbers<[1], [0], [0], [1], [0, 0, 1, 1], [], []>} : vector<30x16xf32>, vector<16x30xf32>, vector<30x30xf32> -> vector<30x30xf32>
    %294 = arith.addf %183, %293 : vector<30x30xf32>
    %cst_37 = arith.constant 0.000000e+00 : f32
    %295 = vector.broadcast %cst_37 : f32 to vector<16x30xf32>
    %cst_38 = arith.constant 0.000000e+00 : f32
    %296 = vector.broadcast %cst_38 : f32 to vector<16x16xf32>
    %c128_i32 = arith.constant 128 : i32
    %297 = arith.addi %c128_i32, %71 : i32
    %298 = arith.index_cast %297 : i32 to index
    %299 = memref.load %arg2[%298] : memref<256xf32, #tpu.memory_space<smem>>
    %300 = vector.broadcast %299 : f32 to vector<16x16xf32>
    %301 = arith.mulf %300, %4 : vector<16x16xf32>
    %302 = arith.addf %296, %301 : vector<16x16xf32>
    %c132_i32 = arith.constant 132 : i32
    %303 = arith.addi %c132_i32, %71 : i32
    %304 = arith.index_cast %303 : i32 to index
    %305 = memref.load %arg2[%304] : memref<256xf32, #tpu.memory_space<smem>>
    %306 = vector.broadcast %305 : f32 to vector<16x16xf32>
    %307 = arith.mulf %306, %6 : vector<16x16xf32>
    %308 = arith.addf %302, %307 : vector<16x16xf32>
    %c136_i32 = arith.constant 136 : i32
    %309 = arith.addi %c136_i32, %71 : i32
    %310 = arith.index_cast %309 : i32 to index
    %311 = memref.load %arg2[%310] : memref<256xf32, #tpu.memory_space<smem>>
    %312 = vector.broadcast %311 : f32 to vector<16x16xf32>
    %313 = arith.mulf %312, %8 : vector<16x16xf32>
    %314 = arith.addf %308, %313 : vector<16x16xf32>
    %c140_i32 = arith.constant 140 : i32
    %315 = arith.addi %c140_i32, %71 : i32
    %316 = arith.index_cast %315 : i32 to index
    %317 = memref.load %arg2[%316] : memref<256xf32, #tpu.memory_space<smem>>
    %318 = vector.broadcast %317 : f32 to vector<16x16xf32>
    %319 = arith.mulf %318, %10 : vector<16x16xf32>
    %320 = arith.addf %314, %319 : vector<16x16xf32>
    %cst_39 = arith.constant dense<0.000000e+00> : vector<16x30xf32>
    %321 = tpu.matmul %320, %19, %cst_39 {dimension_numbers = #tpu.dot_dimension_numbers<[1], [0], [0], [1], [0, 0, 1, 1], [], []>} : vector<16x16xf32>, vector<16x30xf32>, vector<16x30xf32> -> vector<16x30xf32>
    %322 = arith.addf %295, %321 : vector<16x30xf32>
    %cst_40 = arith.constant 0.000000e+00 : f32
    %323 = vector.broadcast %cst_40 : f32 to vector<16x16xf32>
    %c144_i32 = arith.constant 144 : i32
    %324 = arith.addi %c144_i32, %71 : i32
    %325 = arith.index_cast %324 : i32 to index
    %326 = memref.load %arg2[%325] : memref<256xf32, #tpu.memory_space<smem>>
    %327 = vector.broadcast %326 : f32 to vector<16x16xf32>
    %328 = arith.mulf %327, %4 : vector<16x16xf32>
    %329 = arith.addf %323, %328 : vector<16x16xf32>
    %c148_i32 = arith.constant 148 : i32
    %330 = arith.addi %c148_i32, %71 : i32
    %331 = arith.index_cast %330 : i32 to index
    %332 = memref.load %arg2[%331] : memref<256xf32, #tpu.memory_space<smem>>
    %333 = vector.broadcast %332 : f32 to vector<16x16xf32>
    %334 = arith.mulf %333, %6 : vector<16x16xf32>
    %335 = arith.addf %329, %334 : vector<16x16xf32>
    %c152_i32 = arith.constant 152 : i32
    %336 = arith.addi %c152_i32, %71 : i32
    %337 = arith.index_cast %336 : i32 to index
    %338 = memref.load %arg2[%337] : memref<256xf32, #tpu.memory_space<smem>>
    %339 = vector.broadcast %338 : f32 to vector<16x16xf32>
    %340 = arith.mulf %339, %8 : vector<16x16xf32>
    %341 = arith.addf %335, %340 : vector<16x16xf32>
    %c156_i32 = arith.constant 156 : i32
    %342 = arith.addi %c156_i32, %71 : i32
    %343 = arith.index_cast %342 : i32 to index
    %344 = memref.load %arg2[%343] : memref<256xf32, #tpu.memory_space<smem>>
    %345 = vector.broadcast %344 : f32 to vector<16x16xf32>
    %346 = arith.mulf %345, %10 : vector<16x16xf32>
    %347 = arith.addf %341, %346 : vector<16x16xf32>
    %cst_41 = arith.constant dense<0.000000e+00> : vector<16x30xf32>
    %348 = tpu.matmul %347, %26, %cst_41 {dimension_numbers = #tpu.dot_dimension_numbers<[1], [0], [0], [1], [0, 0, 1, 1], [], []>} : vector<16x16xf32>, vector<16x30xf32>, vector<16x30xf32> -> vector<16x30xf32>
    %349 = arith.addf %322, %348 : vector<16x30xf32>
    %cst_42 = arith.constant 0.000000e+00 : f32
    %350 = vector.broadcast %cst_42 : f32 to vector<16x16xf32>
    %c192_i32 = arith.constant 192 : i32
    %351 = arith.addi %c192_i32, %71 : i32
    %352 = arith.index_cast %351 : i32 to index
    %353 = memref.load %arg2[%352] : memref<256xf32, #tpu.memory_space<smem>>
    %354 = vector.broadcast %353 : f32 to vector<16x16xf32>
    %355 = arith.mulf %354, %4 : vector<16x16xf32>
    %356 = arith.addf %350, %355 : vector<16x16xf32>
    %c196_i32 = arith.constant 196 : i32
    %357 = arith.addi %c196_i32, %71 : i32
    %358 = arith.index_cast %357 : i32 to index
    %359 = memref.load %arg2[%358] : memref<256xf32, #tpu.memory_space<smem>>
    %360 = vector.broadcast %359 : f32 to vector<16x16xf32>
    %361 = arith.mulf %360, %6 : vector<16x16xf32>
    %362 = arith.addf %356, %361 : vector<16x16xf32>
    %c200_i32 = arith.constant 200 : i32
    %363 = arith.addi %c200_i32, %71 : i32
    %364 = arith.index_cast %363 : i32 to index
    %365 = memref.load %arg2[%364] : memref<256xf32, #tpu.memory_space<smem>>
    %366 = vector.broadcast %365 : f32 to vector<16x16xf32>
    %367 = arith.mulf %366, %8 : vector<16x16xf32>
    %368 = arith.addf %362, %367 : vector<16x16xf32>
    %c204_i32 = arith.constant 204 : i32
    %369 = arith.addi %c204_i32, %71 : i32
    %370 = arith.index_cast %369 : i32 to index
    %371 = memref.load %arg2[%370] : memref<256xf32, #tpu.memory_space<smem>>
    %372 = vector.broadcast %371 : f32 to vector<16x16xf32>
    %373 = arith.mulf %372, %10 : vector<16x16xf32>
    %374 = arith.addf %368, %373 : vector<16x16xf32>
    %cst_43 = arith.constant dense<0.000000e+00> : vector<16x30xf32>
    %375 = tpu.matmul %374, %33, %cst_43 {dimension_numbers = #tpu.dot_dimension_numbers<[1], [0], [0], [1], [0, 0, 1, 1], [], []>} : vector<16x16xf32>, vector<16x30xf32>, vector<16x30xf32> -> vector<16x30xf32>
    %376 = arith.addf %349, %375 : vector<16x30xf32>
    %cst_44 = arith.constant 0.000000e+00 : f32
    %377 = vector.broadcast %cst_44 : f32 to vector<16x16xf32>
    %c208_i32 = arith.constant 208 : i32
    %378 = arith.addi %c208_i32, %71 : i32
    %379 = arith.index_cast %378 : i32 to index
    %380 = memref.load %arg2[%379] : memref<256xf32, #tpu.memory_space<smem>>
    %381 = vector.broadcast %380 : f32 to vector<16x16xf32>
    %382 = arith.mulf %381, %4 : vector<16x16xf32>
    %383 = arith.addf %377, %382 : vector<16x16xf32>
    %c212_i32 = arith.constant 212 : i32
    %384 = arith.addi %c212_i32, %71 : i32
    %385 = arith.index_cast %384 : i32 to index
    %386 = memref.load %arg2[%385] : memref<256xf32, #tpu.memory_space<smem>>
    %387 = vector.broadcast %386 : f32 to vector<16x16xf32>
    %388 = arith.mulf %387, %6 : vector<16x16xf32>
    %389 = arith.addf %383, %388 : vector<16x16xf32>
    %c216_i32 = arith.constant 216 : i32
    %390 = arith.addi %c216_i32, %71 : i32
    %391 = arith.index_cast %390 : i32 to index
    %392 = memref.load %arg2[%391] : memref<256xf32, #tpu.memory_space<smem>>
    %393 = vector.broadcast %392 : f32 to vector<16x16xf32>
    %394 = arith.mulf %393, %8 : vector<16x16xf32>
    %395 = arith.addf %389, %394 : vector<16x16xf32>
    %c220_i32 = arith.constant 220 : i32
    %396 = arith.addi %c220_i32, %71 : i32
    %397 = arith.index_cast %396 : i32 to index
    %398 = memref.load %arg2[%397] : memref<256xf32, #tpu.memory_space<smem>>
    %399 = vector.broadcast %398 : f32 to vector<16x16xf32>
    %400 = arith.mulf %399, %10 : vector<16x16xf32>
    %401 = arith.addf %395, %400 : vector<16x16xf32>
    %cst_45 = arith.constant dense<0.000000e+00> : vector<16x30xf32>
    %402 = tpu.matmul %401, %40, %cst_45 {dimension_numbers = #tpu.dot_dimension_numbers<[1], [0], [0], [1], [0, 0, 1, 1], [], []>} : vector<16x16xf32>, vector<16x30xf32>, vector<16x30xf32> -> vector<16x30xf32>
    %403 = arith.addf %376, %402 : vector<16x30xf32>
    %cst_46 = arith.constant dense<0.000000e+00> : vector<30x30xf32>
    %404 = tpu.matmul %63, %403, %cst_46 {dimension_numbers = #tpu.dot_dimension_numbers<[1], [0], [0], [1], [0, 0, 1, 1], [], []>} : vector<30x16xf32>, vector<16x30xf32>, vector<30x30xf32> -> vector<30x30xf32>
    %405 = arith.addf %294, %404 : vector<30x30xf32>
    %cst_47 = arith.constant 0.000000e+00 : f32
    %406 = vector.broadcast %cst_47 : f32 to vector<16x30xf32>
    %cst_48 = arith.constant 0.000000e+00 : f32
    %407 = vector.broadcast %cst_48 : f32 to vector<16x16xf32>
    %c160_i32 = arith.constant 160 : i32
    %408 = arith.addi %c160_i32, %71 : i32
    %409 = arith.index_cast %408 : i32 to index
    %410 = memref.load %arg2[%409] : memref<256xf32, #tpu.memory_space<smem>>
    %411 = vector.broadcast %410 : f32 to vector<16x16xf32>
    %412 = arith.mulf %411, %4 : vector<16x16xf32>
    %413 = arith.addf %407, %412 : vector<16x16xf32>
    %c164_i32 = arith.constant 164 : i32
    %414 = arith.addi %c164_i32, %71 : i32
    %415 = arith.index_cast %414 : i32 to index
    %416 = memref.load %arg2[%415] : memref<256xf32, #tpu.memory_space<smem>>
    %417 = vector.broadcast %416 : f32 to vector<16x16xf32>
    %418 = arith.mulf %417, %6 : vector<16x16xf32>
    %419 = arith.addf %413, %418 : vector<16x16xf32>
    %c168_i32 = arith.constant 168 : i32
    %420 = arith.addi %c168_i32, %71 : i32
    %421 = arith.index_cast %420 : i32 to index
    %422 = memref.load %arg2[%421] : memref<256xf32, #tpu.memory_space<smem>>
    %423 = vector.broadcast %422 : f32 to vector<16x16xf32>
    %424 = arith.mulf %423, %8 : vector<16x16xf32>
    %425 = arith.addf %419, %424 : vector<16x16xf32>
    %c172_i32 = arith.constant 172 : i32
    %426 = arith.addi %c172_i32, %71 : i32
    %427 = arith.index_cast %426 : i32 to index
    %428 = memref.load %arg2[%427] : memref<256xf32, #tpu.memory_space<smem>>
    %429 = vector.broadcast %428 : f32 to vector<16x16xf32>
    %430 = arith.mulf %429, %10 : vector<16x16xf32>
    %431 = arith.addf %425, %430 : vector<16x16xf32>
    %cst_49 = arith.constant dense<0.000000e+00> : vector<16x30xf32>
    %432 = tpu.matmul %431, %19, %cst_49 {dimension_numbers = #tpu.dot_dimension_numbers<[1], [0], [0], [1], [0, 0, 1, 1], [], []>} : vector<16x16xf32>, vector<16x30xf32>, vector<16x30xf32> -> vector<16x30xf32>
    %433 = arith.addf %406, %432 : vector<16x30xf32>
    %cst_50 = arith.constant 0.000000e+00 : f32
    %434 = vector.broadcast %cst_50 : f32 to vector<16x16xf32>
    %c176_i32 = arith.constant 176 : i32
    %435 = arith.addi %c176_i32, %71 : i32
    %436 = arith.index_cast %435 : i32 to index
    %437 = memref.load %arg2[%436] : memref<256xf32, #tpu.memory_space<smem>>
    %438 = vector.broadcast %437 : f32 to vector<16x16xf32>
    %439 = arith.mulf %438, %4 : vector<16x16xf32>
    %440 = arith.addf %434, %439 : vector<16x16xf32>
    %c180_i32 = arith.constant 180 : i32
    %441 = arith.addi %c180_i32, %71 : i32
    %442 = arith.index_cast %441 : i32 to index
    %443 = memref.load %arg2[%442] : memref<256xf32, #tpu.memory_space<smem>>
    %444 = vector.broadcast %443 : f32 to vector<16x16xf32>
    %445 = arith.mulf %444, %6 : vector<16x16xf32>
    %446 = arith.addf %440, %445 : vector<16x16xf32>
    %c184_i32 = arith.constant 184 : i32
    %447 = arith.addi %c184_i32, %71 : i32
    %448 = arith.index_cast %447 : i32 to index
    %449 = memref.load %arg2[%448] : memref<256xf32, #tpu.memory_space<smem>>
    %450 = vector.broadcast %449 : f32 to vector<16x16xf32>
    %451 = arith.mulf %450, %8 : vector<16x16xf32>
    %452 = arith.addf %446, %451 : vector<16x16xf32>
    %c188_i32 = arith.constant 188 : i32
    %453 = arith.addi %c188_i32, %71 : i32
    %454 = arith.index_cast %453 : i32 to index
    %455 = memref.load %arg2[%454] : memref<256xf32, #tpu.memory_space<smem>>
    %456 = vector.broadcast %455 : f32 to vector<16x16xf32>
    %457 = arith.mulf %456, %10 : vector<16x16xf32>
    %458 = arith.addf %452, %457 : vector<16x16xf32>
    %cst_51 = arith.constant dense<0.000000e+00> : vector<16x30xf32>
    %459 = tpu.matmul %458, %26, %cst_51 {dimension_numbers = #tpu.dot_dimension_numbers<[1], [0], [0], [1], [0, 0, 1, 1], [], []>} : vector<16x16xf32>, vector<16x30xf32>, vector<16x30xf32> -> vector<16x30xf32>
    %460 = arith.addf %433, %459 : vector<16x30xf32>
    %cst_52 = arith.constant 0.000000e+00 : f32
    %461 = vector.broadcast %cst_52 : f32 to vector<16x16xf32>
    %c224_i32 = arith.constant 224 : i32
    %462 = arith.addi %c224_i32, %71 : i32
    %463 = arith.index_cast %462 : i32 to index
    %464 = memref.load %arg2[%463] : memref<256xf32, #tpu.memory_space<smem>>
    %465 = vector.broadcast %464 : f32 to vector<16x16xf32>
    %466 = arith.mulf %465, %4 : vector<16x16xf32>
    %467 = arith.addf %461, %466 : vector<16x16xf32>
    %c228_i32 = arith.constant 228 : i32
    %468 = arith.addi %c228_i32, %71 : i32
    %469 = arith.index_cast %468 : i32 to index
    %470 = memref.load %arg2[%469] : memref<256xf32, #tpu.memory_space<smem>>
    %471 = vector.broadcast %470 : f32 to vector<16x16xf32>
    %472 = arith.mulf %471, %6 : vector<16x16xf32>
    %473 = arith.addf %467, %472 : vector<16x16xf32>
    %c232_i32 = arith.constant 232 : i32
    %474 = arith.addi %c232_i32, %71 : i32
    %475 = arith.index_cast %474 : i32 to index
    %476 = memref.load %arg2[%475] : memref<256xf32, #tpu.memory_space<smem>>
    %477 = vector.broadcast %476 : f32 to vector<16x16xf32>
    %478 = arith.mulf %477, %8 : vector<16x16xf32>
    %479 = arith.addf %473, %478 : vector<16x16xf32>
    %c236_i32 = arith.constant 236 : i32
    %480 = arith.addi %c236_i32, %71 : i32
    %481 = arith.index_cast %480 : i32 to index
    %482 = memref.load %arg2[%481] : memref<256xf32, #tpu.memory_space<smem>>
    %483 = vector.broadcast %482 : f32 to vector<16x16xf32>
    %484 = arith.mulf %483, %10 : vector<16x16xf32>
    %485 = arith.addf %479, %484 : vector<16x16xf32>
    %cst_53 = arith.constant dense<0.000000e+00> : vector<16x30xf32>
    %486 = tpu.matmul %485, %33, %cst_53 {dimension_numbers = #tpu.dot_dimension_numbers<[1], [0], [0], [1], [0, 0, 1, 1], [], []>} : vector<16x16xf32>, vector<16x30xf32>, vector<16x30xf32> -> vector<16x30xf32>
    %487 = arith.addf %460, %486 : vector<16x30xf32>
    %cst_54 = arith.constant 0.000000e+00 : f32
    %488 = vector.broadcast %cst_54 : f32 to vector<16x16xf32>
    %c240_i32 = arith.constant 240 : i32
    %489 = arith.addi %c240_i32, %71 : i32
    %490 = arith.index_cast %489 : i32 to index
    %491 = memref.load %arg2[%490] : memref<256xf32, #tpu.memory_space<smem>>
    %492 = vector.broadcast %491 : f32 to vector<16x16xf32>
    %493 = arith.mulf %492, %4 : vector<16x16xf32>
    %494 = arith.addf %488, %493 : vector<16x16xf32>
    %c244_i32 = arith.constant 244 : i32
    %495 = arith.addi %c244_i32, %71 : i32
    %496 = arith.index_cast %495 : i32 to index
    %497 = memref.load %arg2[%496] : memref<256xf32, #tpu.memory_space<smem>>
    %498 = vector.broadcast %497 : f32 to vector<16x16xf32>
    %499 = arith.mulf %498, %6 : vector<16x16xf32>
    %500 = arith.addf %494, %499 : vector<16x16xf32>
    %c248_i32 = arith.constant 248 : i32
    %501 = arith.addi %c248_i32, %71 : i32
    %502 = arith.index_cast %501 : i32 to index
    %503 = memref.load %arg2[%502] : memref<256xf32, #tpu.memory_space<smem>>
    %504 = vector.broadcast %503 : f32 to vector<16x16xf32>
    %505 = arith.mulf %504, %8 : vector<16x16xf32>
    %506 = arith.addf %500, %505 : vector<16x16xf32>
    %c252_i32 = arith.constant 252 : i32
    %507 = arith.addi %c252_i32, %71 : i32
    %508 = arith.index_cast %507 : i32 to index
    %509 = memref.load %arg2[%508] : memref<256xf32, #tpu.memory_space<smem>>
    %510 = vector.broadcast %509 : f32 to vector<16x16xf32>
    %511 = arith.mulf %510, %10 : vector<16x16xf32>
    %512 = arith.addf %506, %511 : vector<16x16xf32>
    %cst_55 = arith.constant dense<0.000000e+00> : vector<16x30xf32>
    %513 = tpu.matmul %512, %40, %cst_55 {dimension_numbers = #tpu.dot_dimension_numbers<[1], [0], [0], [1], [0, 0, 1, 1], [], []>} : vector<16x16xf32>, vector<16x30xf32>, vector<16x30xf32> -> vector<16x30xf32>
    %514 = arith.addf %487, %513 : vector<16x30xf32>
    %cst_56 = arith.constant dense<0.000000e+00> : vector<30x30xf32>
    %515 = tpu.matmul %70, %514, %cst_56 {dimension_numbers = #tpu.dot_dimension_numbers<[1], [0], [0], [1], [0, 0, 1, 1], [], []>} : vector<30x16xf32>, vector<16x30xf32>, vector<30x30xf32> -> vector<30x30xf32>
    %516 = arith.addf %405, %515 : vector<30x30xf32>
    %517 = arith.index_cast %71 : i32 to index
    %518 = memref.load %arg3[%517] : memref<4xf32, #tpu.memory_space<smem>>
    %519 = vector.broadcast %518 : f32 to vector<30x30xf32>
    %520 = arith.addf %516, %519 : vector<30x30xf32>
    %c0_57 = arith.constant 0 : index
    %c0_58 = arith.constant 0 : index
    %c0_59 = arith.constant 0 : index
    %c0_60 = arith.constant 0 : index
    %521 = vector.load %arg5[%c0_57, %c0_58, %c0_59, %c0_60] : memref<1x2x30x30xf32, #tpu.memory_space<vmem>>, vector<1x1x30x30xf32>
    %522 = vector.shape_cast %521 : vector<1x1x30x30xf32> to vector<30x30xf32>
    %523 = vector.shape_cast %520 : vector<30x30xf32> to vector<1x1x30x30xf32>
    tpu.vector_store %arg5[%c0_57, %c0_58, %c0_59, %c0_60], %523 {strides = array<i32>} : memref<1x2x30x30xf32, #tpu.memory_space<vmem>>, vector<1x1x30x30xf32>,
    %c1_i32_61 = arith.constant 1 : i32
    %524 = arith.addi %0, %c1_i32_61 : i32
    %cst_62 = arith.constant 0.000000e+00 : f32
    %525 = vector.broadcast %cst_62 : f32 to vector<30x30xf32>
    %cst_63 = arith.constant 0.000000e+00 : f32
    %526 = vector.broadcast %cst_63 : f32 to vector<16x30xf32>
    %cst_64 = arith.constant 0.000000e+00 : f32
    %527 = vector.broadcast %cst_64 : f32 to vector<16x16xf32>
    %c0_i32_65 = arith.constant 0 : i32
    %528 = arith.addi %c0_i32_65, %524 : i32
    %529 = arith.index_cast %528 : i32 to index
    %530 = memref.load %arg2[%529] : memref<256xf32, #tpu.memory_space<smem>>
    %531 = vector.broadcast %530 : f32 to vector<16x16xf32>
    %532 = arith.mulf %531, %4 : vector<16x16xf32>
    %533 = arith.addf %527, %532 : vector<16x16xf32>
    %c4_i32_66 = arith.constant 4 : i32
    %534 = arith.addi %c4_i32_66, %524 : i32
    %535 = arith.index_cast %534 : i32 to index
    %536 = memref.load %arg2[%535] : memref<256xf32, #tpu.memory_space<smem>>
    %537 = vector.broadcast %536 : f32 to vector<16x16xf32>
    %538 = arith.mulf %537, %6 : vector<16x16xf32>
    %539 = arith.addf %533, %538 : vector<16x16xf32>
    %c8_i32_67 = arith.constant 8 : i32
    %540 = arith.addi %c8_i32_67, %524 : i32
    %541 = arith.index_cast %540 : i32 to index
    %542 = memref.load %arg2[%541] : memref<256xf32, #tpu.memory_space<smem>>
    %543 = vector.broadcast %542 : f32 to vector<16x16xf32>
    %544 = arith.mulf %543, %8 : vector<16x16xf32>
    %545 = arith.addf %539, %544 : vector<16x16xf32>
    %c12_i32_68 = arith.constant 12 : i32
    %546 = arith.addi %c12_i32_68, %524 : i32
    %547 = arith.index_cast %546 : i32 to index
    %548 = memref.load %arg2[%547] : memref<256xf32, #tpu.memory_space<smem>>
    %549 = vector.broadcast %548 : f32 to vector<16x16xf32>
    %550 = arith.mulf %549, %10 : vector<16x16xf32>
    %551 = arith.addf %545, %550 : vector<16x16xf32>
    %cst_69 = arith.constant dense<0.000000e+00> : vector<16x30xf32>
    %552 = tpu.matmul %551, %19, %cst_69 {dimension_numbers = #tpu.dot_dimension_numbers<[1], [0], [0], [1], [0, 0, 1, 1], [], []>} : vector<16x16xf32>, vector<16x30xf32>, vector<16x30xf32> -> vector<16x30xf32>
    %553 = arith.addf %526, %552 : vector<16x30xf32>
    %cst_70 = arith.constant 0.000000e+00 : f32
    %554 = vector.broadcast %cst_70 : f32 to vector<16x16xf32>
    %c16_i32_71 = arith.constant 16 : i32
    %555 = arith.addi %c16_i32_71, %524 : i32
    %556 = arith.index_cast %555 : i32 to index
    %557 = memref.load %arg2[%556] : memref<256xf32, #tpu.memory_space<smem>>
    %558 = vector.broadcast %557 : f32 to vector<16x16xf32>
    %559 = arith.mulf %558, %4 : vector<16x16xf32>
    %560 = arith.addf %554, %559 : vector<16x16xf32>
    %c20_i32_72 = arith.constant 20 : i32
    %561 = arith.addi %c20_i32_72, %524 : i32
    %562 = arith.index_cast %561 : i32 to index
    %563 = memref.load %arg2[%562] : memref<256xf32, #tpu.memory_space<smem>>
    %564 = vector.broadcast %563 : f32 to vector<16x16xf32>
    %565 = arith.mulf %564, %6 : vector<16x16xf32>
    %566 = arith.addf %560, %565 : vector<16x16xf32>
    %c24_i32_73 = arith.constant 24 : i32
    %567 = arith.addi %c24_i32_73, %524 : i32
    %568 = arith.index_cast %567 : i32 to index
    %569 = memref.load %arg2[%568] : memref<256xf32, #tpu.memory_space<smem>>
    %570 = vector.broadcast %569 : f32 to vector<16x16xf32>
    %571 = arith.mulf %570, %8 : vector<16x16xf32>
    %572 = arith.addf %566, %571 : vector<16x16xf32>
    %c28_i32_74 = arith.constant 28 : i32
    %573 = arith.addi %c28_i32_74, %524 : i32
    %574 = arith.index_cast %573 : i32 to index
    %575 = memref.load %arg2[%574] : memref<256xf32, #tpu.memory_space<smem>>
    %576 = vector.broadcast %575 : f32 to vector<16x16xf32>
    %577 = arith.mulf %576, %10 : vector<16x16xf32>
    %578 = arith.addf %572, %577 : vector<16x16xf32>
    %cst_75 = arith.constant dense<0.000000e+00> : vector<16x30xf32>
    %579 = tpu.matmul %578, %26, %cst_75 {dimension_numbers = #tpu.dot_dimension_numbers<[1], [0], [0], [1], [0, 0, 1, 1], [], []>} : vector<16x16xf32>, vector<16x30xf32>, vector<16x30xf32> -> vector<16x30xf32>
    %580 = arith.addf %553, %579 : vector<16x30xf32>
    %cst_76 = arith.constant 0.000000e+00 : f32
    %581 = vector.broadcast %cst_76 : f32 to vector<16x16xf32>
    %c64_i32_77 = arith.constant 64 : i32
    %582 = arith.addi %c64_i32_77, %524 : i32
    %583 = arith.index_cast %582 : i32 to index
    %584 = memref.load %arg2[%583] : memref<256xf32, #tpu.memory_space<smem>>
    %585 = vector.broadcast %584 : f32 to vector<16x16xf32>
    %586 = arith.mulf %585, %4 : vector<16x16xf32>
    %587 = arith.addf %581, %586 : vector<16x16xf32>
    %c68_i32_78 = arith.constant 68 : i32
    %588 = arith.addi %c68_i32_78, %524 : i32
    %589 = arith.index_cast %588 : i32 to index
    %590 = memref.load %arg2[%589] : memref<256xf32, #tpu.memory_space<smem>>
    %591 = vector.broadcast %590 : f32 to vector<16x16xf32>
    %592 = arith.mulf %591, %6 : vector<16x16xf32>
    %593 = arith.addf %587, %592 : vector<16x16xf32>
    %c72_i32_79 = arith.constant 72 : i32
    %594 = arith.addi %c72_i32_79, %524 : i32
    %595 = arith.index_cast %594 : i32 to index
    %596 = memref.load %arg2[%595] : memref<256xf32, #tpu.memory_space<smem>>
    %597 = vector.broadcast %596 : f32 to vector<16x16xf32>
    %598 = arith.mulf %597, %8 : vector<16x16xf32>
    %599 = arith.addf %593, %598 : vector<16x16xf32>
    %c76_i32_80 = arith.constant 76 : i32
    %600 = arith.addi %c76_i32_80, %524 : i32
    %601 = arith.index_cast %600 : i32 to index
    %602 = memref.load %arg2[%601] : memref<256xf32, #tpu.memory_space<smem>>
    %603 = vector.broadcast %602 : f32 to vector<16x16xf32>
    %604 = arith.mulf %603, %10 : vector<16x16xf32>
    %605 = arith.addf %599, %604 : vector<16x16xf32>
    %cst_81 = arith.constant dense<0.000000e+00> : vector<16x30xf32>
    %606 = tpu.matmul %605, %33, %cst_81 {dimension_numbers = #tpu.dot_dimension_numbers<[1], [0], [0], [1], [0, 0, 1, 1], [], []>} : vector<16x16xf32>, vector<16x30xf32>, vector<16x30xf32> -> vector<16x30xf32>
    %607 = arith.addf %580, %606 : vector<16x30xf32>
    %cst_82 = arith.constant 0.000000e+00 : f32
    %608 = vector.broadcast %cst_82 : f32 to vector<16x16xf32>
    %c80_i32_83 = arith.constant 80 : i32
    %609 = arith.addi %c80_i32_83, %524 : i32
    %610 = arith.index_cast %609 : i32 to index
    %611 = memref.load %arg2[%610] : memref<256xf32, #tpu.memory_space<smem>>
    %612 = vector.broadcast %611 : f32 to vector<16x16xf32>
    %613 = arith.mulf %612, %4 : vector<16x16xf32>
    %614 = arith.addf %608, %613 : vector<16x16xf32>
    %c84_i32_84 = arith.constant 84 : i32
    %615 = arith.addi %c84_i32_84, %524 : i32
    %616 = arith.index_cast %615 : i32 to index
    %617 = memref.load %arg2[%616] : memref<256xf32, #tpu.memory_space<smem>>
    %618 = vector.broadcast %617 : f32 to vector<16x16xf32>
    %619 = arith.mulf %618, %6 : vector<16x16xf32>
    %620 = arith.addf %614, %619 : vector<16x16xf32>
    %c88_i32_85 = arith.constant 88 : i32
    %621 = arith.addi %c88_i32_85, %524 : i32
    %622 = arith.index_cast %621 : i32 to index
    %623 = memref.load %arg2[%622] : memref<256xf32, #tpu.memory_space<smem>>
    %624 = vector.broadcast %623 : f32 to vector<16x16xf32>
    %625 = arith.mulf %624, %8 : vector<16x16xf32>
    %626 = arith.addf %620, %625 : vector<16x16xf32>
    %c92_i32_86 = arith.constant 92 : i32
    %627 = arith.addi %c92_i32_86, %524 : i32
    %628 = arith.index_cast %627 : i32 to index
    %629 = memref.load %arg2[%628] : memref<256xf32, #tpu.memory_space<smem>>
    %630 = vector.broadcast %629 : f32 to vector<16x16xf32>
    %631 = arith.mulf %630, %10 : vector<16x16xf32>
    %632 = arith.addf %626, %631 : vector<16x16xf32>
    %cst_87 = arith.constant dense<0.000000e+00> : vector<16x30xf32>
    %633 = tpu.matmul %632, %40, %cst_87 {dimension_numbers = #tpu.dot_dimension_numbers<[1], [0], [0], [1], [0, 0, 1, 1], [], []>} : vector<16x16xf32>, vector<16x30xf32>, vector<16x30xf32> -> vector<16x30xf32>
    %634 = arith.addf %607, %633 : vector<16x30xf32>
    %cst_88 = arith.constant dense<0.000000e+00> : vector<30x30xf32>
    %635 = tpu.matmul %49, %634, %cst_88 {dimension_numbers = #tpu.dot_dimension_numbers<[1], [0], [0], [1], [0, 0, 1, 1], [], []>} : vector<30x16xf32>, vector<16x30xf32>, vector<30x30xf32> -> vector<30x30xf32>
    %636 = arith.addf %525, %635 : vector<30x30xf32>
    %cst_89 = arith.constant 0.000000e+00 : f32
    %637 = vector.broadcast %cst_89 : f32 to vector<16x30xf32>
    %cst_90 = arith.constant 0.000000e+00 : f32
    %638 = vector.broadcast %cst_90 : f32 to vector<16x16xf32>
    %c32_i32_91 = arith.constant 32 : i32
    %639 = arith.addi %c32_i32_91, %524 : i32
    %640 = arith.index_cast %639 : i32 to index
    %641 = memref.load %arg2[%640] : memref<256xf32, #tpu.memory_space<smem>>
    %642 = vector.broadcast %641 : f32 to vector<16x16xf32>
    %643 = arith.mulf %642, %4 : vector<16x16xf32>
    %644 = arith.addf %638, %643 : vector<16x16xf32>
    %c36_i32_92 = arith.constant 36 : i32
    %645 = arith.addi %c36_i32_92, %524 : i32
    %646 = arith.index_cast %645 : i32 to index
    %647 = memref.load %arg2[%646] : memref<256xf32, #tpu.memory_space<smem>>
    %648 = vector.broadcast %647 : f32 to vector<16x16xf32>
    %649 = arith.mulf %648, %6 : vector<16x16xf32>
    %650 = arith.addf %644, %649 : vector<16x16xf32>
    %c40_i32_93 = arith.constant 40 : i32
    %651 = arith.addi %c40_i32_93, %524 : i32
    %652 = arith.index_cast %651 : i32 to index
    %653 = memref.load %arg2[%652] : memref<256xf32, #tpu.memory_space<smem>>
    %654 = vector.broadcast %653 : f32 to vector<16x16xf32>
    %655 = arith.mulf %654, %8 : vector<16x16xf32>
    %656 = arith.addf %650, %655 : vector<16x16xf32>
    %c44_i32_94 = arith.constant 44 : i32
    %657 = arith.addi %c44_i32_94, %524 : i32
    %658 = arith.index_cast %657 : i32 to index
    %659 = memref.load %arg2[%658] : memref<256xf32, #tpu.memory_space<smem>>
    %660 = vector.broadcast %659 : f32 to vector<16x16xf32>
    %661 = arith.mulf %660, %10 : vector<16x16xf32>
    %662 = arith.addf %656, %661 : vector<16x16xf32>
    %cst_95 = arith.constant dense<0.000000e+00> : vector<16x30xf32>
    %663 = tpu.matmul %662, %19, %cst_95 {dimension_numbers = #tpu.dot_dimension_numbers<[1], [0], [0], [1], [0, 0, 1, 1], [], []>} : vector<16x16xf32>, vector<16x30xf32>, vector<16x30xf32> -> vector<16x30xf32>
    %664 = arith.addf %637, %663 : vector<16x30xf32>
    %cst_96 = arith.constant 0.000000e+00 : f32
    %665 = vector.broadcast %cst_96 : f32 to vector<16x16xf32>
    %c48_i32_97 = arith.constant 48 : i32
    %666 = arith.addi %c48_i32_97, %524 : i32
    %667 = arith.index_cast %666 : i32 to index
    %668 = memref.load %arg2[%667] : memref<256xf32, #tpu.memory_space<smem>>
    %669 = vector.broadcast %668 : f32 to vector<16x16xf32>
    %670 = arith.mulf %669, %4 : vector<16x16xf32>
    %671 = arith.addf %665, %670 : vector<16x16xf32>
    %c52_i32_98 = arith.constant 52 : i32
    %672 = arith.addi %c52_i32_98, %524 : i32
    %673 = arith.index_cast %672 : i32 to index
    %674 = memref.load %arg2[%673] : memref<256xf32, #tpu.memory_space<smem>>
    %675 = vector.broadcast %674 : f32 to vector<16x16xf32>
    %676 = arith.mulf %675, %6 : vector<16x16xf32>
    %677 = arith.addf %671, %676 : vector<16x16xf32>
    %c56_i32_99 = arith.constant 56 : i32
    %678 = arith.addi %c56_i32_99, %524 : i32
    %679 = arith.index_cast %678 : i32 to index
    %680 = memref.load %arg2[%679] : memref<256xf32, #tpu.memory_space<smem>>
    %681 = vector.broadcast %680 : f32 to vector<16x16xf32>
    %682 = arith.mulf %681, %8 : vector<16x16xf32>
    %683 = arith.addf %677, %682 : vector<16x16xf32>
    %c60_i32_100 = arith.constant 60 : i32
    %684 = arith.addi %c60_i32_100, %524 : i32
    %685 = arith.index_cast %684 : i32 to index
    %686 = memref.load %arg2[%685] : memref<256xf32, #tpu.memory_space<smem>>
    %687 = vector.broadcast %686 : f32 to vector<16x16xf32>
    %688 = arith.mulf %687, %10 : vector<16x16xf32>
    %689 = arith.addf %683, %688 : vector<16x16xf32>
    %cst_101 = arith.constant dense<0.000000e+00> : vector<16x30xf32>
    %690 = tpu.matmul %689, %26, %cst_101 {dimension_numbers = #tpu.dot_dimension_numbers<[1], [0], [0], [1], [0, 0, 1, 1], [], []>} : vector<16x16xf32>, vector<16x30xf32>, vector<16x30xf32> -> vector<16x30xf32>
    %691 = arith.addf %664, %690 : vector<16x30xf32>
    %cst_102 = arith.constant 0.000000e+00 : f32
    %692 = vector.broadcast %cst_102 : f32 to vector<16x16xf32>
    %c96_i32_103 = arith.constant 96 : i32
    %693 = arith.addi %c96_i32_103, %524 : i32
    %694 = arith.index_cast %693 : i32 to index
    %695 = memref.load %arg2[%694] : memref<256xf32, #tpu.memory_space<smem>>
    %696 = vector.broadcast %695 : f32 to vector<16x16xf32>
    %697 = arith.mulf %696, %4 : vector<16x16xf32>
    %698 = arith.addf %692, %697 : vector<16x16xf32>
    %c100_i32_104 = arith.constant 100 : i32
    %699 = arith.addi %c100_i32_104, %524 : i32
    %700 = arith.index_cast %699 : i32 to index
    %701 = memref.load %arg2[%700] : memref<256xf32, #tpu.memory_space<smem>>
    %702 = vector.broadcast %701 : f32 to vector<16x16xf32>
    %703 = arith.mulf %702, %6 : vector<16x16xf32>
    %704 = arith.addf %698, %703 : vector<16x16xf32>
    %c104_i32_105 = arith.constant 104 : i32
    %705 = arith.addi %c104_i32_105, %524 : i32
    %706 = arith.index_cast %705 : i32 to index
    %707 = memref.load %arg2[%706] : memref<256xf32, #tpu.memory_space<smem>>
    %708 = vector.broadcast %707 : f32 to vector<16x16xf32>
    %709 = arith.mulf %708, %8 : vector<16x16xf32>
    %710 = arith.addf %704, %709 : vector<16x16xf32>
    %c108_i32_106 = arith.constant 108 : i32
    %711 = arith.addi %c108_i32_106, %524 : i32
    %712 = arith.index_cast %711 : i32 to index
    %713 = memref.load %arg2[%712] : memref<256xf32, #tpu.memory_space<smem>>
    %714 = vector.broadcast %713 : f32 to vector<16x16xf32>
    %715 = arith.mulf %714, %10 : vector<16x16xf32>
    %716 = arith.addf %710, %715 : vector<16x16xf32>
    %cst_107 = arith.constant dense<0.000000e+00> : vector<16x30xf32>
    %717 = tpu.matmul %716, %33, %cst_107 {dimension_numbers = #tpu.dot_dimension_numbers<[1], [0], [0], [1], [0, 0, 1, 1], [], []>} : vector<16x16xf32>, vector<16x30xf32>, vector<16x30xf32> -> vector<16x30xf32>
    %718 = arith.addf %691, %717 : vector<16x30xf32>
    %cst_108 = arith.constant 0.000000e+00 : f32
    %719 = vector.broadcast %cst_108 : f32 to vector<16x16xf32>
    %c112_i32_109 = arith.constant 112 : i32
    %720 = arith.addi %c112_i32_109, %524 : i32
    %721 = arith.index_cast %720 : i32 to index
    %722 = memref.load %arg2[%721] : memref<256xf32, #tpu.memory_space<smem>>
    %723 = vector.broadcast %722 : f32 to vector<16x16xf32>
    %724 = arith.mulf %723, %4 : vector<16x16xf32>
    %725 = arith.addf %719, %724 : vector<16x16xf32>
    %c116_i32_110 = arith.constant 116 : i32
    %726 = arith.addi %c116_i32_110, %524 : i32
    %727 = arith.index_cast %726 : i32 to index
    %728 = memref.load %arg2[%727] : memref<256xf32, #tpu.memory_space<smem>>
    %729 = vector.broadcast %728 : f32 to vector<16x16xf32>
    %730 = arith.mulf %729, %6 : vector<16x16xf32>
    %731 = arith.addf %725, %730 : vector<16x16xf32>
    %c120_i32_111 = arith.constant 120 : i32
    %732 = arith.addi %c120_i32_111, %524 : i32
    %733 = arith.index_cast %732 : i32 to index
    %734 = memref.load %arg2[%733] : memref<256xf32, #tpu.memory_space<smem>>
    %735 = vector.broadcast %734 : f32 to vector<16x16xf32>
    %736 = arith.mulf %735, %8 : vector<16x16xf32>
    %737 = arith.addf %731, %736 : vector<16x16xf32>
    %c124_i32_112 = arith.constant 124 : i32
    %738 = arith.addi %c124_i32_112, %524 : i32
    %739 = arith.index_cast %738 : i32 to index
    %740 = memref.load %arg2[%739] : memref<256xf32, #tpu.memory_space<smem>>
    %741 = vector.broadcast %740 : f32 to vector<16x16xf32>
    %742 = arith.mulf %741, %10 : vector<16x16xf32>
    %743 = arith.addf %737, %742 : vector<16x16xf32>
    %cst_113 = arith.constant dense<0.000000e+00> : vector<16x30xf32>
    %744 = tpu.matmul %743, %40, %cst_113 {dimension_numbers = #tpu.dot_dimension_numbers<[1], [0], [0], [1], [0, 0, 1, 1], [], []>} : vector<16x16xf32>, vector<16x30xf32>, vector<16x30xf32> -> vector<16x30xf32>
    %745 = arith.addf %718, %744 : vector<16x30xf32>
    %cst_114 = arith.constant dense<0.000000e+00> : vector<30x30xf32>
    %746 = tpu.matmul %56, %745, %cst_114 {dimension_numbers = #tpu.dot_dimension_numbers<[1], [0], [0], [1], [0, 0, 1, 1], [], []>} : vector<30x16xf32>, vector<16x30xf32>, vector<30x30xf32> -> vector<30x30xf32>
    %747 = arith.addf %636, %746 : vector<30x30xf32>
    %cst_115 = arith.constant 0.000000e+00 : f32
    %748 = vector.broadcast %cst_115 : f32 to vector<16x30xf32>
    %cst_116 = arith.constant 0.000000e+00 : f32
    %749 = vector.broadcast %cst_116 : f32 to vector<16x16xf32>
    %c128_i32_117 = arith.constant 128 : i32
    %750 = arith.addi %c128_i32_117, %524 : i32
    %751 = arith.index_cast %750 : i32 to index
    %752 = memref.load %arg2[%751] : memref<256xf32, #tpu.memory_space<smem>>
    %753 = vector.broadcast %752 : f32 to vector<16x16xf32>
    %754 = arith.mulf %753, %4 : vector<16x16xf32>
    %755 = arith.addf %749, %754 : vector<16x16xf32>
    %c132_i32_118 = arith.constant 132 : i32
    %756 = arith.addi %c132_i32_118, %524 : i32
    %757 = arith.index_cast %756 : i32 to index
    %758 = memref.load %arg2[%757] : memref<256xf32, #tpu.memory_space<smem>>
    %759 = vector.broadcast %758 : f32 to vector<16x16xf32>
    %760 = arith.mulf %759, %6 : vector<16x16xf32>
    %761 = arith.addf %755, %760 : vector<16x16xf32>
    %c136_i32_119 = arith.constant 136 : i32
    %762 = arith.addi %c136_i32_119, %524 : i32
    %763 = arith.index_cast %762 : i32 to index
    %764 = memref.load %arg2[%763] : memref<256xf32, #tpu.memory_space<smem>>
    %765 = vector.broadcast %764 : f32 to vector<16x16xf32>
    %766 = arith.mulf %765, %8 : vector<16x16xf32>
    %767 = arith.addf %761, %766 : vector<16x16xf32>
    %c140_i32_120 = arith.constant 140 : i32
    %768 = arith.addi %c140_i32_120, %524 : i32
    %769 = arith.index_cast %768 : i32 to index
    %770 = memref.load %arg2[%769] : memref<256xf32, #tpu.memory_space<smem>>
    %771 = vector.broadcast %770 : f32 to vector<16x16xf32>
    %772 = arith.mulf %771, %10 : vector<16x16xf32>
    %773 = arith.addf %767, %772 : vector<16x16xf32>
    %cst_121 = arith.constant dense<0.000000e+00> : vector<16x30xf32>
    %774 = tpu.matmul %773, %19, %cst_121 {dimension_numbers = #tpu.dot_dimension_numbers<[1], [0], [0], [1], [0, 0, 1, 1], [], []>} : vector<16x16xf32>, vector<16x30xf32>, vector<16x30xf32> -> vector<16x30xf32>
    %775 = arith.addf %748, %774 : vector<16x30xf32>
    %cst_122 = arith.constant 0.000000e+00 : f32
    %776 = vector.broadcast %cst_122 : f32 to vector<16x16xf32>
    %c144_i32_123 = arith.constant 144 : i32
    %777 = arith.addi %c144_i32_123, %524 : i32
    %778 = arith.index_cast %777 : i32 to index
    %779 = memref.load %arg2[%778] : memref<256xf32, #tpu.memory_space<smem>>
    %780 = vector.broadcast %779 : f32 to vector<16x16xf32>
    %781 = arith.mulf %780, %4 : vector<16x16xf32>
    %782 = arith.addf %776, %781 : vector<16x16xf32>
    %c148_i32_124 = arith.constant 148 : i32
    %783 = arith.addi %c148_i32_124, %524 : i32
    %784 = arith.index_cast %783 : i32 to index
    %785 = memref.load %arg2[%784] : memref<256xf32, #tpu.memory_space<smem>>
    %786 = vector.broadcast %785 : f32 to vector<16x16xf32>
    %787 = arith.mulf %786, %6 : vector<16x16xf32>
    %788 = arith.addf %782, %787 : vector<16x16xf32>
    %c152_i32_125 = arith.constant 152 : i32
    %789 = arith.addi %c152_i32_125, %524 : i32
    %790 = arith.index_cast %789 : i32 to index
    %791 = memref.load %arg2[%790] : memref<256xf32, #tpu.memory_space<smem>>
    %792 = vector.broadcast %791 : f32 to vector<16x16xf32>
    %793 = arith.mulf %792, %8 : vector<16x16xf32>
    %794 = arith.addf %788, %793 : vector<16x16xf32>
    %c156_i32_126 = arith.constant 156 : i32
    %795 = arith.addi %c156_i32_126, %524 : i32
    %796 = arith.index_cast %795 : i32 to index
    %797 = memref.load %arg2[%796] : memref<256xf32, #tpu.memory_space<smem>>
    %798 = vector.broadcast %797 : f32 to vector<16x16xf32>
    %799 = arith.mulf %798, %10 : vector<16x16xf32>
    %800 = arith.addf %794, %799 : vector<16x16xf32>
    %cst_127 = arith.constant dense<0.000000e+00> : vector<16x30xf32>
    %801 = tpu.matmul %800, %26, %cst_127 {dimension_numbers = #tpu.dot_dimension_numbers<[1], [0], [0], [1], [0, 0, 1, 1], [], []>} : vector<16x16xf32>, vector<16x30xf32>, vector<16x30xf32> -> vector<16x30xf32>
    %802 = arith.addf %775, %801 : vector<16x30xf32>
    %cst_128 = arith.constant 0.000000e+00 : f32
    %803 = vector.broadcast %cst_128 : f32 to vector<16x16xf32>
    %c192_i32_129 = arith.constant 192 : i32
    %804 = arith.addi %c192_i32_129, %524 : i32
    %805 = arith.index_cast %804 : i32 to index
    %806 = memref.load %arg2[%805] : memref<256xf32, #tpu.memory_space<smem>>
    %807 = vector.broadcast %806 : f32 to vector<16x16xf32>
    %808 = arith.mulf %807, %4 : vector<16x16xf32>
    %809 = arith.addf %803, %808 : vector<16x16xf32>
    %c196_i32_130 = arith.constant 196 : i32
    %810 = arith.addi %c196_i32_130, %524 : i32
    %811 = arith.index_cast %810 : i32 to index
    %812 = memref.load %arg2[%811] : memref<256xf32, #tpu.memory_space<smem>>
    %813 = vector.broadcast %812 : f32 to vector<16x16xf32>
    %814 = arith.mulf %813, %6 : vector<16x16xf32>
    %815 = arith.addf %809, %814 : vector<16x16xf32>
    %c200_i32_131 = arith.constant 200 : i32
    %816 = arith.addi %c200_i32_131, %524 : i32
    %817 = arith.index_cast %816 : i32 to index
    %818 = memref.load %arg2[%817] : memref<256xf32, #tpu.memory_space<smem>>
    %819 = vector.broadcast %818 : f32 to vector<16x16xf32>
    %820 = arith.mulf %819, %8 : vector<16x16xf32>
    %821 = arith.addf %815, %820 : vector<16x16xf32>
    %c204_i32_132 = arith.constant 204 : i32
    %822 = arith.addi %c204_i32_132, %524 : i32
    %823 = arith.index_cast %822 : i32 to index
    %824 = memref.load %arg2[%823] : memref<256xf32, #tpu.memory_space<smem>>
    %825 = vector.broadcast %824 : f32 to vector<16x16xf32>
    %826 = arith.mulf %825, %10 : vector<16x16xf32>
    %827 = arith.addf %821, %826 : vector<16x16xf32>
    %cst_133 = arith.constant dense<0.000000e+00> : vector<16x30xf32>
    %828 = tpu.matmul %827, %33, %cst_133 {dimension_numbers = #tpu.dot_dimension_numbers<[1], [0], [0], [1], [0, 0, 1, 1], [], []>} : vector<16x16xf32>, vector<16x30xf32>, vector<16x30xf32> -> vector<16x30xf32>
    %829 = arith.addf %802, %828 : vector<16x30xf32>
    %cst_134 = arith.constant 0.000000e+00 : f32
    %830 = vector.broadcast %cst_134 : f32 to vector<16x16xf32>
    %c208_i32_135 = arith.constant 208 : i32
    %831 = arith.addi %c208_i32_135, %524 : i32
    %832 = arith.index_cast %831 : i32 to index
    %833 = memref.load %arg2[%832] : memref<256xf32, #tpu.memory_space<smem>>
    %834 = vector.broadcast %833 : f32 to vector<16x16xf32>
    %835 = arith.mulf %834, %4 : vector<16x16xf32>
    %836 = arith.addf %830, %835 : vector<16x16xf32>
    %c212_i32_136 = arith.constant 212 : i32
    %837 = arith.addi %c212_i32_136, %524 : i32
    %838 = arith.index_cast %837 : i32 to index
    %839 = memref.load %arg2[%838] : memref<256xf32, #tpu.memory_space<smem>>
    %840 = vector.broadcast %839 : f32 to vector<16x16xf32>
    %841 = arith.mulf %840, %6 : vector<16x16xf32>
    %842 = arith.addf %836, %841 : vector<16x16xf32>
    %c216_i32_137 = arith.constant 216 : i32
    %843 = arith.addi %c216_i32_137, %524 : i32
    %844 = arith.index_cast %843 : i32 to index
    %845 = memref.load %arg2[%844] : memref<256xf32, #tpu.memory_space<smem>>
    %846 = vector.broadcast %845 : f32 to vector<16x16xf32>
    %847 = arith.mulf %846, %8 : vector<16x16xf32>
    %848 = arith.addf %842, %847 : vector<16x16xf32>
    %c220_i32_138 = arith.constant 220 : i32
    %849 = arith.addi %c220_i32_138, %524 : i32
    %850 = arith.index_cast %849 : i32 to index
    %851 = memref.load %arg2[%850] : memref<256xf32, #tpu.memory_space<smem>>
    %852 = vector.broadcast %851 : f32 to vector<16x16xf32>
    %853 = arith.mulf %852, %10 : vector<16x16xf32>
    %854 = arith.addf %848, %853 : vector<16x16xf32>
    %cst_139 = arith.constant dense<0.000000e+00> : vector<16x30xf32>
    %855 = tpu.matmul %854, %40, %cst_139 {dimension_numbers = #tpu.dot_dimension_numbers<[1], [0], [0], [1], [0, 0, 1, 1], [], []>} : vector<16x16xf32>, vector<16x30xf32>, vector<16x30xf32> -> vector<16x30xf32>
    %856 = arith.addf %829, %855 : vector<16x30xf32>
    %cst_140 = arith.constant dense<0.000000e+00> : vector<30x30xf32>
    %857 = tpu.matmul %63, %856, %cst_140 {dimension_numbers = #tpu.dot_dimension_numbers<[1], [0], [0], [1], [0, 0, 1, 1], [], []>} : vector<30x16xf32>, vector<16x30xf32>, vector<30x30xf32> -> vector<30x30xf32>
    %858 = arith.addf %747, %857 : vector<30x30xf32>
    %cst_141 = arith.constant 0.000000e+00 : f32
    %859 = vector.broadcast %cst_141 : f32 to vector<16x30xf32>
    %cst_142 = arith.constant 0.000000e+00 : f32
    %860 = vector.broadcast %cst_142 : f32 to vector<16x16xf32>
    %c160_i32_143 = arith.constant 160 : i32
    %861 = arith.addi %c160_i32_143, %524 : i32
    %862 = arith.index_cast %861 : i32 to index
    %863 = memref.load %arg2[%862] : memref<256xf32, #tpu.memory_space<smem>>
    %864 = vector.broadcast %863 : f32 to vector<16x16xf32>
    %865 = arith.mulf %864, %4 : vector<16x16xf32>
    %866 = arith.addf %860, %865 : vector<16x16xf32>
    %c164_i32_144 = arith.constant 164 : i32
    %867 = arith.addi %c164_i32_144, %524 : i32
    %868 = arith.index_cast %867 : i32 to index
    %869 = memref.load %arg2[%868] : memref<256xf32, #tpu.memory_space<smem>>
    %870 = vector.broadcast %869 : f32 to vector<16x16xf32>
    %871 = arith.mulf %870, %6 : vector<16x16xf32>
    %872 = arith.addf %866, %871 : vector<16x16xf32>
    %c168_i32_145 = arith.constant 168 : i32
    %873 = arith.addi %c168_i32_145, %524 : i32
    %874 = arith.index_cast %873 : i32 to index
    %875 = memref.load %arg2[%874] : memref<256xf32, #tpu.memory_space<smem>>
    %876 = vector.broadcast %875 : f32 to vector<16x16xf32>
    %877 = arith.mulf %876, %8 : vector<16x16xf32>
    %878 = arith.addf %872, %877 : vector<16x16xf32>
    %c172_i32_146 = arith.constant 172 : i32
    %879 = arith.addi %c172_i32_146, %524 : i32
    %880 = arith.index_cast %879 : i32 to index
    %881 = memref.load %arg2[%880] : memref<256xf32, #tpu.memory_space<smem>>
    %882 = vector.broadcast %881 : f32 to vector<16x16xf32>
    %883 = arith.mulf %882, %10 : vector<16x16xf32>
    %884 = arith.addf %878, %883 : vector<16x16xf32>
    %cst_147 = arith.constant dense<0.000000e+00> : vector<16x30xf32>
    %885 = tpu.matmul %884, %19, %cst_147 {dimension_numbers = #tpu.dot_dimension_numbers<[1], [0], [0], [1], [0, 0, 1, 1], [], []>} : vector<16x16xf32>, vector<16x30xf32>, vector<16x30xf32> -> vector<16x30xf32>
    %886 = arith.addf %859, %885 : vector<16x30xf32>
    %cst_148 = arith.constant 0.000000e+00 : f32
    %887 = vector.broadcast %cst_148 : f32 to vector<16x16xf32>
    %c176_i32_149 = arith.constant 176 : i32
    %888 = arith.addi %c176_i32_149, %524 : i32
    %889 = arith.index_cast %888 : i32 to index
    %890 = memref.load %arg2[%889] : memref<256xf32, #tpu.memory_space<smem>>
    %891 = vector.broadcast %890 : f32 to vector<16x16xf32>
    %892 = arith.mulf %891, %4 : vector<16x16xf32>
    %893 = arith.addf %887, %892 : vector<16x16xf32>
    %c180_i32_150 = arith.constant 180 : i32
    %894 = arith.addi %c180_i32_150, %524 : i32
    %895 = arith.index_cast %894 : i32 to index
    %896 = memref.load %arg2[%895] : memref<256xf32, #tpu.memory_space<smem>>
    %897 = vector.broadcast %896 : f32 to vector<16x16xf32>
    %898 = arith.mulf %897, %6 : vector<16x16xf32>
    %899 = arith.addf %893, %898 : vector<16x16xf32>
    %c184_i32_151 = arith.constant 184 : i32
    %900 = arith.addi %c184_i32_151, %524 : i32
    %901 = arith.index_cast %900 : i32 to index
    %902 = memref.load %arg2[%901] : memref<256xf32, #tpu.memory_space<smem>>
    %903 = vector.broadcast %902 : f32 to vector<16x16xf32>
    %904 = arith.mulf %903, %8 : vector<16x16xf32>
    %905 = arith.addf %899, %904 : vector<16x16xf32>
    %c188_i32_152 = arith.constant 188 : i32
    %906 = arith.addi %c188_i32_152, %524 : i32
    %907 = arith.index_cast %906 : i32 to index
    %908 = memref.load %arg2[%907] : memref<256xf32, #tpu.memory_space<smem>>
    %909 = vector.broadcast %908 : f32 to vector<16x16xf32>
    %910 = arith.mulf %909, %10 : vector<16x16xf32>
    %911 = arith.addf %905, %910 : vector<16x16xf32>
    %cst_153 = arith.constant dense<0.000000e+00> : vector<16x30xf32>
    %912 = tpu.matmul %911, %26, %cst_153 {dimension_numbers = #tpu.dot_dimension_numbers<[1], [0], [0], [1], [0, 0, 1, 1], [], []>} : vector<16x16xf32>, vector<16x30xf32>, vector<16x30xf32> -> vector<16x30xf32>
    %913 = arith.addf %886, %912 : vector<16x30xf32>
    %cst_154 = arith.constant 0.000000e+00 : f32
    %914 = vector.broadcast %cst_154 : f32 to vector<16x16xf32>
    %c224_i32_155 = arith.constant 224 : i32
    %915 = arith.addi %c224_i32_155, %524 : i32
    %916 = arith.index_cast %915 : i32 to index
    %917 = memref.load %arg2[%916] : memref<256xf32, #tpu.memory_space<smem>>
    %918 = vector.broadcast %917 : f32 to vector<16x16xf32>
    %919 = arith.mulf %918, %4 : vector<16x16xf32>
    %920 = arith.addf %914, %919 : vector<16x16xf32>
    %c228_i32_156 = arith.constant 228 : i32
    %921 = arith.addi %c228_i32_156, %524 : i32
    %922 = arith.index_cast %921 : i32 to index
    %923 = memref.load %arg2[%922] : memref<256xf32, #tpu.memory_space<smem>>
    %924 = vector.broadcast %923 : f32 to vector<16x16xf32>
    %925 = arith.mulf %924, %6 : vector<16x16xf32>
    %926 = arith.addf %920, %925 : vector<16x16xf32>
    %c232_i32_157 = arith.constant 232 : i32
    %927 = arith.addi %c232_i32_157, %524 : i32
    %928 = arith.index_cast %927 : i32 to index
    %929 = memref.load %arg2[%928] : memref<256xf32, #tpu.memory_space<smem>>
    %930 = vector.broadcast %929 : f32 to vector<16x16xf32>
    %931 = arith.mulf %930, %8 : vector<16x16xf32>
    %932 = arith.addf %926, %931 : vector<16x16xf32>
    %c236_i32_158 = arith.constant 236 : i32
    %933 = arith.addi %c236_i32_158, %524 : i32
    %934 = arith.index_cast %933 : i32 to index
    %935 = memref.load %arg2[%934] : memref<256xf32, #tpu.memory_space<smem>>
    %936 = vector.broadcast %935 : f32 to vector<16x16xf32>
    %937 = arith.mulf %936, %10 : vector<16x16xf32>
    %938 = arith.addf %932, %937 : vector<16x16xf32>
    %cst_159 = arith.constant dense<0.000000e+00> : vector<16x30xf32>
    %939 = tpu.matmul %938, %33, %cst_159 {dimension_numbers = #tpu.dot_dimension_numbers<[1], [0], [0], [1], [0, 0, 1, 1], [], []>} : vector<16x16xf32>, vector<16x30xf32>, vector<16x30xf32> -> vector<16x30xf32>
    %940 = arith.addf %913, %939 : vector<16x30xf32>
    %cst_160 = arith.constant 0.000000e+00 : f32
    %941 = vector.broadcast %cst_160 : f32 to vector<16x16xf32>
    %c240_i32_161 = arith.constant 240 : i32
    %942 = arith.addi %c240_i32_161, %524 : i32
    %943 = arith.index_cast %942 : i32 to index
    %944 = memref.load %arg2[%943] : memref<256xf32, #tpu.memory_space<smem>>
    %945 = vector.broadcast %944 : f32 to vector<16x16xf32>
    %946 = arith.mulf %945, %4 : vector<16x16xf32>
    %947 = arith.addf %941, %946 : vector<16x16xf32>
    %c244_i32_162 = arith.constant 244 : i32
    %948 = arith.addi %c244_i32_162, %524 : i32
    %949 = arith.index_cast %948 : i32 to index
    %950 = memref.load %arg2[%949] : memref<256xf32, #tpu.memory_space<smem>>
    %951 = vector.broadcast %950 : f32 to vector<16x16xf32>
    %952 = arith.mulf %951, %6 : vector<16x16xf32>
    %953 = arith.addf %947, %952 : vector<16x16xf32>
    %c248_i32_163 = arith.constant 248 : i32
    %954 = arith.addi %c248_i32_163, %524 : i32
    %955 = arith.index_cast %954 : i32 to index
    %956 = memref.load %arg2[%955] : memref<256xf32, #tpu.memory_space<smem>>
    %957 = vector.broadcast %956 : f32 to vector<16x16xf32>
    %958 = arith.mulf %957, %8 : vector<16x16xf32>
    %959 = arith.addf %953, %958 : vector<16x16xf32>
    %c252_i32_164 = arith.constant 252 : i32
    %960 = arith.addi %c252_i32_164, %524 : i32
    %961 = arith.index_cast %960 : i32 to index
    %962 = memref.load %arg2[%961] : memref<256xf32, #tpu.memory_space<smem>>
    %963 = vector.broadcast %962 : f32 to vector<16x16xf32>
    %964 = arith.mulf %963, %10 : vector<16x16xf32>
    %965 = arith.addf %959, %964 : vector<16x16xf32>
    %cst_165 = arith.constant dense<0.000000e+00> : vector<16x30xf32>
    %966 = tpu.matmul %965, %40, %cst_165 {dimension_numbers = #tpu.dot_dimension_numbers<[1], [0], [0], [1], [0, 0, 1, 1], [], []>} : vector<16x16xf32>, vector<16x30xf32>, vector<16x30xf32> -> vector<16x30xf32>
    %967 = arith.addf %940, %966 : vector<16x30xf32>
    %cst_166 = arith.constant dense<0.000000e+00> : vector<30x30xf32>
    %968 = tpu.matmul %70, %967, %cst_166 {dimension_numbers = #tpu.dot_dimension_numbers<[1], [0], [0], [1], [0, 0, 1, 1], [], []>} : vector<30x16xf32>, vector<16x30xf32>, vector<30x30xf32> -> vector<30x30xf32>
    %969 = arith.addf %858, %968 : vector<30x30xf32>
    %970 = arith.index_cast %524 : i32 to index
    %971 = memref.load %arg3[%970] : memref<4xf32, #tpu.memory_space<smem>>
    %972 = vector.broadcast %971 : f32 to vector<30x30xf32>
    %973 = arith.addf %969, %972 : vector<30x30xf32>
    %c0_167 = arith.constant 0 : index
    %c1 = arith.constant 1 : index
    %c0_168 = arith.constant 0 : index
    %c0_169 = arith.constant 0 : index
    %974 = vector.load %arg5[%c0_167, %c1, %c0_168, %c0_169] : memref<1x2x30x30xf32, #tpu.memory_space<vmem>>, vector<1x1x30x30xf32>
    %975 = vector.shape_cast %974 : vector<1x1x30x30xf32> to vector<30x30xf32>
    %976 = vector.shape_cast %973 : vector<30x30xf32> to vector<1x1x30x30xf32>
    tpu.vector_store %arg5[%c0_167, %c1, %c0_168, %c0_169], %976 {strides = array<i32>} : memref<1x2x30x30xf32, #tpu.memory_space<vmem>>, vector<1x1x30x30xf32>,
    return
  }
  func.func @transform_0(%arg0: i32, %arg1: i32) -> i32 {
    %c0_i32 = arith.constant 0 : i32
    %c0_i32_0 = arith.constant 0 : i32
    return %c0_i32 : i32
  }
  func.func @transform_1(%arg0: i32, %arg1: i32) -> i32 {
    %c0_i32 = arith.constant 0 : i32
    %c0_i32_0 = arith.constant 0 : i32
    return %c0_i32 : i32
  }
  func.func @transform_2(%arg0: i32, %arg1: i32) -> (i32, i32, i32, i32) {
    %c0_i32 = arith.constant 0 : i32
    %c0_i32_0 = arith.constant 0 : i32
    %c0_i32_1 = arith.constant 0 : i32
    %c0_i32_2 = arith.constant 0 : i32
    return %arg0, %c0_i32, %c0_i32_0, %c0_i32_1 : i32, i32, i32, i32
  }
  func.func @transform_3(%arg0: i32, %arg1: i32) -> (i32, i32, i32, i32) {
    %c0_i32 = arith.constant 0 : i32
    %c0_i32_0 = arith.constant 0 : i32
    %c0_i32_1 = arith.constant 0 : i32
    return %arg0, %arg1, %c0_i32, %c0_i32_0 : i32, i32, i32, i32
  }
}

</mosaic_0001>

<llo_original>
// kernel: tpu_custom_call.1
$region0: #{tpu_custom_call.1}
  #allocation0 [shape = 'u32[]', space=smem, size = 0x4, offset = 0x4, fixed_abs, tag = 'smem constant byte address 0x4 - core index']
  #allocation1 [shape = 'u32[72,128]{1,0:T(1,128)}', space=vmem, size = 0x9000, scoped, tag = 'internal scratch']
  %s0 = inlined_call_operand.hbm [shape: f32[256], index: 0, kind: input, shape index: {}]
  %s1 = inlined_call_operand.hbm [shape: f32[4], index: 1, kind: input, shape index: {}]
  %s2 = inlined_call_operand.hbm [shape: f32[2,4,16,16], index: 2, kind: input, shape index: {}]
  %s3 = inlined_call_operand.vmem [shape: f32[2,4,30,30], index: 3, kind: output, shape index: {}]
  %s4 = sld [smem:[#allocation0]]
  $region57: #{tpu_custom_call.1} parent=0
    _
  %s6 = ssub.s32 1, %s4
  %s7 = scalar_select 0, %s6, %s4
  $region1: #{tpu_custom_call.1} parent=0
    #allocation2 [shape = 'u8[1024]{0}', space=smem, size = 0x400, scoped, tag = 'input window, operand 0, single buffered']
    #allocation3 [shape = 's32[2]{0}', space=sflag, size = 0x8, scoped, tag = 'scoped memory for tpu_custom_call.1']
    #allocation4 [shape = 's32[2]{0}', space=sflag, size = 0x8, scoped, tag = 'scoped memory for tpu_custom_call.1']
    #allocation5 [shape = 'u8[512]{0}', space=smem, size = 0x200, scoped, tag = 'input window, operand 1, single buffered']
    #allocation6 [shape = 's32[1]{0}', space=sflag, size = 0x4, scoped, tag = 'scoped memory for tpu_custom_call.1']
    #allocation7 [shape = 'u8[65536]{0}', space=vmem, size = 0x10000, scoped, tag = 'input window, operand 2']
    %8 = vsyncpa [#allocation4], 0
    %9 = vsyncpa [#allocation6], 0
    %10 = vsyncpa [#allocation3], 0
    %s11 = scalar_lea.sflag [#allocation3], 1
    %12 = vsyncpa %s11, 0
    loop: start=0, step=1, limit=6
    $region2: #{tpu_custom_call.1} parent=1 // loop_pre_header
      _
    $region3: #{tpu_custom_call.1} parent=1 // loop_header
      %s14 = sphi 0, %s18
      %p15 = scmp.ge.s32.totalorder %s14, 6
      %s21 = sphi 0, %s33
      %s22 = sphi 0, %s29
      %s23 = sphi 0, %s21
      %s24 = sphi 0, %s22
      %s25 = sphi 0, %s23
      %s26 = sphi 0, %s24
      %s34 = sphi 0, %s34
      %s36 = sphi 0, %s34
      %s37 = sphi 0, %s36
      %s51 = sphi 0, %s37
      %s55 = sphi 0, %s55
      %s57 = sphi 0, %s55
      %s58 = sphi 0, %s57
      %s72 = sphi 0, %s58
      %s78 = sphi 0, %s80
      %s81 = sphi 0, %s78
      %s82 = sphi 0, %s81
      %s98 = sphi 0, %s82
      %s106 = sphi 0, %s108
      %s109 = sphi 0, %s106
      %s110 = sphi 0, %s109
      %s126 = sphi 0, %s110
    $region4: #{tpu_custom_call.1} parent=1 // loop_header_branch
      %17 = sbr.rel (%p15) target = $region8
    $region5: #{tpu_custom_call.1} parent=1 // loop_body
      %s19 = ssub.s32 %s14, 1
      %s20 = ssub.s32 %s14, 2
      %s27 = sadd.s32 1, %s22
      %p28 = scmp.ge.s32.totalorder %s27, 2
      %s29 = scalar_select %p28, 0, %s27
      %s30 = sadd.s32 1, %s21
      %s31 = scalar_select %p28, %s30, %s21
      %p32 = scmp.ge.s32.totalorder %s31, 2
      %s33 = scalar_select %p32, 0, %s31
      %s35 = sadd.s32 %s34, 1
      %p38 = scmp.eq.s32.totalorder %s14, 3
      %p39 = scmp.ne.s32.totalorder %s34, %s36
      %p40 = scmp.eq.s32.totalorder %s14, 0
      %p41 = por %p39, %p40
      %p42 = scmp.ne.s32.totalorder %s34, %s36
      %p43 = scmp.eq.s32.totalorder %s19, 3
      %p44 = por %p42, %p43
      %p45 = scmp.ne.s32.totalorder %s36, %s37
      %p46 = scmp.eq.s32.totalorder %s19, 0
      %p47 = por %p45, %p46
      %p48 = scmp.ne.s32.totalorder %s36, %s37
      %p49 = scmp.eq.s32.totalorder %s20, 3
      %p50 = por %p48, %p49
      %p52 = scmp.ne.s32.totalorder %s37, %s51
      %p53 = scmp.eq.s32.totalorder %s20, 0
      %p54 = por %p52, %p53
      %s56 = sadd.s32 %s55, 1
      %p59 = scmp.eq.s32.totalorder %s14, 3
      %p60 = scmp.ne.s32.totalorder %s55, %s57
      %p61 = scmp.eq.s32.totalorder %s14, 0
      %p62 = por %p60, %p61
      %p63 = scmp.ne.s32.totalorder %s55, %s57
      %p64 = scmp.eq.s32.totalorder %s19, 3
      %p65 = por %p63, %p64
      %p66 = scmp.ne.s32.totalorder %s57, %s58
      %p67 = scmp.eq.s32.totalorder %s19, 0
      %p68 = por %p66, %p67
      %p69 = scmp.ne.s32.totalorder %s57, %s58
      %p70 = scmp.eq.s32.totalorder %s20, 3
      %p71 = por %p69, %p70
      %p73 = scmp.ne.s32.totalorder %s58, %s72
      %p74 = scmp.eq.s32.totalorder %s20, 0
      %p75 = por %p73, %p74
      %s76 = ssub.s32 %s21, %s33
      %p77 = scmp.eq.s32.totalorder %s76, 0
      %s79 = sadd.s32 %s78, 1
      %s80 = scalar_select %p77, %s78, %s79
      %p83 = pneg %p77
      %p84 = scmp.eq.s32.totalorder %s14, 3
      %p85 = por %p83, %p84
      %p86 = scmp.ne.s32.totalorder %s78, %s81
      %p87 = scmp.eq.s32.totalorder %s14, 0
      %p88 = por %p86, %p87
      %p89 = scmp.ne.s32.totalorder %s78, %s81
      %p90 = scmp.eq.s32.totalorder %s19, 3
      %p91 = por %p89, %p90
      %p92 = scmp.ne.s32.totalorder %s81, %s82
      %p93 = scmp.eq.s32.totalorder %s19, 0
      %p94 = por %p92, %p93
      %p95 = scmp.ne.s32.totalorder %s81, %s82
      %p96 = scmp.eq.s32.totalorder %s20, 3
      %p97 = por %p95, %p96
      %p99 = scmp.ne.s32.totalorder %s82, %s98
      %p100 = scmp.eq.s32.totalorder %s20, 0
      %p101 = por %p99, %p100
      %s102 = ssub.s32 %s21, %s33
      %s103 = ssub.s32 %s22, %s29
      %s104 = sor.u32 %s102, %s103
      %p105 = scmp.eq.s32.totalorder %s104, 0
      %s107 = sadd.s32 %s106, 1
      %s108 = scalar_select %p105, %s106, %s107
      %p111 = pneg %p105
      %p112 = scmp.eq.s32.totalorder %s14, 3
      %p113 = por %p111, %p112
      %p114 = scmp.ne.s32.totalorder %s106, %s109
      %p115 = scmp.eq.s32.totalorder %s14, 0
      %p116 = por %p114, %p115
      %p117 = scmp.ne.s32.totalorder %s106, %s109
      %p118 = scmp.eq.s32.totalorder %s19, 3
      %p119 = por %p117, %p118
      %p120 = scmp.ne.s32.totalorder %s109, %s110
      %p121 = scmp.eq.s32.totalorder %s19, 0
      %p122 = por %p120, %p121
      %p123 = scmp.ne.s32.totalorder %s109, %s110
      %p124 = scmp.eq.s32.totalorder %s20, 3
      %p125 = por %p123, %p124
      %p127 = scmp.ne.s32.totalorder %s110, %s126
      %p128 = scmp.eq.s32.totalorder %s20, 0
      %p129 = por %p127, %p128
      %p130 = scmp.le.s32.totalorder 1, %s14
      %p131 = scmp.lt.s32.totalorder %s14, 5
      %p132 = pnand %p130, %p131
      %p133 = pneg %p132
      // Predicated region
      $region9: #{tpu_custom_call.1} parent=5 // pred_check
        _
      $region10: #{tpu_custom_call.1} parent=5 // pred_check_branch
        %135 = sbr.rel (%p132) target = $region12
      $region11: #{tpu_custom_call.1} parent=5 // pred_region
        %s136 = ssub.s32 %s14, 1
        // Predicated region
        $region13: #{tpu_custom_call.1} parent=11 // pred_check
          %p137 = pneg %p47
        $region14: #{tpu_custom_call.1} parent=11 // pred_check_branch
          %139 = sbr.rel (%p137) target = $region16
        $region15: #{tpu_custom_call.1} parent=11 // pred_region
          %141 = vsyncadd [#allocation4], 0
          %s143 = sshll.u32 %s0, 4
          %s144 = int_to_ptr.hbm [resolvable:$true] %s143
          %146 = dma.hbm_to_smem %s144, 32, [#allocation2], [#allocation4]
        $region16: #{tpu_custom_call.1} parent=11 // pred_fallthru
          _
        // Predicated region
        $region17: #{tpu_custom_call.1} parent=11 // pred_check
          %p147 = pneg %p68
        $region18: #{tpu_custom_call.1} parent=11 // pred_check_branch
          %149 = sbr.rel (%p147) target = $region20
        $region19: #{tpu_custom_call.1} parent=11 // pred_region
          %151 = vsyncadd [#allocation6], 0
          %s153 = sshll.u32 %s1, 4
          %s154 = int_to_ptr.hbm [resolvable:$true] %s153
          %156 = dma.hbm_to_smem %s154, 16, [#allocation5], [#allocation6]
        $region20: #{tpu_custom_call.1} parent=11 // pred_fallthru
          _
      $region12: #{tpu_custom_call.1} parent=5 // pred_fallthru
        _
      %p157 = scmp.lt.s32.totalorder %s14, 4
      // Predicated region
      $region21: #{tpu_custom_call.1} parent=5 // pred_check
        %p158 = pneg %p157
      $region22: #{tpu_custom_call.1} parent=5 // pred_check_branch
        %160 = sbr.rel (%p158) target = $region24
      $region23: #{tpu_custom_call.1} parent=5 // pred_region
        // Predicated region
        $region25: #{tpu_custom_call.1} parent=23 // pred_check
          %p161 = pneg %p88
        $region26: #{tpu_custom_call.1} parent=23 // pred_check_branch
          %163 = sbr.rel (%p161) target = $region28
        $region27: #{tpu_custom_call.1} parent=23 // pred_region
          %s164 = sand.u32 %s78, 1
          %s165 = scalar_lea.sflag [#allocation3], %s164
          %s166 = sand.u32 %s78, 1
          %s167 = smul.addr %s166, 64
          %s168 = scalar_lea.vmem [#allocation7], %s167
          %170 = vsyncadd %s165, 0
          %s171 = smul.addr %s21, 8
          %s172 = smul.addr %s171, 8
          %s173 = scalar_lea.hbm %s2, %s172
          %s174 = sshll.u32 %s173, 4
          %s175 = int_to_ptr.hbm [resolvable:$true] %s174
          %s176 = sshll.u32 %s168, 4
          %s177 = int_to_ptr.vmem [resolvable:$true] %s176
          %182 = dma.hbm_to_vmem [thread:$0]  %s175, 1024, %s177, %s165, 128, 128, 8
        $region28: #{tpu_custom_call.1} parent=23 // pred_fallthru
          _
      $region24: #{tpu_custom_call.1} parent=5 // pred_fallthru
        _
      %p183 = scmp.le.s32.totalorder 1, %s14
      %p184 = scmp.lt.s32.totalorder %s14, 5
      %p185 = pnand %p183, %p184
      %p186 = pneg %p185
      // Predicated region
      $region29: #{tpu_custom_call.1} parent=5 // pred_check
        _
      $region30: #{tpu_custom_call.1} parent=5 // pred_check_branch
        %188 = sbr.rel (%p185) target = $region32
      $region31: #{tpu_custom_call.1} parent=5 // pred_region
        %s189 = ssub.s32 %s14, 1
        // Predicated region
        $region33: #{tpu_custom_call.1} parent=31 // pred_check
          %p190 = pneg %p47
        $region34: #{tpu_custom_call.1} parent=31 // pred_check_branch
          %192 = sbr.rel (%p190) target = $region36
        $region35: #{tpu_custom_call.1} parent=31 // pred_region
          %194 = dma.done [#allocation4], 32
        $region36: #{tpu_custom_call.1} parent=31 // pred_fallthru
          _
        // Predicated region
        $region37: #{tpu_custom_call.1} parent=31 // pred_check
          %p195 = pneg %p68
        $region38: #{tpu_custom_call.1} parent=31 // pred_check_branch
          %197 = sbr.rel (%p195) target = $region40
        $region39: #{tpu_custom_call.1} parent=31 // pred_region
          %199 = dma.done [#allocation6], 16
        $region40: #{tpu_custom_call.1} parent=31 // pred_fallthru
          _
        %s200 = sand.u32 %s81, 1
        %s201 = scalar_lea.sflag [#allocation3], %s200
        %s202 = sand.u32 %s81, 1
        %s203 = smul.addr %s202, 64
        %s204 = scalar_lea.vmem [#allocation7], %s203
        // Predicated region
        $region41: #{tpu_custom_call.1} parent=31 // pred_check
          %p205 = pneg %p94
        $region42: #{tpu_custom_call.1} parent=31 // pred_check_branch
          %207 = sbr.rel (%p205) target = $region44
        $region43: #{tpu_custom_call.1} parent=31 // pred_region
          %209 = dma.done %s201, 1024
        $region44: #{tpu_custom_call.1} parent=31 // pred_fallthru
          _
        %210 = sfence
        %p211 = pneg %p47
        %p212 = pneg %p44
        %p213 = pneg %p68
        %p214 = pneg %p65
        %s215 = sand.u32 %s81, 1
        %s216 = scalar_lea.sflag [#allocation3], %s215
        %s217 = sand.u32 %s81, 1
        %s218 = smul.addr %s217, 64
        %s219 = scalar_lea.vmem [#allocation7], %s218
        %p220 = pneg %p94
        %p221 = pneg %p91
        %p222 = pneg %p122
        %p223 = pneg %p119
        %s224 = smul.u32 2, %s24
        %p225 = scmp.lt.s32.totalorder %s23, 1
        %s226 = scalar_select %p225, %s23, 1
        %p227 = scmp.lt.s32.totalorder %s224, 3
        %s228 = scalar_select %p227, %s224, 3
        %s229 = smul.addr %s228, 4
        %s230 = smul.addr %s226, 16
        %s231 = sadd.s32 %s229, %s230
        %s232 = smul.addr %s231, 8
        %s233 = scalar_lea.vmem %s3, %s232
        %s234 = smul.u32 2, %s24
        %p235 = scmp.lt.s32.totalorder %s23, 1
        %s236 = scalar_select %p235, %s23, 1
        %p237 = scmp.lt.s32.totalorder %s234, 3
        %s238 = scalar_select %p237, %s234, 3
        %s239 = smul.addr %s238, 4
        %s240 = smul.addr %s236, 16
        %s241 = sadd.s32 %s239, %s240
        %s242 = smul.addr %s241, 8
        %s243 = scalar_lea.vmem %s3, %s242
        %s244 = smul.u32 2, %s24
        %s245 = smul.u32 %s24, 2
        %v246 = vld [vmem:[%s204] sm:$0xff]
        %v247 = vld [vmem:[%s204 + $0x8] sm:$0xff]
        %v248 = vld [vmem:[%s204 + $0x10] sm:$0xff]
        %v249 = vld [vmem:[%s204 + $0x18] sm:$0xff]
        %v250 = vld [vmem:[%s204 + $0x20] sm:$0xff]
        %v251 = vld [vmem:[%s204 + $0x28] sm:$0xff]
        %v252 = vld [vmem:[%s204 + $0x30] sm:$0xff]
        %v253 = vld [vmem:[%s204 + $0x38] sm:$0xff]
        %v254 = vlaneseq
        %v255 = vshrl.u32 %v254, 7
        %v256 = vadd.s32 %v255, 8
        %v257 = vlaneseq
        %v258 = vand.u32 %v257, 127
        %v259 = vmul.u32 %v255, 2
        %v260 = vmul.u32 %v256, 2
        %vm261 = vcmp.eq.s32.totalorder %v258, %v259
        %vm262 = vcmp.eq.s32.totalorder %v258, %v260
        %v263 = vsel %vm261, 1, 0
        %v264 = vsel %vm262, 1, 0
        %v265 = vcvt.s32.f32 %v263
        %v266 = vcvt.s32.f32 %v264
        %v267 = vadd.s32 %v259, 4294967294
        %v268 = vadd.s32 %v260, 4294967294
        %vm269 = vcmp.eq.s32.totalorder %v258, %v267
        %vm270 = vcmp.eq.s32.totalorder %v258, %v268
        %v271 = vsel %vm269, 1, 0
        %v272 = vsel %vm270, 1, 0
        %v273 = vcvt.s32.f32 %v271
        %v274 = vcvt.s32.f32 %v272
        %v275 = vadd.s32 %v259, 1
        %v276 = vadd.s32 %v260, 1
        %vm277 = vcmp.eq.s32.totalorder %v258, %v275
        %vm278 = vcmp.eq.s32.totalorder %v258, %v276
        %v279 = vsel %vm277, 1, 0
        %v280 = vsel %vm278, 1, 0
        %v281 = vcvt.s32.f32 %v279
        %v282 = vcvt.s32.f32 %v280
        %v283 = vadd.s32 %v259, 4294967295
        %v284 = vadd.s32 %v260, 4294967295
        %vm285 = vcmp.eq.s32.totalorder %v258, %v283
        %vm286 = vcmp.eq.s32.totalorder %v258, %v284
        %v287 = vsel %vm285, 1, 0
        %v288 = vsel %vm286, 1, 0
        %v289 = vcvt.s32.f32 %v287
        %v290 = vcvt.s32.f32 %v288
        %v291 = vadd.s32 %v255, 16
        %v292 = vadd.s32 %v255, 24
        %v293 = vmul.u32 %v258, 2
        %vm294 = vcmp.eq.s32.totalorder %v255, %v293
        %vm295 = vcmp.eq.s32.totalorder %v256, %v293
        %vm296 = vcmp.eq.s32.totalorder %v291, %v293
        %vm297 = vcmp.eq.s32.totalorder %v292, %v293
        %v298 = vsel %vm294, 1, 0
        %v299 = vsel %vm295, 1, 0
        %v300 = vsel %vm296, 1, 0
        %v301 = vsel %vm297, 1, 0
        %v302 = vcvt.s32.f32 %v298
        %v303 = vcvt.s32.f32 %v299
        %v304 = vcvt.s32.f32 %v300
        %v305 = vcvt.s32.f32 %v301
        %v306 = vadd.s32 %v293, 4294967294
        %vm307 = vcmp.eq.s32.totalorder %v255, %v306
        %vm308 = vcmp.eq.s32.totalorder %v256, %v306
        %vm309 = vcmp.eq.s32.totalorder %v291, %v306
        %vm310 = vcmp.eq.s32.totalorder %v292, %v306
        %v311 = vsel %vm307, 1, 0
        %v312 = vsel %vm308, 1, 0
        %v313 = vsel %vm309, 1, 0
        %v314 = vsel %vm310, 1, 0
        %v315 = vcvt.s32.f32 %v311
        %v316 = vcvt.s32.f32 %v312
        %v317 = vcvt.s32.f32 %v313
        %v318 = vcvt.s32.f32 %v314
        %v319 = vadd.s32 %v293, 1
        %vm320 = vcmp.eq.s32.totalorder %v255, %v319
        %vm321 = vcmp.eq.s32.totalorder %v256, %v319
        %vm322 = vcmp.eq.s32.totalorder %v291, %v319
        %vm323 = vcmp.eq.s32.totalorder %v292, %v319
        %v324 = vsel %vm320, 1, 0
        %v325 = vsel %vm321, 1, 0
        %v326 = vsel %vm322, 1, 0
        %v327 = vsel %vm323, 1, 0
        %v328 = vcvt.s32.f32 %v324
        %v329 = vcvt.s32.f32 %v325
        %v330 = vcvt.s32.f32 %v326
        %v331 = vcvt.s32.f32 %v327
        %v332 = vadd.s32 %v293, 4294967295
        %vm333 = vcmp.eq.s32.totalorder %v255, %v332
        %vm334 = vcmp.eq.s32.totalorder %v256, %v332
        %vm335 = vcmp.eq.s32.totalorder %v291, %v332
        %vm336 = vcmp.eq.s32.totalorder %v292, %v332
        %v337 = vsel %vm333, 1, 0
        %v338 = vsel %vm334, 1, 0
        %v339 = vsel %vm335, 1, 0
        %v340 = vsel %vm336, 1, 0
        %v341 = vcvt.s32.f32 %v337
        %v342 = vcvt.s32.f32 %v338
        %v343 = vcvt.s32.f32 %v339
        %v344 = vcvt.s32.f32 %v340
        %s345 = sld [smem:[#allocation2 + %s245]]
        %v346 = vstv %s345
        %v347 = vmul.f32 %v346, %v246
        %v348 = vmul.f32 %v346, %v247
        %v349 = vadd.f32 %v347, 0.0
        %v350 = vadd.f32 %v348, 0.0
        %s351 = sadd.s32 %s245, 4
        %s352 = sld [smem:[#allocation2 + %s351]]
        %v353 = vstv %s352
        %v354 = vmul.f32 %v353, %v248
        %v355 = vmul.f32 %v353, %v249
        %v356 = vadd.f32 %v349, %v354
        %v357 = vadd.f32 %v350, %v355
        %s358 = sadd.s32 %s245, 8
        %s359 = sld [smem:[#allocation2 + %s358]]
        %v360 = vstv %s359
        %v361 = vmul.f32 %v360, %v250
        %v362 = vmul.f32 %v360, %v251
        %v363 = vadd.f32 %v356, %v361
        %v364 = vadd.f32 %v357, %v362
        %s365 = sadd.s32 %s245, 12
        %s366 = sld [smem:[#allocation2 + %s365]]
        %v367 = vstv %s366
        %v368 = vmul.f32 %v367, %v252
        %v369 = vmul.f32 %v367, %v253
        %v370 = vadd.f32 %v363, %v368
        %v371 = vadd.f32 %v364, %v369
        %s372 = sadd.s32 %s245, 16
        %s373 = sld [smem:[#allocation2 + %s372]]
        %v374 = vstv %s373
        %v375 = vmul.f32 %v374, %v246
        %v376 = vmul.f32 %v374, %v247
        %v377 = vadd.f32 %v375, 0.0
        %v378 = vadd.f32 %v376, 0.0
        %s379 = sadd.s32 %s245, 20
        %s380 = sld [smem:[#allocation2 + %s379]]
        %v381 = vstv %s380
        %v382 = vmul.f32 %v381, %v248
        %v383 = vmul.f32 %v381, %v249
        %v384 = vadd.f32 %v377, %v382
        %v385 = vadd.f32 %v378, %v383
        %s386 = sadd.s32 %s245, 24
        %s387 = sld [smem:[#allocation2 + %s386]]
        %v388 = vstv %s387
        %v389 = vmul.f32 %v388, %v250
        %v390 = vmul.f32 %v388, %v251
        %v391 = vadd.f32 %v384, %v389
        %v392 = vadd.f32 %v385, %v390
        %s393 = sadd.s32 %s245, 28
        %s394 = sld [smem:[#allocation2 + %s393]]
        %v395 = vstv %s394
        %v396 = vmul.f32 %v395, %v252
        %v397 = vmul.f32 %v395, %v253
        %v398 = vadd.f32 %v391, %v396
        %v399 = vadd.f32 %v392, %v397
        %vm400 = vcmask 130048
        %v402 = vsel %vm400, %v398, 0
        %v405 = vsel %vm400, %v399, 0
        %407 = vmatpush.msra.mxu0 0.0
        %408 = vmatpush.msra.mxu0 0.0
        %409 = vmatpush.msra.mxu0 0.0
        %410 = vmatpush.msra.mxu0 0.0
        %411 = vmatpush.msra.mxu0 0.0
        %412 = vmatpush.msra.mxu0 0.0
        %413 = vmatpush.msra.mxu0 0.0
        %414 = vmatpush.msra.mxu0 0.0
        %415 = vmatpush.msra.mxu0 0.0
        %416 = vmatpush.msra.mxu0 0.0
        %417 = vmatpush.msra.mxu0 0.0
        %418 = vmatpush.msra.mxu0 0.0
        %419 = vmatpush.msra.mxu0 0.0
        %420 = vmatpush.msra.mxu0 0.0
        %421 = vmatpush.msra.mxu0 %v274
        %422 = vmatpush.msra.mxu0 %v273
        %423 = vmatmul.f32.gmra.mxu0 %v402
        %v424 = vpop.f32.mrf.mxu0
        %v425 = vadd.f32 0.0, %v424
        %426 = vmatmul.f32.gmra.mxu0 %v405
        %v427 = vpop.f32.mrf.mxu0
        %v428 = vadd.f32 0.0, %v427
        %429 = vdwg.mxu0
        %v431 = vsel %vm400, %v370, 0
        %v434 = vsel %vm400, %v371, 0
        %436 = vmatpush.msra.mxu0 0.0
        %437 = vmatpush.msra.mxu0 0.0
        %438 = vmatpush.msra.mxu0 0.0
        %439 = vmatpush.msra.mxu0 0.0
        %440 = vmatpush.msra.mxu0 0.0
        %441 = vmatpush.msra.mxu0 0.0
        %442 = vmatpush.msra.mxu0 0.0
        %443 = vmatpush.msra.mxu0 0.0
        %444 = vmatpush.msra.mxu0 0.0
        %445 = vmatpush.msra.mxu0 0.0
        %446 = vmatpush.msra.mxu0 0.0
        %447 = vmatpush.msra.mxu0 0.0
        %448 = vmatpush.msra.mxu0 0.0
        %449 = vmatpush.msra.mxu0 0.0
        %450 = vmatpush.msra.mxu0 %v266
        %451 = vmatpush.msra.mxu0 %v265
        %452 = vmatmul.f32.gmra.mxu0 %v431
        %v453 = vpop.f32.mrf.mxu0
        %v454 = vadd.f32 %v425, %v453
        %455 = vmatmul.f32.gmra.mxu0 %v434
        %v456 = vpop.f32.mrf.mxu0
        %v457 = vadd.f32 %v428, %v456
        %458 = vdwg.mxu0
        %s459 = sadd.s32 %s245, 64
        %s460 = sld [smem:[#allocation2 + %s459]]
        %v461 = vstv %s460
        %v462 = vmul.f32 %v461, %v246
        %v463 = vmul.f32 %v461, %v247
        %v464 = vadd.f32 %v462, 0.0
        %v465 = vadd.f32 %v463, 0.0
        %s466 = sadd.s32 %s245, 68
        %s467 = sld [smem:[#allocation2 + %s466]]
        %v468 = vstv %s467
        %v469 = vmul.f32 %v468, %v248
        %v470 = vmul.f32 %v468, %v249
        %v471 = vadd.f32 %v464, %v469
        %v472 = vadd.f32 %v465, %v470
        %s473 = sadd.s32 %s245, 72
        %s474 = sld [smem:[#allocation2 + %s473]]
        %v475 = vstv %s474
        %v476 = vmul.f32 %v475, %v250
        %v477 = vmul.f32 %v475, %v251
        %v478 = vadd.f32 %v471, %v476
        %v479 = vadd.f32 %v472, %v477
        %s480 = sadd.s32 %s245, 76
        %s481 = sld [smem:[#allocation2 + %s480]]
        %v482 = vstv %s481
        %v483 = vmul.f32 %v482, %v252
        %v484 = vmul.f32 %v482, %v253
        %v485 = vadd.f32 %v478, %v483
        %v486 = vadd.f32 %v479, %v484
        %v488 = vsel %vm400, %v485, 0
        %v491 = vsel %vm400, %v486, 0
        %493 = vmatpush.msra.mxu0 0.0
        %494 = vmatpush.msra.mxu0 0.0
        %495 = vmatpush.msra.mxu0 0.0
        %496 = vmatpush.msra.mxu0 0.0
        %497 = vmatpush.msra.mxu0 0.0
        %498 = vmatpush.msra.mxu0 0.0
        %499 = vmatpush.msra.mxu0 0.0
        %500 = vmatpush.msra.mxu0 0.0
        %501 = vmatpush.msra.mxu0 0.0
        %502 = vmatpush.msra.mxu0 0.0
        %503 = vmatpush.msra.mxu0 0.0
        %504 = vmatpush.msra.mxu0 0.0
        %505 = vmatpush.msra.mxu0 0.0
        %506 = vmatpush.msra.mxu0 0.0
        %507 = vmatpush.msra.mxu0 %v282
        %508 = vmatpush.msra.mxu0 %v281
        %509 = vmatmul.f32.gmra.mxu0 %v488
        %v510 = vpop.f32.mrf.mxu0
        %v511 = vadd.f32 0.0, %v510
        %512 = vmatmul.f32.gmra.mxu0 %v491
        %v513 = vpop.f32.mrf.mxu0
        %v514 = vadd.f32 0.0, %v513
        %515 = vdwg.mxu0
        %v516 = vadd.f32 %v454, %v511
        %v517 = vadd.f32 %v457, %v514
        %s518 = sadd.s32 %s245, 80
        %s519 = sld [smem:[#allocation2 + %s518]]
        %v520 = vstv %s519
        %v521 = vmul.f32 %v520, %v246
        %v522 = vmul.f32 %v520, %v247
        %v523 = vadd.f32 %v521, 0.0
        %v524 = vadd.f32 %v522, 0.0
        %s525 = sadd.s32 %s245, 84
        %s526 = sld [smem:[#allocation2 + %s525]]
        %v527 = vstv %s526
        %v528 = vmul.f32 %v527, %v248
        %v529 = vmul.f32 %v527, %v249
        %v530 = vadd.f32 %v523, %v528
        %v531 = vadd.f32 %v524, %v529
        %s532 = sadd.s32 %s245, 88
        %s533 = sld [smem:[#allocation2 + %s532]]
        %v534 = vstv %s533
        %v535 = vmul.f32 %v534, %v250
        %v536 = vmul.f32 %v534, %v251
        %v537 = vadd.f32 %v530, %v535
        %v538 = vadd.f32 %v531, %v536
        %s539 = sadd.s32 %s245, 92
        %s540 = sld [smem:[#allocation2 + %s539]]
        %v541 = vstv %s540
        %v542 = vmul.f32 %v541, %v252
        %v543 = vmul.f32 %v541, %v253
        %v544 = vadd.f32 %v537, %v542
        %v545 = vadd.f32 %v538, %v543
        %v547 = vsel %vm400, %v544, 0
        %v550 = vsel %vm400, %v545, 0
        %552 = vmatpush.msra.mxu0 0.0
        %553 = vmatpush.msra.mxu0 0.0
        %554 = vmatpush.msra.mxu0 0.0
        %555 = vmatpush.msra.mxu0 0.0
        %556 = vmatpush.msra.mxu0 0.0
        %557 = vmatpush.msra.mxu0 0.0
        %558 = vmatpush.msra.mxu0 0.0
        %559 = vmatpush.msra.mxu0 0.0
        %560 = vmatpush.msra.mxu0 0.0
        %561 = vmatpush.msra.mxu0 0.0
        %562 = vmatpush.msra.mxu0 0.0
        %563 = vmatpush.msra.mxu0 0.0
        %564 = vmatpush.msra.mxu0 0.0
        %565 = vmatpush.msra.mxu0 0.0
        %566 = vmatpush.msra.mxu0 %v290
        %567 = vmatpush.msra.mxu0 %v289
        %568 = vmatmul.f32.gmra.mxu0 %v547
        %v569 = vpop.f32.mrf.mxu0
        %v570 = vadd.f32 0.0, %v569
        %571 = vmatmul.f32.gmra.mxu0 %v550
        %v572 = vpop.f32.mrf.mxu0
        %v573 = vadd.f32 0.0, %v572
        %574 = vdwg.mxu0
        %v575 = vadd.f32 %v516, %v570
        %v576 = vadd.f32 %v517, %v573
        %s577 = sadd.s32 %s245, 32
        %s578 = sld [smem:[#allocation2 + %s577]]
        %v579 = vstv %s578
        %v580 = vmul.f32 %v579, %v246
        %v581 = vmul.f32 %v579, %v247
        %v582 = vadd.f32 %v580, 0.0
        %v583 = vadd.f32 %v581, 0.0
        %s584 = sadd.s32 %s245, 36
        %s585 = sld [smem:[#allocation2 + %s584]]
        %v586 = vstv %s585
        %v587 = vmul.f32 %v586, %v248
        %v588 = vmul.f32 %v586, %v249
        %v589 = vadd.f32 %v582, %v587
        %v590 = vadd.f32 %v583, %v588
        %s591 = sadd.s32 %s245, 40
        %s592 = sld [smem:[#allocation2 + %s591]]
        %v593 = vstv %s592
        %v594 = vmul.f32 %v593, %v250
        %v595 = vmul.f32 %v593, %v251
        %v596 = vadd.f32 %v589, %v594
        %v597 = vadd.f32 %v590, %v595
        %s598 = sadd.s32 %s245, 44
        %s599 = sld [smem:[#allocation2 + %s598]]
        %v600 = vstv %s599
        %v601 = vmul.f32 %v600, %v252
        %v602 = vmul.f32 %v600, %v253
        %v603 = vadd.f32 %v596, %v601
        %v604 = vadd.f32 %v597, %v602
        %s605 = sadd.s32 %s245, 48
        %s606 = sld [smem:[#allocation2 + %s605]]
        %v607 = vstv %s606
        %v608 = vmul.f32 %v607, %v246
        %v609 = vmul.f32 %v607, %v247
        %v610 = vadd.f32 %v608, 0.0
        %v611 = vadd.f32 %v609, 0.0
        %s612 = sadd.s32 %s245, 52
        %s613 = sld [smem:[#allocation2 + %s612]]
        %v614 = vstv %s613
        %v615 = vmul.f32 %v614, %v248
        %v616 = vmul.f32 %v614, %v249
        %v617 = vadd.f32 %v610, %v615
        %v618 = vadd.f32 %v611, %v616
        %s619 = sadd.s32 %s245, 56
        %s620 = sld [smem:[#allocation2 + %s619]]
        %v621 = vstv %s620
        %v622 = vmul.f32 %v621, %v250
        %v623 = vmul.f32 %v621, %v251
        %v624 = vadd.f32 %v617, %v622
        %v625 = vadd.f32 %v618, %v623
        %s626 = sadd.s32 %s245, 60
        %s627 = sld [smem:[#allocation2 + %s626]]
        %v628 = vstv %s627
        %v629 = vmul.f32 %v628, %v252
        %v630 = vmul.f32 %v628, %v253
        %v631 = vadd.f32 %v624, %v629
        %v632 = vadd.f32 %v625, %v630
        %v634 = vsel %vm400, %v631, 0
        %v637 = vsel %vm400, %v632, 0
        %639 = vmatpush.msra.mxu0 0.0
        %640 = vmatpush.msra.mxu0 0.0
        %641 = vmatpush.msra.mxu0 0.0
        %642 = vmatpush.msra.mxu0 0.0
        %643 = vmatpush.msra.mxu0 0.0
        %644 = vmatpush.msra.mxu0 0.0
        %645 = vmatpush.msra.mxu0 0.0
        %646 = vmatpush.msra.mxu0 0.0
        %647 = vmatpush.msra.mxu0 0.0
        %648 = vmatpush.msra.mxu0 0.0
        %649 = vmatpush.msra.mxu0 0.0
        %650 = vmatpush.msra.mxu0 0.0
        %651 = vmatpush.msra.mxu0 0.0
        %652 = vmatpush.msra.mxu0 0.0
        %653 = vmatpush.msra.mxu0 %v274
        %654 = vmatpush.msra.mxu0 %v273
        %655 = vmatmul.f32.gmra.mxu0 %v634
        %v656 = vpop.f32.mrf.mxu0
        %v657 = vadd.f32 0.0, %v656
        %658 = vmatmul.f32.gmra.mxu0 %v637
        %v659 = vpop.f32.mrf.mxu0
        %v660 = vadd.f32 0.0, %v659
        %661 = vdwg.mxu0
        %v663 = vsel %vm400, %v603, 0
        %v666 = vsel %vm400, %v604, 0
        %668 = vmatpush.msra.mxu0 0.0
        %669 = vmatpush.msra.mxu0 0.0
        %670 = vmatpush.msra.mxu0 0.0
        %671 = vmatpush.msra.mxu0 0.0
        %672 = vmatpush.msra.mxu0 0.0
        %673 = vmatpush.msra.mxu0 0.0
        %674 = vmatpush.msra.mxu0 0.0
        %675 = vmatpush.msra.mxu0 0.0
        %676 = vmatpush.msra.mxu0 0.0
        %677 = vmatpush.msra.mxu0 0.0
        %678 = vmatpush.msra.mxu0 0.0
        %679 = vmatpush.msra.mxu0 0.0
        %680 = vmatpush.msra.mxu0 0.0
        %681 = vmatpush.msra.mxu0 0.0
        %682 = vmatpush.msra.mxu0 %v266
        %683 = vmatpush.msra.mxu0 %v265
        %684 = vmatmul.f32.gmra.mxu0 %v663
        %v685 = vpop.f32.mrf.mxu0
        %v686 = vadd.f32 %v657, %v685
        %687 = vmatmul.f32.gmra.mxu0 %v666
        %v688 = vpop.f32.mrf.mxu0
        %v689 = vadd.f32 %v660, %v688
        %690 = vdwg.mxu0
        %s691 = sadd.s32 %s245, 96
        %s692 = sld [smem:[#allocation2 + %s691]]
        %v693 = vstv %s692
        %v694 = vmul.f32 %v693, %v246
        %v695 = vmul.f32 %v693, %v247
        %v696 = vadd.f32 %v694, 0.0
        %v697 = vadd.f32 %v695, 0.0
        %s698 = sadd.s32 %s245, 100
        %s699 = sld [smem:[#allocation2 + %s698]]
        %v700 = vstv %s699
        %v701 = vmul.f32 %v700, %v248
        %v702 = vmul.f32 %v700, %v249
        %v703 = vadd.f32 %v696, %v701
        %v704 = vadd.f32 %v697, %v702
        %s705 = sadd.s32 %s245, 104
        %s706 = sld [smem:[#allocation2 + %s705]]
        %v707 = vstv %s706
        %v708 = vmul.f32 %v707, %v250
        %v709 = vmul.f32 %v707, %v251
        %v710 = vadd.f32 %v703, %v708
        %v711 = vadd.f32 %v704, %v709
        %s712 = sadd.s32 %s245, 108
        %s713 = sld [smem:[#allocation2 + %s712]]
        %v714 = vstv %s713
        %v715 = vmul.f32 %v714, %v252
        %v716 = vmul.f32 %v714, %v253
        %v717 = vadd.f32 %v710, %v715
        %v718 = vadd.f32 %v711, %v716
        %v720 = vsel %vm400, %v717, 0
        %v723 = vsel %vm400, %v718, 0
        %725 = vmatpush.msra.mxu0 0.0
        %726 = vmatpush.msra.mxu0 0.0
        %727 = vmatpush.msra.mxu0 0.0
        %728 = vmatpush.msra.mxu0 0.0
        %729 = vmatpush.msra.mxu0 0.0
        %730 = vmatpush.msra.mxu0 0.0
        %731 = vmatpush.msra.mxu0 0.0
        %732 = vmatpush.msra.mxu0 0.0
        %733 = vmatpush.msra.mxu0 0.0
        %734 = vmatpush.msra.mxu0 0.0
        %735 = vmatpush.msra.mxu0 0.0
        %736 = vmatpush.msra.mxu0 0.0
        %737 = vmatpush.msra.mxu0 0.0
        %738 = vmatpush.msra.mxu0 0.0
        %739 = vmatpush.msra.mxu0 %v282
        %740 = vmatpush.msra.mxu0 %v281
        %741 = vmatmul.f32.gmra.mxu0 %v720
        %v742 = vpop.f32.mrf.mxu0
        %v743 = vadd.f32 0.0, %v742
        %744 = vmatmul.f32.gmra.mxu0 %v723
        %v745 = vpop.f32.mrf.mxu0
        %v746 = vadd.f32 0.0, %v745
        %747 = vdwg.mxu0
        %v748 = vadd.f32 %v686, %v743
        %v749 = vadd.f32 %v689, %v746
        %s750 = sadd.s32 %s245, 112
        %s751 = sld [smem:[#allocation2 + %s750]]
        %v752 = vstv %s751
        %v753 = vmul.f32 %v752, %v246
        %v754 = vmul.f32 %v752, %v247
        %v755 = vadd.f32 %v753, 0.0
        %v756 = vadd.f32 %v754, 0.0
        %s757 = sadd.s32 %s245, 116
        %s758 = sld [smem:[#allocation2 + %s757]]
        %v759 = vstv %s758
        %v760 = vmul.f32 %v759, %v248
        %v761 = vmul.f32 %v759, %v249
        %v762 = vadd.f32 %v755, %v760
        %v763 = vadd.f32 %v756, %v761
        %s764 = sadd.s32 %s245, 120
        %s765 = sld [smem:[#allocation2 + %s764]]
        %v766 = vstv %s765
        %v767 = vmul.f32 %v766, %v250
        %v768 = vmul.f32 %v766, %v251
        %v769 = vadd.f32 %v762, %v767
        %v770 = vadd.f32 %v763, %v768
        %s771 = sadd.s32 %s245, 124
        %s772 = sld [smem:[#allocation2 + %s771]]
        %v773 = vstv %s772
        %v774 = vmul.f32 %v773, %v252
        %v775 = vmul.f32 %v773, %v253
        %v776 = vadd.f32 %v769, %v774
        %v777 = vadd.f32 %v770, %v775
        %v779 = vsel %vm400, %v776, 0
        %v782 = vsel %vm400, %v777, 0
        %784 = vmatpush.msra.mxu0 0.0
        %785 = vmatpush.msra.mxu0 0.0
        %786 = vmatpush.msra.mxu0 0.0
        %787 = vmatpush.msra.mxu0 0.0
        %788 = vmatpush.msra.mxu0 0.0
        %789 = vmatpush.msra.mxu0 0.0
        %790 = vmatpush.msra.mxu0 0.0
        %791 = vmatpush.msra.mxu0 0.0
        %792 = vmatpush.msra.mxu0 0.0
        %793 = vmatpush.msra.mxu0 0.0
        %794 = vmatpush.msra.mxu0 0.0
        %795 = vmatpush.msra.mxu0 0.0
        %796 = vmatpush.msra.mxu0 0.0
        %797 = vmatpush.msra.mxu0 0.0
        %798 = vmatpush.msra.mxu0 %v290
        %799 = vmatpush.msra.mxu0 %v289
        %800 = vmatmul.f32.gmra.mxu0 %v779
        %v801 = vpop.f32.mrf.mxu0
        %v802 = vadd.f32 0.0, %v801
        %803 = vmatmul.f32.gmra.mxu0 %v782
        %v804 = vpop.f32.mrf.mxu0
        %v805 = vadd.f32 0.0, %v804
        %806 = vdwg.mxu0
        %v807 = vadd.f32 %v748, %v802
        %v808 = vadd.f32 %v749, %v805
        %v810 = vsel %vm400, %v315, 0
        %v813 = vsel %vm400, %v316, 0
        %v816 = vsel %vm400, %v317, 0
        %v819 = vsel %vm400, %v318, 0
        %821 = vmatpush.msra.mxu0 0.0
        %822 = vmatpush.msra.mxu0 0.0
        %823 = vmatpush.msra.mxu0 0.0
        %824 = vmatpush.msra.mxu0 0.0
        %825 = vmatpush.msra.mxu0 0.0
        %826 = vmatpush.msra.mxu0 0.0
        %827 = vmatpush.msra.mxu0 0.0
        %828 = vmatpush.msra.mxu0 0.0
        %829 = vmatpush.msra.mxu0 0.0
        %830 = vmatpush.msra.mxu0 0.0
        %831 = vmatpush.msra.mxu0 0.0
        %832 = vmatpush.msra.mxu0 0.0
        %833 = vmatpush.msra.mxu0 0.0
        %834 = vmatpush.msra.mxu0 0.0
        %835 = vmatpush.msra.mxu0 %v808
        %836 = vmatpush.msra.mxu0 %v807
        %837 = vmatmul.f32.gmra.mxu0 %v810
        %v838 = vpop.f32.mrf.mxu0
        %v839 = vadd.f32 0.0, %v838
        %840 = vmatmul.f32.gmra.mxu0 %v813
        %v841 = vpop.f32.mrf.mxu0
        %v842 = vadd.f32 0.0, %v841
        %843 = vmatmul.f32.gmra.mxu0 %v816
        %v844 = vpop.f32.mrf.mxu0
        %v845 = vadd.f32 0.0, %v844
        %846 = vmatmul.f32.gmra.mxu0 %v819
        %v847 = vpop.f32.mrf.mxu0
        %v848 = vadd.f32 0.0, %v847
        %849 = vdwg.mxu0
        %v851 = vsel %vm400, %v302, 0
        %v854 = vsel %vm400, %v303, 0
        %v857 = vsel %vm400, %v304, 0
        %v860 = vsel %vm400, %v305, 0
        %862 = vmatpush.msra.mxu0 0.0
        %863 = vmatpush.msra.mxu0 0.0
        %864 = vmatpush.msra.mxu0 0.0
        %865 = vmatpush.msra.mxu0 0.0
        %866 = vmatpush.msra.mxu0 0.0
        %867 = vmatpush.msra.mxu0 0.0
        %868 = vmatpush.msra.mxu0 0.0
        %869 = vmatpush.msra.mxu0 0.0
        %870 = vmatpush.msra.mxu0 0.0
        %871 = vmatpush.msra.mxu0 0.0
        %872 = vmatpush.msra.mxu0 0.0
        %873 = vmatpush.msra.mxu0 0.0
        %874 = vmatpush.msra.mxu0 0.0
        %875 = vmatpush.msra.mxu0 0.0
        %876 = vmatpush.msra.mxu0 %v576
        %877 = vmatpush.msra.mxu0 %v575
        %878 = vmatmul.f32.gmra.mxu0 %v851
        %v879 = vpop.f32.mrf.mxu0
        %v880 = vadd.f32 %v839, %v879
        %881 = vmatmul.f32.gmra.mxu0 %v854
        %v882 = vpop.f32.mrf.mxu0
        %v883 = vadd.f32 %v842, %v882
        %884 = vmatmul.f32.gmra.mxu0 %v857
        %v885 = vpop.f32.mrf.mxu0
        %v886 = vadd.f32 %v845, %v885
        %887 = vmatmul.f32.gmra.mxu0 %v860
        %v888 = vpop.f32.mrf.mxu0
        %v889 = vadd.f32 %v848, %v888
        %890 = vdwg.mxu0
        %s891 = sadd.s32 %s245, 128
        %s892 = sld [smem:[#allocation2 + %s891]]
        %v893 = vstv %s892
        %v894 = vmul.f32 %v893, %v246
        %v895 = vmul.f32 %v893, %v247
        %v896 = vadd.f32 %v894, 0.0
        %v897 = vadd.f32 %v895, 0.0
        %s898 = sadd.s32 %s245, 132
        %s899 = sld [smem:[#allocation2 + %s898]]
        %v900 = vstv %s899
        %v901 = vmul.f32 %v900, %v248
        %v902 = vmul.f32 %v900, %v249
        %v903 = vadd.f32 %v896, %v901
        %v904 = vadd.f32 %v897, %v902
        %s905 = sadd.s32 %s245, 136
        %s906 = sld [smem:[#allocation2 + %s905]]
        %v907 = vstv %s906
        %v908 = vmul.f32 %v907, %v250
        %v909 = vmul.f32 %v907, %v251
        %v910 = vadd.f32 %v903, %v908
        %v911 = vadd.f32 %v904, %v909
        %s912 = sadd.s32 %s245, 140
        %s913 = sld [smem:[#allocation2 + %s912]]
        %v914 = vstv %s913
        %v915 = vmul.f32 %v914, %v252
        %v916 = vmul.f32 %v914, %v253
        %v917 = vadd.f32 %v910, %v915
        %v918 = vadd.f32 %v911, %v916
        %s919 = sadd.s32 %s245, 144
        %s920 = sld [smem:[#allocation2 + %s919]]
        %v921 = vstv %s920
        %v922 = vmul.f32 %v921, %v246
        %v923 = vmul.f32 %v921, %v247
        %v924 = vadd.f32 %v922, 0.0
        %v925 = vadd.f32 %v923, 0.0
        %s926 = sadd.s32 %s245, 148
        %s927 = sld [smem:[#allocation2 + %s926]]
        %v928 = vstv %s927
        %v929 = vmul.f32 %v928, %v248
        %v930 = vmul.f32 %v928, %v249
        %v931 = vadd.f32 %v924, %v929
        %v932 = vadd.f32 %v925, %v930
        %s933 = sadd.s32 %s245, 152
        %s934 = sld [smem:[#allocation2 + %s933]]
        %v935 = vstv %s934
        %v936 = vmul.f32 %v935, %v250
        %v937 = vmul.f32 %v935, %v251
        %v938 = vadd.f32 %v931, %v936
        %v939 = vadd.f32 %v932, %v937
        %s940 = sadd.s32 %s245, 156
        %s941 = sld [smem:[#allocation2 + %s940]]
        %v942 = vstv %s941
        %v943 = vmul.f32 %v942, %v252
        %v944 = vmul.f32 %v942, %v253
        %v945 = vadd.f32 %v938, %v943
        %v946 = vadd.f32 %v939, %v944
        %v948 = vsel %vm400, %v945, 0
        %v951 = vsel %vm400, %v946, 0
        %953 = vmatpush.msra.mxu0 0.0
        %954 = vmatpush.msra.mxu0 0.0
        %955 = vmatpush.msra.mxu0 0.0
        %956 = vmatpush.msra.mxu0 0.0
        %957 = vmatpush.msra.mxu0 0.0
        %958 = vmatpush.msra.mxu0 0.0
        %959 = vmatpush.msra.mxu0 0.0
        %960 = vmatpush.msra.mxu0 0.0
        %961 = vmatpush.msra.mxu0 0.0
        %962 = vmatpush.msra.mxu0 0.0
        %963 = vmatpush.msra.mxu0 0.0
        %964 = vmatpush.msra.mxu0 0.0
        %965 = vmatpush.msra.mxu0 0.0
        %966 = vmatpush.msra.mxu0 0.0
        %967 = vmatpush.msra.mxu0 %v274
        %968 = vmatpush.msra.mxu0 %v273
        %969 = vmatmul.f32.gmra.mxu0 %v948
        %v970 = vpop.f32.mrf.mxu0
        %v971 = vadd.f32 0.0, %v970
        %972 = vmatmul.f32.gmra.mxu0 %v951
        %v973 = vpop.f32.mrf.mxu0
        %v974 = vadd.f32 0.0, %v973
        %975 = vdwg.mxu0
        %v977 = vsel %vm400, %v917, 0
        %v980 = vsel %vm400, %v918, 0
        %982 = vmatpush.msra.mxu0 0.0
        %983 = vmatpush.msra.mxu0 0.0
        %984 = vmatpush.msra.mxu0 0.0
        %985 = vmatpush.msra.mxu0 0.0
        %986 = vmatpush.msra.mxu0 0.0
        %987 = vmatpush.msra.mxu0 0.0
        %988 = vmatpush.msra.mxu0 0.0
        %989 = vmatpush.msra.mxu0 0.0
        %990 = vmatpush.msra.mxu0 0.0
        %991 = vmatpush.msra.mxu0 0.0
        %992 = vmatpush.msra.mxu0 0.0
        %993 = vmatpush.msra.mxu0 0.0
        %994 = vmatpush.msra.mxu0 0.0
        %995 = vmatpush.msra.mxu0 0.0
        %996 = vmatpush.msra.mxu0 %v266
        %997 = vmatpush.msra.mxu0 %v265
        %998 = vmatmul.f32.gmra.mxu0 %v977
        %v999 = vpop.f32.mrf.mxu0
        %v1000 = vadd.f32 %v971, %v999
        %1001 = vmatmul.f32.gmra.mxu0 %v980
        %v1002 = vpop.f32.mrf.mxu0
        %v1003 = vadd.f32 %v974, %v1002
        %1004 = vdwg.mxu0
        %s1005 = sadd.s32 %s245, 192
        %s1006 = sld [smem:[#allocation2 + %s1005]]
        %v1007 = vstv %s1006
        %v1008 = vmul.f32 %v1007, %v246
        %v1009 = vmul.f32 %v1007, %v247
        %v1010 = vadd.f32 %v1008, 0.0
        %v1011 = vadd.f32 %v1009, 0.0
        %s1012 = sadd.s32 %s245, 196
        %s1013 = sld [smem:[#allocation2 + %s1012]]
        %v1014 = vstv %s1013
        %v1015 = vmul.f32 %v1014, %v248
        %v1016 = vmul.f32 %v1014, %v249
        %v1017 = vadd.f32 %v1010, %v1015
        %v1018 = vadd.f32 %v1011, %v1016
        %s1019 = sadd.s32 %s245, 200
        %s1020 = sld [smem:[#allocation2 + %s1019]]
        %v1021 = vstv %s1020
        %v1022 = vmul.f32 %v1021, %v250
        %v1023 = vmul.f32 %v1021, %v251
        %v1024 = vadd.f32 %v1017, %v1022
        %v1025 = vadd.f32 %v1018, %v1023
        %s1026 = sadd.s32 %s245, 204
        %s1027 = sld [smem:[#allocation2 + %s1026]]
        %v1028 = vstv %s1027
        %v1029 = vmul.f32 %v1028, %v252
        %v1030 = vmul.f32 %v1028, %v253
        %v1031 = vadd.f32 %v1024, %v1029
        %v1032 = vadd.f32 %v1025, %v1030
        %v1034 = vsel %vm400, %v1031, 0
        %v1037 = vsel %vm400, %v1032, 0
        %1039 = vmatpush.msra.mxu0 0.0
        %1040 = vmatpush.msra.mxu0 0.0
        %1041 = vmatpush.msra.mxu0 0.0
        %1042 = vmatpush.msra.mxu0 0.0
        %1043 = vmatpush.msra.mxu0 0.0
        %1044 = vmatpush.msra.mxu0 0.0
        %1045 = vmatpush.msra.mxu0 0.0
        %1046 = vmatpush.msra.mxu0 0.0
        %1047 = vmatpush.msra.mxu0 0.0
        %1048 = vmatpush.msra.mxu0 0.0
        %1049 = vmatpush.msra.mxu0 0.0
        %1050 = vmatpush.msra.mxu0 0.0
        %1051 = vmatpush.msra.mxu0 0.0
        %1052 = vmatpush.msra.mxu0 0.0
        %1053 = vmatpush.msra.mxu0 %v282
        %1054 = vmatpush.msra.mxu0 %v281
        %1055 = vmatmul.f32.gmra.mxu0 %v1034
        %v1056 = vpop.f32.mrf.mxu0
        %v1057 = vadd.f32 0.0, %v1056
        %1058 = vmatmul.f32.gmra.mxu0 %v1037
        %v1059 = vpop.f32.mrf.mxu0
        %v1060 = vadd.f32 0.0, %v1059
        %1061 = vdwg.mxu0
        %v1062 = vadd.f32 %v1000, %v1057
        %v1063 = vadd.f32 %v1003, %v1060
        %s1064 = sadd.s32 %s245, 208
        %s1065 = sld [smem:[#allocation2 + %s1064]]
        %v1066 = vstv %s1065
        %v1067 = vmul.f32 %v1066, %v246
        %v1068 = vmul.f32 %v1066, %v247
        %v1069 = vadd.f32 %v1067, 0.0
        %v1070 = vadd.f32 %v1068, 0.0
        %s1071 = sadd.s32 %s245, 212
        %s1072 = sld [smem:[#allocation2 + %s1071]]
        %v1073 = vstv %s1072
        %v1074 = vmul.f32 %v1073, %v248
        %v1075 = vmul.f32 %v1073, %v249
        %v1076 = vadd.f32 %v1069, %v1074
        %v1077 = vadd.f32 %v1070, %v1075
        %s1078 = sadd.s32 %s245, 216
        %s1079 = sld [smem:[#allocation2 + %s1078]]
        %v1080 = vstv %s1079
        %v1081 = vmul.f32 %v1080, %v250
        %v1082 = vmul.f32 %v1080, %v251
        %v1083 = vadd.f32 %v1076, %v1081
        %v1084 = vadd.f32 %v1077, %v1082
        %s1085 = sadd.s32 %s245, 220
        %s1086 = sld [smem:[#allocation2 + %s1085]]
        %v1087 = vstv %s1086
        %v1088 = vmul.f32 %v1087, %v252
        %v1089 = vmul.f32 %v1087, %v253
        %v1090 = vadd.f32 %v1083, %v1088
        %v1091 = vadd.f32 %v1084, %v1089
        %v1093 = vsel %vm400, %v1090, 0
        %v1096 = vsel %vm400, %v1091, 0
        %1098 = vmatpush.msra.mxu0 0.0
        %1099 = vmatpush.msra.mxu0 0.0
        %1100 = vmatpush.msra.mxu0 0.0
        %1101 = vmatpush.msra.mxu0 0.0
        %1102 = vmatpush.msra.mxu0 0.0
        %1103 = vmatpush.msra.mxu0 0.0
        %1104 = vmatpush.msra.mxu0 0.0
        %1105 = vmatpush.msra.mxu0 0.0
        %1106 = vmatpush.msra.mxu0 0.0
        %1107 = vmatpush.msra.mxu0 0.0
        %1108 = vmatpush.msra.mxu0 0.0
        %1109 = vmatpush.msra.mxu0 0.0
        %1110 = vmatpush.msra.mxu0 0.0
        %1111 = vmatpush.msra.mxu0 0.0
        %1112 = vmatpush.msra.mxu0 %v290
        %1113 = vmatpush.msra.mxu0 %v289
        %1114 = vmatmul.f32.gmra.mxu0 %v1093
        %v1115 = vpop.f32.mrf.mxu0
        %v1116 = vadd.f32 0.0, %v1115
        %1117 = vmatmul.f32.gmra.mxu0 %v1096
        %v1118 = vpop.f32.mrf.mxu0
        %v1119 = vadd.f32 0.0, %v1118
        %1120 = vdwg.mxu0
        %v1121 = vadd.f32 %v1062, %v1116
        %v1122 = vadd.f32 %v1063, %v1119
        %v1124 = vsel %vm400, %v328, 0
        %v1127 = vsel %vm400, %v329, 0
        %v1130 = vsel %vm400, %v330, 0
        %v1133 = vsel %vm400, %v331, 0
        %1135 = vmatpush.msra.mxu0 0.0
        %1136 = vmatpush.msra.mxu0 0.0
        %1137 = vmatpush.msra.mxu0 0.0
        %1138 = vmatpush.msra.mxu0 0.0
        %1139 = vmatpush.msra.mxu0 0.0
        %1140 = vmatpush.msra.mxu0 0.0
        %1141 = vmatpush.msra.mxu0 0.0
        %1142 = vmatpush.msra.mxu0 0.0
        %1143 = vmatpush.msra.mxu0 0.0
        %1144 = vmatpush.msra.mxu0 0.0
        %1145 = vmatpush.msra.mxu0 0.0
        %1146 = vmatpush.msra.mxu0 0.0
        %1147 = vmatpush.msra.mxu0 0.0
        %1148 = vmatpush.msra.mxu0 0.0
        %1149 = vmatpush.msra.mxu0 %v1122
        %1150 = vmatpush.msra.mxu0 %v1121
        %1151 = vmatmul.f32.gmra.mxu0 %v1124
        %v1152 = vpop.f32.mrf.mxu0
        %v1153 = vadd.f32 0.0, %v1152
        %1154 = vmatmul.f32.gmra.mxu0 %v1127
        %v1155 = vpop.f32.mrf.mxu0
        %v1156 = vadd.f32 0.0, %v1155
        %1157 = vmatmul.f32.gmra.mxu0 %v1130
        %v1158 = vpop.f32.mrf.mxu0
        %v1159 = vadd.f32 0.0, %v1158
        %1160 = vmatmul.f32.gmra.mxu0 %v1133
        %v1161 = vpop.f32.mrf.mxu0
        %v1162 = vadd.f32 0.0, %v1161
        %1163 = vdwg.mxu0
        %v1164 = vadd.f32 %v880, %v1153
        %v1165 = vadd.f32 %v883, %v1156
        %v1166 = vadd.f32 %v886, %v1159
        %v1167 = vadd.f32 %v889, %v1162
        %s1168 = sadd.s32 %s245, 160
        %s1169 = sld [smem:[#allocation2 + %s1168]]
        %v1170 = vstv %s1169
        %v1171 = vmul.f32 %v1170, %v246
        %v1172 = vmul.f32 %v1170, %v247
        %v1173 = vadd.f32 %v1171, 0.0
        %v1174 = vadd.f32 %v1172, 0.0
        %s1175 = sadd.s32 %s245, 164
        %s1176 = sld [smem:[#allocation2 + %s1175]]
        %v1177 = vstv %s1176
        %v1178 = vmul.f32 %v1177, %v248
        %v1179 = vmul.f32 %v1177, %v249
        %v1180 = vadd.f32 %v1173, %v1178
        %v1181 = vadd.f32 %v1174, %v1179
        %s1182 = sadd.s32 %s245, 168
        %s1183 = sld [smem:[#allocation2 + %s1182]]
        %v1184 = vstv %s1183
        %v1185 = vmul.f32 %v1184, %v250
        %v1186 = vmul.f32 %v1184, %v251
        %v1187 = vadd.f32 %v1180, %v1185
        %v1188 = vadd.f32 %v1181, %v1186
        %s1189 = sadd.s32 %s245, 172
        %s1190 = sld [smem:[#allocation2 + %s1189]]
        %v1191 = vstv %s1190
        %v1192 = vmul.f32 %v1191, %v252
        %v1193 = vmul.f32 %v1191, %v253
        %v1194 = vadd.f32 %v1187, %v1192
        %v1195 = vadd.f32 %v1188, %v1193
        %s1196 = sadd.s32 %s245, 176
        %s1197 = sld [smem:[#allocation2 + %s1196]]
        %v1198 = vstv %s1197
        %v1199 = vmul.f32 %v1198, %v246
        %v1200 = vmul.f32 %v1198, %v247
        %v1201 = vadd.f32 %v1199, 0.0
        %v1202 = vadd.f32 %v1200, 0.0
        %s1203 = sadd.s32 %s245, 180
        %s1204 = sld [smem:[#allocation2 + %s1203]]
        %v1205 = vstv %s1204
        %v1206 = vmul.f32 %v1205, %v248
        %v1207 = vmul.f32 %v1205, %v249
        %v1208 = vadd.f32 %v1201, %v1206
        %v1209 = vadd.f32 %v1202, %v1207
        %s1210 = sadd.s32 %s245, 184
        %s1211 = sld [smem:[#allocation2 + %s1210]]
        %v1212 = vstv %s1211
        %v1213 = vmul.f32 %v1212, %v250
        %v1214 = vmul.f32 %v1212, %v251
        %v1215 = vadd.f32 %v1208, %v1213
        %v1216 = vadd.f32 %v1209, %v1214
        %s1217 = sadd.s32 %s245, 188
        %s1218 = sld [smem:[#allocation2 + %s1217]]
        %v1219 = vstv %s1218
        %v1220 = vmul.f32 %v1219, %v252
        %v1221 = vmul.f32 %v1219, %v253
        %v1222 = vadd.f32 %v1215, %v1220
        %v1223 = vadd.f32 %v1216, %v1221
        %v1225 = vsel %vm400, %v1222, 0
        %v1228 = vsel %vm400, %v1223, 0
        %1230 = vmatpush.msra.mxu0 0.0
        %1231 = vmatpush.msra.mxu0 0.0
        %1232 = vmatpush.msra.mxu0 0.0
        %1233 = vmatpush.msra.mxu0 0.0
        %1234 = vmatpush.msra.mxu0 0.0
        %1235 = vmatpush.msra.mxu0 0.0
        %1236 = vmatpush.msra.mxu0 0.0
        %1237 = vmatpush.msra.mxu0 0.0
        %1238 = vmatpush.msra.mxu0 0.0
        %1239 = vmatpush.msra.mxu0 0.0
        %1240 = vmatpush.msra.mxu0 0.0
        %1241 = vmatpush.msra.mxu0 0.0
        %1242 = vmatpush.msra.mxu0 0.0
        %1243 = vmatpush.msra.mxu0 0.0
        %1244 = vmatpush.msra.mxu0 %v274
        %1245 = vmatpush.msra.mxu0 %v273
        %1246 = vmatmul.f32.gmra.mxu0 %v1225
        %v1247 = vpop.f32.mrf.mxu0
        %v1248 = vadd.f32 0.0, %v1247
        %1249 = vmatmul.f32.gmra.mxu0 %v1228
        %v1250 = vpop.f32.mrf.mxu0
        %v1251 = vadd.f32 0.0, %v1250
        %1252 = vdwg.mxu0
        %v1254 = vsel %vm400, %v1194, 0
        %v1257 = vsel %vm400, %v1195, 0
        %1259 = vmatpush.msra.mxu0 0.0
        %1260 = vmatpush.msra.mxu0 0.0
        %1261 = vmatpush.msra.mxu0 0.0
        %1262 = vmatpush.msra.mxu0 0.0
        %1263 = vmatpush.msra.mxu0 0.0
        %1264 = vmatpush.msra.mxu0 0.0
        %1265 = vmatpush.msra.mxu0 0.0
        %1266 = vmatpush.msra.mxu0 0.0
        %1267 = vmatpush.msra.mxu0 0.0
        %1268 = vmatpush.msra.mxu0 0.0
        %1269 = vmatpush.msra.mxu0 0.0
        %1270 = vmatpush.msra.mxu0 0.0
        %1271 = vmatpush.msra.mxu0 0.0
        %1272 = vmatpush.msra.mxu0 0.0
        %1273 = vmatpush.msra.mxu0 %v266
        %1274 = vmatpush.msra.mxu0 %v265
        %1275 = vmatmul.f32.gmra.mxu0 %v1254
        %v1276 = vpop.f32.mrf.mxu0
        %v1277 = vadd.f32 %v1248, %v1276
        %1278 = vmatmul.f32.gmra.mxu0 %v1257
        %v1279 = vpop.f32.mrf.mxu0
        %v1280 = vadd.f32 %v1251, %v1279
        %1281 = vdwg.mxu0
        %s1282 = sadd.s32 %s245, 224
        %s1283 = sld [smem:[#allocation2 + %s1282]]
        %v1284 = vstv %s1283
        %v1285 = vmul.f32 %v1284, %v246
        %v1286 = vmul.f32 %v1284, %v247
        %v1287 = vadd.f32 %v1285, 0.0
        %v1288 = vadd.f32 %v1286, 0.0
        %s1289 = sadd.s32 %s245, 228
        %s1290 = sld [smem:[#allocation2 + %s1289]]
        %v1291 = vstv %s1290
        %v1292 = vmul.f32 %v1291, %v248
        %v1293 = vmul.f32 %v1291, %v249
        %v1294 = vadd.f32 %v1287, %v1292
        %v1295 = vadd.f32 %v1288, %v1293
        %s1296 = sadd.s32 %s245, 232
        %s1297 = sld [smem:[#allocation2 + %s1296]]
        %v1298 = vstv %s1297
        %v1299 = vmul.f32 %v1298, %v250
        %v1300 = vmul.f32 %v1298, %v251
        %v1301 = vadd.f32 %v1294, %v1299
        %v1302 = vadd.f32 %v1295, %v1300
        %s1303 = sadd.s32 %s245, 236
        %s1304 = sld [smem:[#allocation2 + %s1303]]
        %v1305 = vstv %s1304
        %v1306 = vmul.f32 %v1305, %v252
        %v1307 = vmul.f32 %v1305, %v253
        %v1308 = vadd.f32 %v1301, %v1306
        %v1309 = vadd.f32 %v1302, %v1307
        %v1311 = vsel %vm400, %v1308, 0
        %v1314 = vsel %vm400, %v1309, 0
        %1316 = vmatpush.msra.mxu0 0.0
        %1317 = vmatpush.msra.mxu0 0.0
        %1318 = vmatpush.msra.mxu0 0.0
        %1319 = vmatpush.msra.mxu0 0.0
        %1320 = vmatpush.msra.mxu0 0.0
        %1321 = vmatpush.msra.mxu0 0.0
        %1322 = vmatpush.msra.mxu0 0.0
        %1323 = vmatpush.msra.mxu0 0.0
        %1324 = vmatpush.msra.mxu0 0.0
        %1325 = vmatpush.msra.mxu0 0.0
        %1326 = vmatpush.msra.mxu0 0.0
        %1327 = vmatpush.msra.mxu0 0.0
        %1328 = vmatpush.msra.mxu0 0.0
        %1329 = vmatpush.msra.mxu0 0.0
        %1330 = vmatpush.msra.mxu0 %v282
        %1331 = vmatpush.msra.mxu0 %v281
        %1332 = vmatmul.f32.gmra.mxu0 %v1311
        %v1333 = vpop.f32.mrf.mxu0
        %v1334 = vadd.f32 0.0, %v1333
        %1335 = vmatmul.f32.gmra.mxu0 %v1314
        %v1336 = vpop.f32.mrf.mxu0
        %v1337 = vadd.f32 0.0, %v1336
        %1338 = vdwg.mxu0
        %v1339 = vadd.f32 %v1277, %v1334
        %v1340 = vadd.f32 %v1280, %v1337
        %s1341 = sadd.s32 %s245, 240
        %s1342 = sld [smem:[#allocation2 + %s1341]]
        %v1343 = vstv %s1342
        %v1344 = vmul.f32 %v1343, %v246
        %v1345 = vmul.f32 %v1343, %v247
        %v1346 = vadd.f32 %v1344, 0.0
        %v1347 = vadd.f32 %v1345, 0.0
        %s1348 = sadd.s32 %s245, 244
        %s1349 = sld [smem:[#allocation2 + %s1348]]
        %v1350 = vstv %s1349
        %v1351 = vmul.f32 %v1350, %v248
        %v1352 = vmul.f32 %v1350, %v249
        %v1353 = vadd.f32 %v1346, %v1351
        %v1354 = vadd.f32 %v1347, %v1352
        %s1355 = sadd.s32 %s245, 248
        %s1356 = sld [smem:[#allocation2 + %s1355]]
        %v1357 = vstv %s1356
        %v1358 = vmul.f32 %v1357, %v250
        %v1359 = vmul.f32 %v1357, %v251
        %v1360 = vadd.f32 %v1353, %v1358
        %v1361 = vadd.f32 %v1354, %v1359
        %s1362 = sadd.s32 %s245, 252
        %s1363 = sld [smem:[#allocation2 + %s1362]]
        %v1364 = vstv %s1363
        %v1365 = vmul.f32 %v1364, %v252
        %v1366 = vmul.f32 %v1364, %v253
        %v1367 = vadd.f32 %v1360, %v1365
        %v1368 = vadd.f32 %v1361, %v1366
        %v1370 = vsel %vm400, %v1367, 0
        %v1373 = vsel %vm400, %v1368, 0
        %1375 = vmatpush.msra.mxu0 0.0
        %1376 = vmatpush.msra.mxu0 0.0
        %1377 = vmatpush.msra.mxu0 0.0
        %1378 = vmatpush.msra.mxu0 0.0
        %1379 = vmatpush.msra.mxu0 0.0
        %1380 = vmatpush.msra.mxu0 0.0
        %1381 = vmatpush.msra.mxu0 0.0
        %1382 = vmatpush.msra.mxu0 0.0
        %1383 = vmatpush.msra.mxu0 0.0
        %1384 = vmatpush.msra.mxu0 0.0
        %1385 = vmatpush.msra.mxu0 0.0
        %1386 = vmatpush.msra.mxu0 0.0
        %1387 = vmatpush.msra.mxu0 0.0
        %1388 = vmatpush.msra.mxu0 0.0
        %1389 = vmatpush.msra.mxu0 %v290
        %1390 = vmatpush.msra.mxu0 %v289
        %1391 = vmatmul.f32.gmra.mxu0 %v1370
        %v1392 = vpop.f32.mrf.mxu0
        %v1393 = vadd.f32 0.0, %v1392
        %1394 = vmatmul.f32.gmra.mxu0 %v1373
        %v1395 = vpop.f32.mrf.mxu0
        %v1396 = vadd.f32 0.0, %v1395
        %1397 = vdwg.mxu0
        %v1398 = vadd.f32 %v1339, %v1393
        %v1399 = vadd.f32 %v1340, %v1396
        %v1401 = vsel %vm400, %v341, 0
        %v1404 = vsel %vm400, %v342, 0
        %v1407 = vsel %vm400, %v343, 0
        %v1410 = vsel %vm400, %v344, 0
        %1412 = vmatpush.msra.mxu0 0.0
        %1413 = vmatpush.msra.mxu0 0.0
        %1414 = vmatpush.msra.mxu0 0.0
        %1415 = vmatpush.msra.mxu0 0.0
        %1416 = vmatpush.msra.mxu0 0.0
        %1417 = vmatpush.msra.mxu0 0.0
        %1418 = vmatpush.msra.mxu0 0.0
        %1419 = vmatpush.msra.mxu0 0.0
        %1420 = vmatpush.msra.mxu0 0.0
        %1421 = vmatpush.msra.mxu0 0.0
        %1422 = vmatpush.msra.mxu0 0.0
        %1423 = vmatpush.msra.mxu0 0.0
        %1424 = vmatpush.msra.mxu0 0.0
        %1425 = vmatpush.msra.mxu0 0.0
        %1426 = vmatpush.msra.mxu0 %v1399
        %1427 = vmatpush.msra.mxu0 %v1398
        %1428 = vmatmul.f32.gmra.mxu0 %v1401
        %v1429 = vpop.f32.mrf.mxu0
        %v1430 = vadd.f32 0.0, %v1429
        %1431 = vmatmul.f32.gmra.mxu0 %v1404
        %v1432 = vpop.f32.mrf.mxu0
        %v1433 = vadd.f32 0.0, %v1432
        %1434 = vmatmul.f32.gmra.mxu0 %v1407
        %v1435 = vpop.f32.mrf.mxu0
        %v1436 = vadd.f32 0.0, %v1435
        %1437 = vmatmul.f32.gmra.mxu0 %v1410
        %v1438 = vpop.f32.mrf.mxu0
        %v1439 = vadd.f32 0.0, %v1438
        %1440 = vdwg.mxu0
        %v1441 = vadd.f32 %v1164, %v1430
        %v1442 = vadd.f32 %v1165, %v1433
        %v1443 = vadd.f32 %v1166, %v1436
        %v1444 = vadd.f32 %v1167, %v1439
        %s1445 = sld [smem:[#allocation5 + %s245]]
        %v1446 = vstv %s1445
        %v1447 = vadd.f32 %v1441, %v1446
        %v1448 = vadd.f32 %v1442, %v1446
        %v1449 = vadd.f32 %v1443, %v1446
        %v1450 = vadd.f32 %v1444, %v1446
        %vm1451 = vcmask 244736
        %1452 = vst.msk [vmem:[%s243] sm:$0xff] %vm1451, %v1447
        %1453 = vst.msk [vmem:[%s243 + $0x8] sm:$0xff] %vm1451, %v1448
        %1454 = vst.msk [vmem:[%s243 + $0x10] sm:$0xff] %vm1451, %v1449
        %vm1455 = vcmask 242688
        %1456 = vst.msk [vmem:[%s243 + $0x18] sm:$0x3f] %vm1455, %v1450
        %s1457 = sadd.s32 %s245, 1
        %s1458 = sld [smem:[#allocation2 + %s1457]]
        %v1459 = vstv %s1458
        %v1460 = vmul.f32 %v1459, %v246
        %v1461 = vmul.f32 %v1459, %v247
        %v1462 = vadd.f32 %v1460, 0.0
        %v1463 = vadd.f32 %v1461, 0.0
        %s1464 = sadd.s32 %s245, 5
        %s1465 = sld [smem:[#allocation2 + %s1464]]
        %v1466 = vstv %s1465
        %v1467 = vmul.f32 %v1466, %v248
        %v1468 = vmul.f32 %v1466, %v249
        %v1469 = vadd.f32 %v1462, %v1467
        %v1470 = vadd.f32 %v1463, %v1468
        %s1471 = sadd.s32 %s245, 9
        %s1472 = sld [smem:[#allocation2 + %s1471]]
        %v1473 = vstv %s1472
        %v1474 = vmul.f32 %v1473, %v250
        %v1475 = vmul.f32 %v1473, %v251
        %v1476 = vadd.f32 %v1469, %v1474
        %v1477 = vadd.f32 %v1470, %v1475
        %s1478 = sadd.s32 %s245, 13
        %s1479 = sld [smem:[#allocation2 + %s1478]]
        %v1480 = vstv %s1479
        %v1481 = vmul.f32 %v1480, %v252
        %v1482 = vmul.f32 %v1480, %v253
        %v1483 = vadd.f32 %v1476, %v1481
        %v1484 = vadd.f32 %v1477, %v1482
        %s1485 = sadd.s32 %s245, 17
        %s1486 = sld [smem:[#allocation2 + %s1485]]
        %v1487 = vstv %s1486
        %v1488 = vmul.f32 %v1487, %v246
        %v1489 = vmul.f32 %v1487, %v247
        %v1490 = vadd.f32 %v1488, 0.0
        %v1491 = vadd.f32 %v1489, 0.0
        %s1492 = sadd.s32 %s245, 21
        %s1493 = sld [smem:[#allocation2 + %s1492]]
        %v1494 = vstv %s1493
        %v1495 = vmul.f32 %v1494, %v248
        %v1496 = vmul.f32 %v1494, %v249
        %v1497 = vadd.f32 %v1490, %v1495
        %v1498 = vadd.f32 %v1491, %v1496
        %s1499 = sadd.s32 %s245, 25
        %s1500 = sld [smem:[#allocation2 + %s1499]]
        %v1501 = vstv %s1500
        %v1502 = vmul.f32 %v1501, %v250
        %v1503 = vmul.f32 %v1501, %v251
        %v1504 = vadd.f32 %v1497, %v1502
        %v1505 = vadd.f32 %v1498, %v1503
        %s1506 = sadd.s32 %s245, 29
        %s1507 = sld [smem:[#allocation2 + %s1506]]
        %v1508 = vstv %s1507
        %v1509 = vmul.f32 %v1508, %v252
        %v1510 = vmul.f32 %v1508, %v253
        %v1511 = vadd.f32 %v1504, %v1509
        %v1512 = vadd.f32 %v1505, %v1510
        %v1514 = vsel %vm400, %v1511, 0
        %v1517 = vsel %vm400, %v1512, 0
        %1519 = vmatpush.msra.mxu0 0.0
        %1520 = vmatpush.msra.mxu0 0.0
        %1521 = vmatpush.msra.mxu0 0.0
        %1522 = vmatpush.msra.mxu0 0.0
        %1523 = vmatpush.msra.mxu0 0.0
        %1524 = vmatpush.msra.mxu0 0.0
        %1525 = vmatpush.msra.mxu0 0.0
        %1526 = vmatpush.msra.mxu0 0.0
        %1527 = vmatpush.msra.mxu0 0.0
        %1528 = vmatpush.msra.mxu0 0.0
        %1529 = vmatpush.msra.mxu0 0.0
        %1530 = vmatpush.msra.mxu0 0.0
        %1531 = vmatpush.msra.mxu0 0.0
        %1532 = vmatpush.msra.mxu0 0.0
        %1533 = vmatpush.msra.mxu0 %v274
        %1534 = vmatpush.msra.mxu0 %v273
        %1535 = vmatmul.f32.gmra.mxu0 %v1514
        %v1536 = vpop.f32.mrf.mxu0
        %v1537 = vadd.f32 0.0, %v1536
        %1538 = vmatmul.f32.gmra.mxu0 %v1517
        %v1539 = vpop.f32.mrf.mxu0
        %v1540 = vadd.f32 0.0, %v1539
        %1541 = vdwg.mxu0
        %v1543 = vsel %vm400, %v1483, 0
        %v1546 = vsel %vm400, %v1484, 0
        %1548 = vmatpush.msra.mxu0 0.0
        %1549 = vmatpush.msra.mxu0 0.0
        %1550 = vmatpush.msra.mxu0 0.0
        %1551 = vmatpush.msra.mxu0 0.0
        %1552 = vmatpush.msra.mxu0 0.0
        %1553 = vmatpush.msra.mxu0 0.0
        %1554 = vmatpush.msra.mxu0 0.0
        %1555 = vmatpush.msra.mxu0 0.0
        %1556 = vmatpush.msra.mxu0 0.0
        %1557 = vmatpush.msra.mxu0 0.0
        %1558 = vmatpush.msra.mxu0 0.0
        %1559 = vmatpush.msra.mxu0 0.0
        %1560 = vmatpush.msra.mxu0 0.0
        %1561 = vmatpush.msra.mxu0 0.0
        %1562 = vmatpush.msra.mxu0 %v266
        %1563 = vmatpush.msra.mxu0 %v265
        %1564 = vmatmul.f32.gmra.mxu0 %v1543
        %v1565 = vpop.f32.mrf.mxu0
        %v1566 = vadd.f32 %v1537, %v1565
        %1567 = vmatmul.f32.gmra.mxu0 %v1546
        %v1568 = vpop.f32.mrf.mxu0
        %v1569 = vadd.f32 %v1540, %v1568
        %1570 = vdwg.mxu0
        %s1571 = sadd.s32 %s245, 65
        %s1572 = sld [smem:[#allocation2 + %s1571]]
        %v1573 = vstv %s1572
        %v1574 = vmul.f32 %v1573, %v246
        %v1575 = vmul.f32 %v1573, %v247
        %v1576 = vadd.f32 %v1574, 0.0
        %v1577 = vadd.f32 %v1575, 0.0
        %s1578 = sadd.s32 %s245, 69
        %s1579 = sld [smem:[#allocation2 + %s1578]]
        %v1580 = vstv %s1579
        %v1581 = vmul.f32 %v1580, %v248
        %v1582 = vmul.f32 %v1580, %v249
        %v1583 = vadd.f32 %v1576, %v1581
        %v1584 = vadd.f32 %v1577, %v1582
        %s1585 = sadd.s32 %s245, 73
        %s1586 = sld [smem:[#allocation2 + %s1585]]
        %v1587 = vstv %s1586
        %v1588 = vmul.f32 %v1587, %v250
        %v1589 = vmul.f32 %v1587, %v251
        %v1590 = vadd.f32 %v1583, %v1588
        %v1591 = vadd.f32 %v1584, %v1589
        %s1592 = sadd.s32 %s245, 77
        %s1593 = sld [smem:[#allocation2 + %s1592]]
        %v1594 = vstv %s1593
        %v1595 = vmul.f32 %v1594, %v252
        %v1596 = vmul.f32 %v1594, %v253
        %v1597 = vadd.f32 %v1590, %v1595
        %v1598 = vadd.f32 %v1591, %v1596
        %v1600 = vsel %vm400, %v1597, 0
        %v1603 = vsel %vm400, %v1598, 0
        %1605 = vmatpush.msra.mxu0 0.0
        %1606 = vmatpush.msra.mxu0 0.0
        %1607 = vmatpush.msra.mxu0 0.0
        %1608 = vmatpush.msra.mxu0 0.0
        %1609 = vmatpush.msra.mxu0 0.0
        %1610 = vmatpush.msra.mxu0 0.0
        %1611 = vmatpush.msra.mxu0 0.0
        %1612 = vmatpush.msra.mxu0 0.0
        %1613 = vmatpush.msra.mxu0 0.0
        %1614 = vmatpush.msra.mxu0 0.0
        %1615 = vmatpush.msra.mxu0 0.0
        %1616 = vmatpush.msra.mxu0 0.0
        %1617 = vmatpush.msra.mxu0 0.0
        %1618 = vmatpush.msra.mxu0 0.0
        %1619 = vmatpush.msra.mxu0 %v282
        %1620 = vmatpush.msra.mxu0 %v281
        %1621 = vmatmul.f32.gmra.mxu0 %v1600
        %v1622 = vpop.f32.mrf.mxu0
        %v1623 = vadd.f32 0.0, %v1622
        %1624 = vmatmul.f32.gmra.mxu0 %v1603
        %v1625 = vpop.f32.mrf.mxu0
        %v1626 = vadd.f32 0.0, %v1625
        %1627 = vdwg.mxu0
        %v1628 = vadd.f32 %v1566, %v1623
        %v1629 = vadd.f32 %v1569, %v1626
        %s1630 = sadd.s32 %s245, 81
        %s1631 = sld [smem:[#allocation2 + %s1630]]
        %v1632 = vstv %s1631
        %v1633 = vmul.f32 %v1632, %v246
        %v1634 = vmul.f32 %v1632, %v247
        %v1635 = vadd.f32 %v1633, 0.0
        %v1636 = vadd.f32 %v1634, 0.0
        %s1637 = sadd.s32 %s245, 85
        %s1638 = sld [smem:[#allocation2 + %s1637]]
        %v1639 = vstv %s1638
        %v1640 = vmul.f32 %v1639, %v248
        %v1641 = vmul.f32 %v1639, %v249
        %v1642 = vadd.f32 %v1635, %v1640
        %v1643 = vadd.f32 %v1636, %v1641
        %s1644 = sadd.s32 %s245, 89
        %s1645 = sld [smem:[#allocation2 + %s1644]]
        %v1646 = vstv %s1645
        %v1647 = vmul.f32 %v1646, %v250
        %v1648 = vmul.f32 %v1646, %v251
        %v1649 = vadd.f32 %v1642, %v1647
        %v1650 = vadd.f32 %v1643, %v1648
        %s1651 = sadd.s32 %s245, 93
        %s1652 = sld [smem:[#allocation2 + %s1651]]
        %v1653 = vstv %s1652
        %v1654 = vmul.f32 %v1653, %v252
        %v1655 = vmul.f32 %v1653, %v253
        %v1656 = vadd.f32 %v1649, %v1654
        %v1657 = vadd.f32 %v1650, %v1655
        %v1659 = vsel %vm400, %v1656, 0
        %v1662 = vsel %vm400, %v1657, 0
        %1664 = vmatpush.msra.mxu0 0.0
        %1665 = vmatpush.msra.mxu0 0.0
        %1666 = vmatpush.msra.mxu0 0.0
        %1667 = vmatpush.msra.mxu0 0.0
        %1668 = vmatpush.msra.mxu0 0.0
        %1669 = vmatpush.msra.mxu0 0.0
        %1670 = vmatpush.msra.mxu0 0.0
        %1671 = vmatpush.msra.mxu0 0.0
        %1672 = vmatpush.msra.mxu0 0.0
        %1673 = vmatpush.msra.mxu0 0.0
        %1674 = vmatpush.msra.mxu0 0.0
        %1675 = vmatpush.msra.mxu0 0.0
        %1676 = vmatpush.msra.mxu0 0.0
        %1677 = vmatpush.msra.mxu0 0.0
        %1678 = vmatpush.msra.mxu0 %v290
        %1679 = vmatpush.msra.mxu0 %v289
        %1680 = vmatmul.f32.gmra.mxu0 %v1659
        %v1681 = vpop.f32.mrf.mxu0
        %v1682 = vadd.f32 0.0, %v1681
        %1683 = vmatmul.f32.gmra.mxu0 %v1662
        %v1684 = vpop.f32.mrf.mxu0
        %v1685 = vadd.f32 0.0, %v1684
        %1686 = vdwg.mxu0
        %v1687 = vadd.f32 %v1628, %v1682
        %v1688 = vadd.f32 %v1629, %v1685
        %s1689 = sadd.s32 %s245, 33
        %s1690 = sld [smem:[#allocation2 + %s1689]]
        %v1691 = vstv %s1690
        %v1692 = vmul.f32 %v1691, %v246
        %v1693 = vmul.f32 %v1691, %v247
        %v1694 = vadd.f32 %v1692, 0.0
        %v1695 = vadd.f32 %v1693, 0.0
        %s1696 = sadd.s32 %s245, 37
        %s1697 = sld [smem:[#allocation2 + %s1696]]
        %v1698 = vstv %s1697
        %v1699 = vmul.f32 %v1698, %v248
        %v1700 = vmul.f32 %v1698, %v249
        %v1701 = vadd.f32 %v1694, %v1699
        %v1702 = vadd.f32 %v1695, %v1700
        %s1703 = sadd.s32 %s245, 41
        %s1704 = sld [smem:[#allocation2 + %s1703]]
        %v1705 = vstv %s1704
        %v1706 = vmul.f32 %v1705, %v250
        %v1707 = vmul.f32 %v1705, %v251
        %v1708 = vadd.f32 %v1701, %v1706
        %v1709 = vadd.f32 %v1702, %v1707
        %s1710 = sadd.s32 %s245, 45
        %s1711 = sld [smem:[#allocation2 + %s1710]]
        %v1712 = vstv %s1711
        %v1713 = vmul.f32 %v1712, %v252
        %v1714 = vmul.f32 %v1712, %v253
        %v1715 = vadd.f32 %v1708, %v1713
        %v1716 = vadd.f32 %v1709, %v1714
        %s1717 = sadd.s32 %s245, 49
        %s1718 = sld [smem:[#allocation2 + %s1717]]
        %v1719 = vstv %s1718
        %v1720 = vmul.f32 %v1719, %v246
        %v1721 = vmul.f32 %v1719, %v247
        %v1722 = vadd.f32 %v1720, 0.0
        %v1723 = vadd.f32 %v1721, 0.0
        %s1724 = sadd.s32 %s245, 53
        %s1725 = sld [smem:[#allocation2 + %s1724]]
        %v1726 = vstv %s1725
        %v1727 = vmul.f32 %v1726, %v248
        %v1728 = vmul.f32 %v1726, %v249
        %v1729 = vadd.f32 %v1722, %v1727
        %v1730 = vadd.f32 %v1723, %v1728
        %s1731 = sadd.s32 %s245, 57
        %s1732 = sld [smem:[#allocation2 + %s1731]]
        %v1733 = vstv %s1732
        %v1734 = vmul.f32 %v1733, %v250
        %v1735 = vmul.f32 %v1733, %v251
        %v1736 = vadd.f32 %v1729, %v1734
        %v1737 = vadd.f32 %v1730, %v1735
        %s1738 = sadd.s32 %s245, 61
        %s1739 = sld [smem:[#allocation2 + %s1738]]
        %v1740 = vstv %s1739
        %v1741 = vmul.f32 %v1740, %v252
        %v1742 = vmul.f32 %v1740, %v253
        %v1743 = vadd.f32 %v1736, %v1741
        %v1744 = vadd.f32 %v1737, %v1742
        %v1746 = vsel %vm400, %v1743, 0
        %v1749 = vsel %vm400, %v1744, 0
        %1751 = vmatpush.msra.mxu0 0.0
        %1752 = vmatpush.msra.mxu0 0.0
        %1753 = vmatpush.msra.mxu0 0.0
        %1754 = vmatpush.msra.mxu0 0.0
        %1755 = vmatpush.msra.mxu0 0.0
        %1756 = vmatpush.msra.mxu0 0.0
        %1757 = vmatpush.msra.mxu0 0.0
        %1758 = vmatpush.msra.mxu0 0.0
        %1759 = vmatpush.msra.mxu0 0.0
        %1760 = vmatpush.msra.mxu0 0.0
        %1761 = vmatpush.msra.mxu0 0.0
        %1762 = vmatpush.msra.mxu0 0.0
        %1763 = vmatpush.msra.mxu0 0.0
        %1764 = vmatpush.msra.mxu0 0.0
        %1765 = vmatpush.msra.mxu0 %v274
        %1766 = vmatpush.msra.mxu0 %v273
        %1767 = vmatmul.f32.gmra.mxu0 %v1746
        %v1768 = vpop.f32.mrf.mxu0
        %v1769 = vadd.f32 0.0, %v1768
        %1770 = vmatmul.f32.gmra.mxu0 %v1749
        %v1771 = vpop.f32.mrf.mxu0
        %v1772 = vadd.f32 0.0, %v1771
        %1773 = vdwg.mxu0
        %v1775 = vsel %vm400, %v1715, 0
        %v1778 = vsel %vm400, %v1716, 0
        %1780 = vmatpush.msra.mxu0 0.0
        %1781 = vmatpush.msra.mxu0 0.0
        %1782 = vmatpush.msra.mxu0 0.0
        %1783 = vmatpush.msra.mxu0 0.0
        %1784 = vmatpush.msra.mxu0 0.0
        %1785 = vmatpush.msra.mxu0 0.0
        %1786 = vmatpush.msra.mxu0 0.0
        %1787 = vmatpush.msra.mxu0 0.0
        %1788 = vmatpush.msra.mxu0 0.0
        %1789 = vmatpush.msra.mxu0 0.0
        %1790 = vmatpush.msra.mxu0 0.0
        %1791 = vmatpush.msra.mxu0 0.0
        %1792 = vmatpush.msra.mxu0 0.0
        %1793 = vmatpush.msra.mxu0 0.0
        %1794 = vmatpush.msra.mxu0 %v266
        %1795 = vmatpush.msra.mxu0 %v265
        %1796 = vmatmul.f32.gmra.mxu0 %v1775
        %v1797 = vpop.f32.mrf.mxu0
        %v1798 = vadd.f32 %v1769, %v1797
        %1799 = vmatmul.f32.gmra.mxu0 %v1778
        %v1800 = vpop.f32.mrf.mxu0
        %v1801 = vadd.f32 %v1772, %v1800
        %1802 = vdwg.mxu0
        %s1803 = sadd.s32 %s245, 97
        %s1804 = sld [smem:[#allocation2 + %s1803]]
        %v1805 = vstv %s1804
        %v1806 = vmul.f32 %v1805, %v246
        %v1807 = vmul.f32 %v1805, %v247
        %v1808 = vadd.f32 %v1806, 0.0
        %v1809 = vadd.f32 %v1807, 0.0
        %s1810 = sadd.s32 %s245, 101
        %s1811 = sld [smem:[#allocation2 + %s1810]]
        %v1812 = vstv %s1811
        %v1813 = vmul.f32 %v1812, %v248
        %v1814 = vmul.f32 %v1812, %v249
        %v1815 = vadd.f32 %v1808, %v1813
        %v1816 = vadd.f32 %v1809, %v1814
        %s1817 = sadd.s32 %s245, 105
        %s1818 = sld [smem:[#allocation2 + %s1817]]
        %v1819 = vstv %s1818
        %v1820 = vmul.f32 %v1819, %v250
        %v1821 = vmul.f32 %v1819, %v251
        %v1822 = vadd.f32 %v1815, %v1820
        %v1823 = vadd.f32 %v1816, %v1821
        %s1824 = sadd.s32 %s245, 109
        %s1825 = sld [smem:[#allocation2 + %s1824]]
        %v1826 = vstv %s1825
        %v1827 = vmul.f32 %v1826, %v252
        %v1828 = vmul.f32 %v1826, %v253
        %v1829 = vadd.f32 %v1822, %v1827
        %v1830 = vadd.f32 %v1823, %v1828
        %v1832 = vsel %vm400, %v1829, 0
        %v1835 = vsel %vm400, %v1830, 0
        %1837 = vmatpush.msra.mxu0 0.0
        %1838 = vmatpush.msra.mxu0 0.0
        %1839 = vmatpush.msra.mxu0 0.0
        %1840 = vmatpush.msra.mxu0 0.0
        %1841 = vmatpush.msra.mxu0 0.0
        %1842 = vmatpush.msra.mxu0 0.0
        %1843 = vmatpush.msra.mxu0 0.0
        %1844 = vmatpush.msra.mxu0 0.0
        %1845 = vmatpush.msra.mxu0 0.0
        %1846 = vmatpush.msra.mxu0 0.0
        %1847 = vmatpush.msra.mxu0 0.0
        %1848 = vmatpush.msra.mxu0 0.0
        %1849 = vmatpush.msra.mxu0 0.0
        %1850 = vmatpush.msra.mxu0 0.0
        %1851 = vmatpush.msra.mxu0 %v282
        %1852 = vmatpush.msra.mxu0 %v281
        %1853 = vmatmul.f32.gmra.mxu0 %v1832
        %v1854 = vpop.f32.mrf.mxu0
        %v1855 = vadd.f32 0.0, %v1854
        %1856 = vmatmul.f32.gmra.mxu0 %v1835
        %v1857 = vpop.f32.mrf.mxu0
        %v1858 = vadd.f32 0.0, %v1857
        %1859 = vdwg.mxu0
        %v1860 = vadd.f32 %v1798, %v1855
        %v1861 = vadd.f32 %v1801, %v1858
        %s1862 = sadd.s32 %s245, 113
        %s1863 = sld [smem:[#allocation2 + %s1862]]
        %v1864 = vstv %s1863
        %v1865 = vmul.f32 %v1864, %v246
        %v1866 = vmul.f32 %v1864, %v247
        %v1867 = vadd.f32 %v1865, 0.0
        %v1868 = vadd.f32 %v1866, 0.0
        %s1869 = sadd.s32 %s245, 117
        %s1870 = sld [smem:[#allocation2 + %s1869]]
        %v1871 = vstv %s1870
        %v1872 = vmul.f32 %v1871, %v248
        %v1873 = vmul.f32 %v1871, %v249
        %v1874 = vadd.f32 %v1867, %v1872
        %v1875 = vadd.f32 %v1868, %v1873
        %s1876 = sadd.s32 %s245, 121
        %s1877 = sld [smem:[#allocation2 + %s1876]]
        %v1878 = vstv %s1877
        %v1879 = vmul.f32 %v1878, %v250
        %v1880 = vmul.f32 %v1878, %v251
        %v1881 = vadd.f32 %v1874, %v1879
        %v1882 = vadd.f32 %v1875, %v1880
        %s1883 = sadd.s32 %s245, 125
        %s1884 = sld [smem:[#allocation2 + %s1883]]
        %v1885 = vstv %s1884
        %v1886 = vmul.f32 %v1885, %v252
        %v1887 = vmul.f32 %v1885, %v253
        %v1888 = vadd.f32 %v1881, %v1886
        %v1889 = vadd.f32 %v1882, %v1887
        %v1891 = vsel %vm400, %v1888, 0
        %v1894 = vsel %vm400, %v1889, 0
        %1896 = vmatpush.msra.mxu0 0.0
        %1897 = vmatpush.msra.mxu0 0.0
        %1898 = vmatpush.msra.mxu0 0.0
        %1899 = vmatpush.msra.mxu0 0.0
        %1900 = vmatpush.msra.mxu0 0.0
        %1901 = vmatpush.msra.mxu0 0.0
        %1902 = vmatpush.msra.mxu0 0.0
        %1903 = vmatpush.msra.mxu0 0.0
        %1904 = vmatpush.msra.mxu0 0.0
        %1905 = vmatpush.msra.mxu0 0.0
        %1906 = vmatpush.msra.mxu0 0.0
        %1907 = vmatpush.msra.mxu0 0.0
        %1908 = vmatpush.msra.mxu0 0.0
        %1909 = vmatpush.msra.mxu0 0.0
        %1910 = vmatpush.msra.mxu0 %v290
        %1911 = vmatpush.msra.mxu0 %v289
        %1912 = vmatmul.f32.gmra.mxu0 %v1891
        %v1913 = vpop.f32.mrf.mxu0
        %v1914 = vadd.f32 0.0, %v1913
        %1915 = vmatmul.f32.gmra.mxu0 %v1894
        %v1916 = vpop.f32.mrf.mxu0
        %v1917 = vadd.f32 0.0, %v1916
        %1918 = vdwg.mxu0
        %v1919 = vadd.f32 %v1860, %v1914
        %v1920 = vadd.f32 %v1861, %v1917
        %1921 = vmatpush.msra.mxu0 0.0
        %1922 = vmatpush.msra.mxu0 0.0
        %1923 = vmatpush.msra.mxu0 0.0
        %1924 = vmatpush.msra.mxu0 0.0
        %1925 = vmatpush.msra.mxu0 0.0
        %1926 = vmatpush.msra.mxu0 0.0
        %1927 = vmatpush.msra.mxu0 0.0
        %1928 = vmatpush.msra.mxu0 0.0
        %1929 = vmatpush.msra.mxu0 0.0
        %1930 = vmatpush.msra.mxu0 0.0
        %1931 = vmatpush.msra.mxu0 0.0
        %1932 = vmatpush.msra.mxu0 0.0
        %1933 = vmatpush.msra.mxu0 0.0
        %1934 = vmatpush.msra.mxu0 0.0
        %1935 = vmatpush.msra.mxu0 %v1920
        %1936 = vmatpush.msra.mxu0 %v1919
        %1937 = vmatmul.f32.gmra.mxu0 %v810
        %v1938 = vpop.f32.mrf.mxu0
        %v1939 = vadd.f32 0.0, %v1938
        %1940 = vmatmul.f32.gmra.mxu0 %v813
        %v1941 = vpop.f32.mrf.mxu0
        %v1942 = vadd.f32 0.0, %v1941
        %1943 = vmatmul.f32.gmra.mxu0 %v816
        %v1944 = vpop.f32.mrf.mxu0
        %v1945 = vadd.f32 0.0, %v1944
        %1946 = vmatmul.f32.gmra.mxu0 %v819
        %v1947 = vpop.f32.mrf.mxu0
        %v1948 = vadd.f32 0.0, %v1947
        %1949 = vdwg.mxu0
        %1950 = vmatpush.msra.mxu0 0.0
        %1951 = vmatpush.msra.mxu0 0.0
        %1952 = vmatpush.msra.mxu0 0.0
        %1953 = vmatpush.msra.mxu0 0.0
        %1954 = vmatpush.msra.mxu0 0.0
        %1955 = vmatpush.msra.mxu0 0.0
        %1956 = vmatpush.msra.mxu0 0.0
        %1957 = vmatpush.msra.mxu0 0.0
        %1958 = vmatpush.msra.mxu0 0.0
        %1959 = vmatpush.msra.mxu0 0.0
        %1960 = vmatpush.msra.mxu0 0.0
        %1961 = vmatpush.msra.mxu0 0.0
        %1962 = vmatpush.msra.mxu0 0.0
        %1963 = vmatpush.msra.mxu0 0.0
        %1964 = vmatpush.msra.mxu0 %v1688
        %1965 = vmatpush.msra.mxu0 %v1687
        %1966 = vmatmul.f32.gmra.mxu0 %v851
        %v1967 = vpop.f32.mrf.mxu0
        %v1968 = vadd.f32 %v1939, %v1967
        %1969 = vmatmul.f32.gmra.mxu0 %v854
        %v1970 = vpop.f32.mrf.mxu0
        %v1971 = vadd.f32 %v1942, %v1970
        %1972 = vmatmul.f32.gmra.mxu0 %v857
        %v1973 = vpop.f32.mrf.mxu0
        %v1974 = vadd.f32 %v1945, %v1973
        %1975 = vmatmul.f32.gmra.mxu0 %v860
        %v1976 = vpop.f32.mrf.mxu0
        %v1977 = vadd.f32 %v1948, %v1976
        %1978 = vdwg.mxu0
        %s1979 = sadd.s32 %s245, 129
        %s1980 = sld [smem:[#allocation2 + %s1979]]
        %v1981 = vstv %s1980
        %v1982 = vmul.f32 %v1981, %v246
        %v1983 = vmul.f32 %v1981, %v247
        %v1984 = vadd.f32 %v1982, 0.0
        %v1985 = vadd.f32 %v1983, 0.0
        %s1986 = sadd.s32 %s245, 133
        %s1987 = sld [smem:[#allocation2 + %s1986]]
        %v1988 = vstv %s1987
        %v1989 = vmul.f32 %v1988, %v248
        %v1990 = vmul.f32 %v1988, %v249
        %v1991 = vadd.f32 %v1984, %v1989
        %v1992 = vadd.f32 %v1985, %v1990
        %s1993 = sadd.s32 %s245, 137
        %s1994 = sld [smem:[#allocation2 + %s1993]]
        %v1995 = vstv %s1994
        %v1996 = vmul.f32 %v1995, %v250
        %v1997 = vmul.f32 %v1995, %v251
        %v1998 = vadd.f32 %v1991, %v1996
        %v1999 = vadd.f32 %v1992, %v1997
        %s2000 = sadd.s32 %s245, 141
        %s2001 = sld [smem:[#allocation2 + %s2000]]
        %v2002 = vstv %s2001
        %v2003 = vmul.f32 %v2002, %v252
        %v2004 = vmul.f32 %v2002, %v253
        %v2005 = vadd.f32 %v1998, %v2003
        %v2006 = vadd.f32 %v1999, %v2004
        %s2007 = sadd.s32 %s245, 145
        %s2008 = sld [smem:[#allocation2 + %s2007]]
        %v2009 = vstv %s2008
        %v2010 = vmul.f32 %v2009, %v246
        %v2011 = vmul.f32 %v2009, %v247
        %v2012 = vadd.f32 %v2010, 0.0
        %v2013 = vadd.f32 %v2011, 0.0
        %s2014 = sadd.s32 %s245, 149
        %s2015 = sld [smem:[#allocation2 + %s2014]]
        %v2016 = vstv %s2015
        %v2017 = vmul.f32 %v2016, %v248
        %v2018 = vmul.f32 %v2016, %v249
        %v2019 = vadd.f32 %v2012, %v2017
        %v2020 = vadd.f32 %v2013, %v2018
        %s2021 = sadd.s32 %s245, 153
        %s2022 = sld [smem:[#allocation2 + %s2021]]
        %v2023 = vstv %s2022
        %v2024 = vmul.f32 %v2023, %v250
        %v2025 = vmul.f32 %v2023, %v251
        %v2026 = vadd.f32 %v2019, %v2024
        %v2027 = vadd.f32 %v2020, %v2025
        %s2028 = sadd.s32 %s245, 157
        %s2029 = sld [smem:[#allocation2 + %s2028]]
        %v2030 = vstv %s2029
        %v2031 = vmul.f32 %v2030, %v252
        %v2032 = vmul.f32 %v2030, %v253
        %v2033 = vadd.f32 %v2026, %v2031
        %v2034 = vadd.f32 %v2027, %v2032
        %v2036 = vsel %vm400, %v2033, 0
        %v2039 = vsel %vm400, %v2034, 0
        %2041 = vmatpush.msra.mxu0 0.0
        %2042 = vmatpush.msra.mxu0 0.0
        %2043 = vmatpush.msra.mxu0 0.0
        %2044 = vmatpush.msra.mxu0 0.0
        %2045 = vmatpush.msra.mxu0 0.0
        %2046 = vmatpush.msra.mxu0 0.0
        %2047 = vmatpush.msra.mxu0 0.0
        %2048 = vmatpush.msra.mxu0 0.0
        %2049 = vmatpush.msra.mxu0 0.0
        %2050 = vmatpush.msra.mxu0 0.0
        %2051 = vmatpush.msra.mxu0 0.0
        %2052 = vmatpush.msra.mxu0 0.0
        %2053 = vmatpush.msra.mxu0 0.0
        %2054 = vmatpush.msra.mxu0 0.0
        %2055 = vmatpush.msra.mxu0 %v274
        %2056 = vmatpush.msra.mxu0 %v273
        %2057 = vmatmul.f32.gmra.mxu0 %v2036
        %v2058 = vpop.f32.mrf.mxu0
        %v2059 = vadd.f32 0.0, %v2058
        %2060 = vmatmul.f32.gmra.mxu0 %v2039
        %v2061 = vpop.f32.mrf.mxu0
        %v2062 = vadd.f32 0.0, %v2061
        %2063 = vdwg.mxu0
        %v2065 = vsel %vm400, %v2005, 0
        %v2068 = vsel %vm400, %v2006, 0
        %2070 = vmatpush.msra.mxu0 0.0
        %2071 = vmatpush.msra.mxu0 0.0
        %2072 = vmatpush.msra.mxu0 0.0
        %2073 = vmatpush.msra.mxu0 0.0
        %2074 = vmatpush.msra.mxu0 0.0
        %2075 = vmatpush.msra.mxu0 0.0
        %2076 = vmatpush.msra.mxu0 0.0
        %2077 = vmatpush.msra.mxu0 0.0
        %2078 = vmatpush.msra.mxu0 0.0
        %2079 = vmatpush.msra.mxu0 0.0
        %2080 = vmatpush.msra.mxu0 0.0
        %2081 = vmatpush.msra.mxu0 0.0
        %2082 = vmatpush.msra.mxu0 0.0
        %2083 = vmatpush.msra.mxu0 0.0
        %2084 = vmatpush.msra.mxu0 %v266
        %2085 = vmatpush.msra.mxu0 %v265
        %2086 = vmatmul.f32.gmra.mxu0 %v2065
        %v2087 = vpop.f32.mrf.mxu0
        %v2088 = vadd.f32 %v2059, %v2087
        %2089 = vmatmul.f32.gmra.mxu0 %v2068
        %v2090 = vpop.f32.mrf.mxu0
        %v2091 = vadd.f32 %v2062, %v2090
        %2092 = vdwg.mxu0
        %s2093 = sadd.s32 %s245, 193
        %s2094 = sld [smem:[#allocation2 + %s2093]]
        %v2095 = vstv %s2094
        %v2096 = vmul.f32 %v2095, %v246
        %v2097 = vmul.f32 %v2095, %v247
        %v2098 = vadd.f32 %v2096, 0.0
        %v2099 = vadd.f32 %v2097, 0.0
        %s2100 = sadd.s32 %s245, 197
        %s2101 = sld [smem:[#allocation2 + %s2100]]
        %v2102 = vstv %s2101
        %v2103 = vmul.f32 %v2102, %v248
        %v2104 = vmul.f32 %v2102, %v249
        %v2105 = vadd.f32 %v2098, %v2103
        %v2106 = vadd.f32 %v2099, %v2104
        %s2107 = sadd.s32 %s245, 201
        %s2108 = sld [smem:[#allocation2 + %s2107]]
        %v2109 = vstv %s2108
        %v2110 = vmul.f32 %v2109, %v250
        %v2111 = vmul.f32 %v2109, %v251
        %v2112 = vadd.f32 %v2105, %v2110
        %v2113 = vadd.f32 %v2106, %v2111
        %s2114 = sadd.s32 %s245, 205
        %s2115 = sld [smem:[#allocation2 + %s2114]]
        %v2116 = vstv %s2115
        %v2117 = vmul.f32 %v2116, %v252
        %v2118 = vmul.f32 %v2116, %v253
        %v2119 = vadd.f32 %v2112, %v2117
        %v2120 = vadd.f32 %v2113, %v2118
        %v2122 = vsel %vm400, %v2119, 0
        %v2125 = vsel %vm400, %v2120, 0
        %2127 = vmatpush.msra.mxu0 0.0
        %2128 = vmatpush.msra.mxu0 0.0
        %2129 = vmatpush.msra.mxu0 0.0
        %2130 = vmatpush.msra.mxu0 0.0
        %2131 = vmatpush.msra.mxu0 0.0
        %2132 = vmatpush.msra.mxu0 0.0
        %2133 = vmatpush.msra.mxu0 0.0
        %2134 = vmatpush.msra.mxu0 0.0
        %2135 = vmatpush.msra.mxu0 0.0
        %2136 = vmatpush.msra.mxu0 0.0
        %2137 = vmatpush.msra.mxu0 0.0
        %2138 = vmatpush.msra.mxu0 0.0
        %2139 = vmatpush.msra.mxu0 0.0
        %2140 = vmatpush.msra.mxu0 0.0
        %2141 = vmatpush.msra.mxu0 %v282
        %2142 = vmatpush.msra.mxu0 %v281
        %2143 = vmatmul.f32.gmra.mxu0 %v2122
        %v2144 = vpop.f32.mrf.mxu0
        %v2145 = vadd.f32 0.0, %v2144
        %2146 = vmatmul.f32.gmra.mxu0 %v2125
        %v2147 = vpop.f32.mrf.mxu0
        %v2148 = vadd.f32 0.0, %v2147
        %2149 = vdwg.mxu0
        %v2150 = vadd.f32 %v2088, %v2145
        %v2151 = vadd.f32 %v2091, %v2148
        %s2152 = sadd.s32 %s245, 209
        %s2153 = sld [smem:[#allocation2 + %s2152]]
        %v2154 = vstv %s2153
        %v2155 = vmul.f32 %v2154, %v246
        %v2156 = vmul.f32 %v2154, %v247
        %v2157 = vadd.f32 %v2155, 0.0
        %v2158 = vadd.f32 %v2156, 0.0
        %s2159 = sadd.s32 %s245, 213
        %s2160 = sld [smem:[#allocation2 + %s2159]]
        %v2161 = vstv %s2160
        %v2162 = vmul.f32 %v2161, %v248
        %v2163 = vmul.f32 %v2161, %v249
        %v2164 = vadd.f32 %v2157, %v2162
        %v2165 = vadd.f32 %v2158, %v2163
        %s2166 = sadd.s32 %s245, 217
        %s2167 = sld [smem:[#allocation2 + %s2166]]
        %v2168 = vstv %s2167
        %v2169 = vmul.f32 %v2168, %v250
        %v2170 = vmul.f32 %v2168, %v251
        %v2171 = vadd.f32 %v2164, %v2169
        %v2172 = vadd.f32 %v2165, %v2170
        %s2173 = sadd.s32 %s245, 221
        %s2174 = sld [smem:[#allocation2 + %s2173]]
        %v2175 = vstv %s2174
        %v2176 = vmul.f32 %v2175, %v252
        %v2177 = vmul.f32 %v2175, %v253
        %v2178 = vadd.f32 %v2171, %v2176
        %v2179 = vadd.f32 %v2172, %v2177
        %v2181 = vsel %vm400, %v2178, 0
        %v2184 = vsel %vm400, %v2179, 0
        %2186 = vmatpush.msra.mxu0 0.0
        %2187 = vmatpush.msra.mxu0 0.0
        %2188 = vmatpush.msra.mxu0 0.0
        %2189 = vmatpush.msra.mxu0 0.0
        %2190 = vmatpush.msra.mxu0 0.0
        %2191 = vmatpush.msra.mxu0 0.0
        %2192 = vmatpush.msra.mxu0 0.0
        %2193 = vmatpush.msra.mxu0 0.0
        %2194 = vmatpush.msra.mxu0 0.0
        %2195 = vmatpush.msra.mxu0 0.0
        %2196 = vmatpush.msra.mxu0 0.0
        %2197 = vmatpush.msra.mxu0 0.0
        %2198 = vmatpush.msra.mxu0 0.0
        %2199 = vmatpush.msra.mxu0 0.0
        %2200 = vmatpush.msra.mxu0 %v290
        %2201 = vmatpush.msra.mxu0 %v289
        %2202 = vmatmul.f32.gmra.mxu0 %v2181
        %v2203 = vpop.f32.mrf.mxu0
        %v2204 = vadd.f32 0.0, %v2203
        %2205 = vmatmul.f32.gmra.mxu0 %v2184
        %v2206 = vpop.f32.mrf.mxu0
        %v2207 = vadd.f32 0.0, %v2206
        %2208 = vdwg.mxu0
        %v2209 = vadd.f32 %v2150, %v2204
        %v2210 = vadd.f32 %v2151, %v2207
        %2211 = vmatpush.msra.mxu0 0.0
        %2212 = vmatpush.msra.mxu0 0.0
        %2213 = vmatpush.msra.mxu0 0.0
        %2214 = vmatpush.msra.mxu0 0.0
        %2215 = vmatpush.msra.mxu0 0.0
        %2216 = vmatpush.msra.mxu0 0.0
        %2217 = vmatpush.msra.mxu0 0.0
        %2218 = vmatpush.msra.mxu0 0.0
        %2219 = vmatpush.msra.mxu0 0.0
        %2220 = vmatpush.msra.mxu0 0.0
        %2221 = vmatpush.msra.mxu0 0.0
        %2222 = vmatpush.msra.mxu0 0.0
        %2223 = vmatpush.msra.mxu0 0.0
        %2224 = vmatpush.msra.mxu0 0.0
        %2225 = vmatpush.msra.mxu0 %v2210
        %2226 = vmatpush.msra.mxu0 %v2209
        %2227 = vmatmul.f32.gmra.mxu0 %v1124
        %v2228 = vpop.f32.mrf.mxu0
        %v2229 = vadd.f32 0.0, %v2228
        %2230 = vmatmul.f32.gmra.mxu0 %v1127
        %v2231 = vpop.f32.mrf.mxu0
        %v2232 = vadd.f32 0.0, %v2231
        %2233 = vmatmul.f32.gmra.mxu0 %v1130
        %v2234 = vpop.f32.mrf.mxu0
        %v2235 = vadd.f32 0.0, %v2234
        %2236 = vmatmul.f32.gmra.mxu0 %v1133
        %v2237 = vpop.f32.mrf.mxu0
        %v2238 = vadd.f32 0.0, %v2237
        %2239 = vdwg.mxu0
        %v2240 = vadd.f32 %v1968, %v2229
        %v2241 = vadd.f32 %v1971, %v2232
        %v2242 = vadd.f32 %v1974, %v2235
        %v2243 = vadd.f32 %v1977, %v2238
        %s2244 = sadd.s32 %s245, 161
        %s2245 = sld [smem:[#allocation2 + %s2244]]
        %v2246 = vstv %s2245
        %v2247 = vmul.f32 %v2246, %v246
        %v2248 = vmul.f32 %v2246, %v247
        %v2249 = vadd.f32 %v2247, 0.0
        %v2250 = vadd.f32 %v2248, 0.0
        %s2251 = sadd.s32 %s245, 165
        %s2252 = sld [smem:[#allocation2 + %s2251]]
        %v2253 = vstv %s2252
        %v2254 = vmul.f32 %v2253, %v248
        %v2255 = vmul.f32 %v2253, %v249
        %v2256 = vadd.f32 %v2249, %v2254
        %v2257 = vadd.f32 %v2250, %v2255
        %s2258 = sadd.s32 %s245, 169
        %s2259 = sld [smem:[#allocation2 + %s2258]]
        %v2260 = vstv %s2259
        %v2261 = vmul.f32 %v2260, %v250
        %v2262 = vmul.f32 %v2260, %v251
        %v2263 = vadd.f32 %v2256, %v2261
        %v2264 = vadd.f32 %v2257, %v2262
        %s2265 = sadd.s32 %s245, 173
        %s2266 = sld [smem:[#allocation2 + %s2265]]
        %v2267 = vstv %s2266
        %v2268 = vmul.f32 %v2267, %v252
        %v2269 = vmul.f32 %v2267, %v253
        %v2270 = vadd.f32 %v2263, %v2268
        %v2271 = vadd.f32 %v2264, %v2269
        %s2272 = sadd.s32 %s245, 177
        %s2273 = sld [smem:[#allocation2 + %s2272]]
        %v2274 = vstv %s2273
        %v2275 = vmul.f32 %v2274, %v246
        %v2276 = vmul.f32 %v2274, %v247
        %v2277 = vadd.f32 %v2275, 0.0
        %v2278 = vadd.f32 %v2276, 0.0
        %s2279 = sadd.s32 %s245, 181
        %s2280 = sld [smem:[#allocation2 + %s2279]]
        %v2281 = vstv %s2280
        %v2282 = vmul.f32 %v2281, %v248
        %v2283 = vmul.f32 %v2281, %v249
        %v2284 = vadd.f32 %v2277, %v2282
        %v2285 = vadd.f32 %v2278, %v2283
        %s2286 = sadd.s32 %s245, 185
        %s2287 = sld [smem:[#allocation2 + %s2286]]
        %v2288 = vstv %s2287
        %v2289 = vmul.f32 %v2288, %v250
        %v2290 = vmul.f32 %v2288, %v251
        %v2291 = vadd.f32 %v2284, %v2289
        %v2292 = vadd.f32 %v2285, %v2290
        %s2293 = sadd.s32 %s245, 189
        %s2294 = sld [smem:[#allocation2 + %s2293]]
        %v2295 = vstv %s2294
        %v2296 = vmul.f32 %v2295, %v252
        %v2297 = vmul.f32 %v2295, %v253
        %v2298 = vadd.f32 %v2291, %v2296
        %v2299 = vadd.f32 %v2292, %v2297
        %v2301 = vsel %vm400, %v2298, 0
        %v2304 = vsel %vm400, %v2299, 0
        %2306 = vmatpush.msra.mxu0 0.0
        %2307 = vmatpush.msra.mxu0 0.0
        %2308 = vmatpush.msra.mxu0 0.0
        %2309 = vmatpush.msra.mxu0 0.0
        %2310 = vmatpush.msra.mxu0 0.0
        %2311 = vmatpush.msra.mxu0 0.0
        %2312 = vmatpush.msra.mxu0 0.0
        %2313 = vmatpush.msra.mxu0 0.0
        %2314 = vmatpush.msra.mxu0 0.0
        %2315 = vmatpush.msra.mxu0 0.0
        %2316 = vmatpush.msra.mxu0 0.0
        %2317 = vmatpush.msra.mxu0 0.0
        %2318 = vmatpush.msra.mxu0 0.0
        %2319 = vmatpush.msra.mxu0 0.0
        %2320 = vmatpush.msra.mxu0 %v274
        %2321 = vmatpush.msra.mxu0 %v273
        %2322 = vmatmul.f32.gmra.mxu0 %v2301
        %v2323 = vpop.f32.mrf.mxu0
        %v2324 = vadd.f32 0.0, %v2323
        %2325 = vmatmul.f32.gmra.mxu0 %v2304
        %v2326 = vpop.f32.mrf.mxu0
        %v2327 = vadd.f32 0.0, %v2326
        %2328 = vdwg.mxu0
        %v2330 = vsel %vm400, %v2270, 0
        %v2333 = vsel %vm400, %v2271, 0
        %2335 = vmatpush.msra.mxu0 0.0
        %2336 = vmatpush.msra.mxu0 0.0
        %2337 = vmatpush.msra.mxu0 0.0
        %2338 = vmatpush.msra.mxu0 0.0
        %2339 = vmatpush.msra.mxu0 0.0
        %2340 = vmatpush.msra.mxu0 0.0
        %2341 = vmatpush.msra.mxu0 0.0
        %2342 = vmatpush.msra.mxu0 0.0
        %2343 = vmatpush.msra.mxu0 0.0
        %2344 = vmatpush.msra.mxu0 0.0
        %2345 = vmatpush.msra.mxu0 0.0
        %2346 = vmatpush.msra.mxu0 0.0
        %2347 = vmatpush.msra.mxu0 0.0
        %2348 = vmatpush.msra.mxu0 0.0
        %2349 = vmatpush.msra.mxu0 %v266
        %2350 = vmatpush.msra.mxu0 %v265
        %2351 = vmatmul.f32.gmra.mxu0 %v2330
        %v2352 = vpop.f32.mrf.mxu0
        %v2353 = vadd.f32 %v2324, %v2352
        %2354 = vmatmul.f32.gmra.mxu0 %v2333
        %v2355 = vpop.f32.mrf.mxu0
        %v2356 = vadd.f32 %v2327, %v2355
        %2357 = vdwg.mxu0
        %s2358 = sadd.s32 %s245, 225
        %s2359 = sld [smem:[#allocation2 + %s2358]]
        %v2360 = vstv %s2359
        %v2361 = vmul.f32 %v2360, %v246
        %v2362 = vmul.f32 %v2360, %v247
        %v2363 = vadd.f32 %v2361, 0.0
        %v2364 = vadd.f32 %v2362, 0.0
        %s2365 = sadd.s32 %s245, 229
        %s2366 = sld [smem:[#allocation2 + %s2365]]
        %v2367 = vstv %s2366
        %v2368 = vmul.f32 %v2367, %v248
        %v2369 = vmul.f32 %v2367, %v249
        %v2370 = vadd.f32 %v2363, %v2368
        %v2371 = vadd.f32 %v2364, %v2369
        %s2372 = sadd.s32 %s245, 233
        %s2373 = sld [smem:[#allocation2 + %s2372]]
        %v2374 = vstv %s2373
        %v2375 = vmul.f32 %v2374, %v250
        %v2376 = vmul.f32 %v2374, %v251
        %v2377 = vadd.f32 %v2370, %v2375
        %v2378 = vadd.f32 %v2371, %v2376
        %s2379 = sadd.s32 %s245, 237
        %s2380 = sld [smem:[#allocation2 + %s2379]]
        %v2381 = vstv %s2380
        %v2382 = vmul.f32 %v2381, %v252
        %v2383 = vmul.f32 %v2381, %v253
        %v2384 = vadd.f32 %v2377, %v2382
        %v2385 = vadd.f32 %v2378, %v2383
        %v2387 = vsel %vm400, %v2384, 0
        %v2390 = vsel %vm400, %v2385, 0
        %2392 = vmatpush.msra.mxu0 0.0
        %2393 = vmatpush.msra.mxu0 0.0
        %2394 = vmatpush.msra.mxu0 0.0
        %2395 = vmatpush.msra.mxu0 0.0
        %2396 = vmatpush.msra.mxu0 0.0
        %2397 = vmatpush.msra.mxu0 0.0
        %2398 = vmatpush.msra.mxu0 0.0
        %2399 = vmatpush.msra.mxu0 0.0
        %2400 = vmatpush.msra.mxu0 0.0
        %2401 = vmatpush.msra.mxu0 0.0
        %2402 = vmatpush.msra.mxu0 0.0
        %2403 = vmatpush.msra.mxu0 0.0
        %2404 = vmatpush.msra.mxu0 0.0
        %2405 = vmatpush.msra.mxu0 0.0
        %2406 = vmatpush.msra.mxu0 %v282
        %2407 = vmatpush.msra.mxu0 %v281
        %2408 = vmatmul.f32.gmra.mxu0 %v2387
        %v2409 = vpop.f32.mrf.mxu0
        %v2410 = vadd.f32 0.0, %v2409
        %2411 = vmatmul.f32.gmra.mxu0 %v2390
        %v2412 = vpop.f32.mrf.mxu0
        %v2413 = vadd.f32 0.0, %v2412
        %2414 = vdwg.mxu0
        %v2415 = vadd.f32 %v2353, %v2410
        %v2416 = vadd.f32 %v2356, %v2413
        %s2417 = sadd.s32 %s245, 241
        %s2418 = sld [smem:[#allocation2 + %s2417]]
        %v2419 = vstv %s2418
        %v2420 = vmul.f32 %v2419, %v246
        %v2421 = vmul.f32 %v2419, %v247
        %v2422 = vadd.f32 %v2420, 0.0
        %v2423 = vadd.f32 %v2421, 0.0
        %s2424 = sadd.s32 %s245, 245
        %s2425 = sld [smem:[#allocation2 + %s2424]]
        %v2426 = vstv %s2425
        %v2427 = vmul.f32 %v2426, %v248
        %v2428 = vmul.f32 %v2426, %v249
        %v2429 = vadd.f32 %v2422, %v2427
        %v2430 = vadd.f32 %v2423, %v2428
        %s2431 = sadd.s32 %s245, 249
        %s2432 = sld [smem:[#allocation2 + %s2431]]
        %v2433 = vstv %s2432
        %v2434 = vmul.f32 %v2433, %v250
        %v2435 = vmul.f32 %v2433, %v251
        %v2436 = vadd.f32 %v2429, %v2434
        %v2437 = vadd.f32 %v2430, %v2435
        %s2438 = sadd.s32 %s245, 253
        %s2439 = sld [smem:[#allocation2 + %s2438]]
        %v2440 = vstv %s2439
        %v2441 = vmul.f32 %v2440, %v252
        %v2442 = vmul.f32 %v2440, %v253
        %v2443 = vadd.f32 %v2436, %v2441
        %v2444 = vadd.f32 %v2437, %v2442
        %v2446 = vsel %vm400, %v2443, 0
        %v2449 = vsel %vm400, %v2444, 0
        %2451 = vmatpush.msra.mxu0 0.0
        %2452 = vmatpush.msra.mxu0 0.0
        %2453 = vmatpush.msra.mxu0 0.0
        %2454 = vmatpush.msra.mxu0 0.0
        %2455 = vmatpush.msra.mxu0 0.0
        %2456 = vmatpush.msra.mxu0 0.0
        %2457 = vmatpush.msra.mxu0 0.0
        %2458 = vmatpush.msra.mxu0 0.0
        %2459 = vmatpush.msra.mxu0 0.0
        %2460 = vmatpush.msra.mxu0 0.0
        %2461 = vmatpush.msra.mxu0 0.0
        %2462 = vmatpush.msra.mxu0 0.0
        %2463 = vmatpush.msra.mxu0 0.0
        %2464 = vmatpush.msra.mxu0 0.0
        %2465 = vmatpush.msra.mxu0 %v290
        %2466 = vmatpush.msra.mxu0 %v289
        %2467 = vmatmul.f32.gmra.mxu0 %v2446
        %v2468 = vpop.f32.mrf.mxu0
        %v2469 = vadd.f32 0.0, %v2468
        %2470 = vmatmul.f32.gmra.mxu0 %v2449
        %v2471 = vpop.f32.mrf.mxu0
        %v2472 = vadd.f32 0.0, %v2471
        %2473 = vdwg.mxu0
        %v2474 = vadd.f32 %v2415, %v2469
        %v2475 = vadd.f32 %v2416, %v2472
        %2476 = vmatpush.msra.mxu0 0.0
        %2477 = vmatpush.msra.mxu0 0.0
        %2478 = vmatpush.msra.mxu0 0.0
        %2479 = vmatpush.msra.mxu0 0.0
        %2480 = vmatpush.msra.mxu0 0.0
        %2481 = vmatpush.msra.mxu0 0.0
        %2482 = vmatpush.msra.mxu0 0.0
        %2483 = vmatpush.msra.mxu0 0.0
        %2484 = vmatpush.msra.mxu0 0.0
        %2485 = vmatpush.msra.mxu0 0.0
        %2486 = vmatpush.msra.mxu0 0.0
        %2487 = vmatpush.msra.mxu0 0.0
        %2488 = vmatpush.msra.mxu0 0.0
        %2489 = vmatpush.msra.mxu0 0.0
        %2490 = vmatpush.msra.mxu0 %v2475
        %2491 = vmatpush.msra.mxu0 %v2474
        %2492 = vmatmul.f32.gmra.mxu0 %v1401
        %v2493 = vpop.f32.mrf.mxu0
        %v2494 = vadd.f32 0.0, %v2493
        %2495 = vmatmul.f32.gmra.mxu0 %v1404
        %v2496 = vpop.f32.mrf.mxu0
        %v2497 = vadd.f32 0.0, %v2496
        %2498 = vmatmul.f32.gmra.mxu0 %v1407
        %v2499 = vpop.f32.mrf.mxu0
        %v2500 = vadd.f32 0.0, %v2499
        %2501 = vmatmul.f32.gmra.mxu0 %v1410
        %v2502 = vpop.f32.mrf.mxu0
        %v2503 = vadd.f32 0.0, %v2502
        %2504 = vdwg.mxu0
        %v2505 = vadd.f32 %v2240, %v2494
        %v2506 = vadd.f32 %v2241, %v2497
        %v2507 = vadd.f32 %v2242, %v2500
        %v2508 = vadd.f32 %v2243, %v2503
        %s2509 = sld [smem:[#allocation5 + %s1457]]
        %v2510 = vstv %s2509
        %v2511 = vadd.f32 %v2505, %v2510
        %v2512 = vadd.f32 %v2506, %v2510
        %v2513 = vadd.f32 %v2507, %v2510
        %v2514 = vadd.f32 %v2508, %v2510
        %s2515 = scalar_lea.vmem %s243, 32
        %2516 = vst.msk [vmem:[%s2515] sm:$0xff] %vm1451, %v2511
        %2517 = vst.msk [vmem:[%s2515 + $0x8] sm:$0xff] %vm1451, %v2512
        %2518 = vst.msk [vmem:[%s2515 + $0x10] sm:$0xff] %vm1451, %v2513
        %2519 = vst.msk [vmem:[%s2515 + $0x18] sm:$0x3f] %vm1455, %v2514
        %s2520 = smul.u32 2, %s24
        %p2521 = scmp.lt.s32.totalorder %s23, 1
        %s2522 = scalar_select %p2521, %s23, 1
        %p2523 = scmp.lt.s32.totalorder %s2520, 3
        %s2524 = scalar_select %p2523, %s2520, 3
        %s2525 = smul.addr %s2524, 4
        %s2526 = smul.addr %s2522, 16
        %s2527 = sadd.s32 %s2525, %s2526
        %s2528 = smul.addr %s2527, 8
        %s2529 = scalar_lea.vmem %s3, %s2528
        // Predicated region
        $region45: #{tpu_custom_call.1} parent=31 // pred_check
          %p2530 = pneg %p119
        $region46: #{tpu_custom_call.1} parent=31 // pred_check_branch
          %2532 = sbr.rel (%p2530) target = $region48
        $region47: #{tpu_custom_call.1} parent=31 // pred_region
          %s2533 = smul.u32 2, %s24
        $region48: #{tpu_custom_call.1} parent=31 // pred_fallthru
          _
      $region32: #{tpu_custom_call.1} parent=5 // pred_fallthru
        _
      %p2534 = scmp.le.s32.totalorder 2, %s14
      // Predicated region
      $region49: #{tpu_custom_call.1} parent=5 // pred_check
        %p2535 = pneg %p2534
      $region50: #{tpu_custom_call.1} parent=5 // pred_check_branch
        %2537 = sbr.rel (%p2535) target = $region52
      $region51: #{tpu_custom_call.1} parent=5 // pred_region
        %s2538 = ssub.s32 %s14, 2
        // Predicated region
        $region53: #{tpu_custom_call.1} parent=51 // pred_check
          %p2539 = pneg %p125
        $region54: #{tpu_custom_call.1} parent=51 // pred_check_branch
          %2541 = sbr.rel (%p2539) target = $region56
        $region55: #{tpu_custom_call.1} parent=51 // pred_region
          %s2542 = smul.u32 2, %s26
          %p2543 = scmp.lt.s32.totalorder %s25, 1
          %s2544 = scalar_select %p2543, %s25, 1
          %p2545 = scmp.lt.s32.totalorder %s2542, 3
          %s2546 = scalar_select %p2545, %s2542, 3
          %s2547 = smul.addr %s2546, 4
          %s2548 = smul.addr %s2544, 16
          %s2549 = sadd.s32 %s2547, %s2548
          %s2550 = smul.addr %s2549, 8
          %s2551 = scalar_lea.vmem %s3, %s2550
        $region56: #{tpu_custom_call.1} parent=51 // pred_fallthru
          _
      $region52: #{tpu_custom_call.1} parent=5 // pred_fallthru
        _
    $region6: #{tpu_custom_call.1} parent=1 // loop_footer
      %s18 = sadd.s32 1, %s14
    $region7: #{tpu_custom_call.1} parent=1 // loop_footer_branch
      %13 = sbr.rel target = $region3
    $region8: #{tpu_custom_call.1} parent=1 // loop_exit
      _
    %2552 = vsyncpa [#allocation3], 1
    %s2553 = scalar_lea.sflag [#allocation3], 1
    %2554 = vsyncpa %s2553, 1
    %2555 = vsyncpa [#allocation4], 1
    %s2556 = scalar_lea.sflag [#allocation4], 1
    %2557 = vsyncpa %s2556, 1
    %2558 = vsyncpa [#allocation6], 1

</llo_original>
